<compile_context>
chip_gen: v6e
topology: v6e:2x2x1
jax: 0.10.0
libtpu: 0.0.40
codegen_flags: <defaults>
</compile_context>

<pallas_src>
import functools

import jax
import jax.numpy as jnp
from jax.experimental import pallas as pl
from jax.experimental.pallas import tpu as pltpu

BN_EPS = 0.001
SELU_ALPHA = 1.6732632423543772
SELU_SCALE = 1.0507009873554805

H4, H5, HH = 128, 256, 512  # fc4 out, fc5 out, per-head hidden width


def _selu(x):
    return SELU_SCALE * jnp.where(x > 0, x, SELU_ALPHA * (jnp.exp(x) - 1.0))


def _softplus(x):
    # numerically stable softplus: max(x,0) + log(1 + exp(-|x|))
    return jnp.maximum(x, 0.0) + jnp.log(1.0 + jnp.exp(-jnp.abs(x)))


def _round_up(x, m):
    return (x + m - 1) // m * m


# ----------------------------------------------------------------------------
# Kernels
# ----------------------------------------------------------------------------
def trunk_kernel(z_ref, bat_ref,
                 wb_ref, bb_ref,
                 w4z_ref, w4b_ref, b4_ref,
                 w5_ref, b5_ref,
                 w5h_ref, b5h_ref,
                 muh_ref, thh_ref):
    """Small trunk: everything up to the 512-wide per-head hidden activations."""
    f32 = jnp.float32
    bf16 = jnp.bfloat16

    # batch branch: fcb (+ folded bnb) + SELU
    b = jnp.dot(bat_ref[...].astype(bf16), wb_ref[...],
                preferred_element_type=f32) + bb_ref[...]
    b = _selu(b)
    # fc4 (+ folded bn4) on concat([z, b]) expressed as two partial matmuls
    dec = jnp.dot(z_ref[...].astype(bf16), w4z_ref[...],
                  preferred_element_type=f32)
    dec = dec + jnp.dot(b.astype(bf16), w4b_ref[...],
                        preferred_element_type=f32)
    dec = _selu(dec + b4_ref[...])
    # fc5 (+ folded bn5) + SELU
    dec = _selu(jnp.dot(dec.astype(bf16), w5_ref[...],
                        preferred_element_type=f32) + b5_ref[...])
    # fused heads fc5_mu | fc5_theta (+ folded BN) + SELU -> (tb, 2*HH)
    h = _selu(jnp.dot(dec.astype(bf16), w5h_ref[...],
                      preferred_element_type=f32) + b5h_ref[...])
    muh_ref[...] = h[:, :HH].astype(muh_ref.dtype)
    thh_ref[...] = h[:, HH:].astype(thh_ref.dtype)


def heads_kernel(muh_ref, thh_ref,
                 wom_ref, woa_ref, bom_ref, boa_ref,
                 mu_ref, theta_ref):
    """Output heads: softplus(h @ W + b) on one (batch tile, gene tile) block."""
    f32 = jnp.float32
    mu = jnp.dot(muh_ref[...], wom_ref[...],
                 preferred_element_type=f32) + bom_ref[...]
    th = jnp.dot(thh_ref[...], woa_ref[...],
                 preferred_element_type=f32) + boa_ref[...]
    mu_ref[...] = _softplus(mu).astype(mu_ref.dtype)
    theta_ref[...] = _softplus(th).astype(theta_ref.dtype)


# ----------------------------------------------------------------------------
# One-time parameter preparation (fold eval-mode BN, cast to bf16, pad genes)
# ----------------------------------------------------------------------------
def _fold_params(params):
    """Fold eval-mode BatchNorm into the preceding Linear; cast weights to bf16."""
    bf16 = jnp.bfloat16

    def fold(w, b, g, be, rm, rv):
        scale = g / jnp.sqrt(rv + BN_EPS)                # (out,)
        wf = (w * scale[None, :]).astype(bf16)           # (in, out) bf16
        bf = ((b - rm) * scale + be)[None, :].astype(jnp.float32)
        return wf, bf

    wb, bb = fold(params["wb"], params["bb"], params["gb"], params["beb"],
                  params["rmb"], params["rvb"])
    w4, b4 = fold(params["w4"], params["b4"], params["g4"], params["be4"],
                  params["rm4"], params["rv4"])
    w5, b5 = fold(params["w5"], params["b5"], params["g5"], params["be5"],
                  params["rm5"], params["rv5"])
    w5m, b5m = fold(params["w5m"], params["b5m"], params["g5m"], params["be5m"],
                    params["rm5m"], params["rv5m"])
    w5t, b5t = fold(params["w5t"], params["b5t"], params["g5t"], params["be5t"],
                    params["rm5t"], params["rv5t"])

    n_batch = params["wb"].shape[0]
    enc_dim = params["w4"].shape[0] - n_batch

    return dict(
        wb=wb, bb=bb,
        w4z=w4[:enc_dim], w4b=w4[enc_dim:], b4=b4,
        w5=w5, b5=b5,
        w5h=jnp.concatenate([w5m, w5t], axis=1),          # (H5, 2*HH) bf16
        b5h=jnp.concatenate([b5m, b5t], axis=1),          # (1, 2*HH) f32
        wom=params["wom"].astype(bf16),
        bom=params["bom"][None, :].astype(jnp.float32),
        woa=params["woa"].astype(bf16),
        boa=params["boa"][None, :].astype(jnp.float32),
    )


def prepare_decoder_params(params, *, tn=1024):
    """One-time prep: BN fold, bf16 casts, gene-dim padding to a multiple of tn.

    Returns (prepared_arrays, static_cfg).  Call once and reuse across
    decoder_forward calls (this removes per-call re-folding / re-padding of the
    big 512 x n_genes head weights, which was the dominant extra HBM traffic).
    """
    n_genes = params["wom"].shape[1]
    tn_eff = min(tn, _round_up(n_genes, 128))   # lane-dense gene tile
    g_pad = _round_up(n_genes, tn_eff)

    fp = _fold_params(params)
    pg = g_pad - n_genes
    if pg:
        fp["wom"] = jnp.pad(fp["wom"], ((0, 0), (0, pg)))
        fp["woa"] = jnp.pad(fp["woa"], ((0, 0), (0, pg)))
        fp["bom"] = jnp.pad(fp["bom"], ((0, 0), (0, pg)))
        fp["boa"] = jnp.pad(fp["boa"], ((0, 0), (0, pg)))

    cfg = dict(n_genes=n_genes, tn=tn_eff)
    return fp, cfg


def _heads_vmem_limit(tb, tn, out_dtype):
    """Size the scoped VMEM limit to the real footprint (don't pin at the
    v7x 64 MiB physical ceiling)."""
    out_b = jnp.dtype(out_dtype).itemsize
    per_step = (2 * tb * HH * 2        # muh/thh tiles (bf16)
                + 2 * HH * tn * 2      # wom/woa tiles (bf16)
                + 2 * tn * 4           # bias tiles (f32)
                + 2 * tb * tn * out_b) # mu/theta output tiles
    # double-buffered pipeline + headroom for compiler-internal scratch
    return int(max(2 * per_step + (4 << 20), 32 << 20))


# ----------------------------------------------------------------------------
# Forward
# ----------------------------------------------------------------------------
@functools.partial(jax.jit, static_argnames=("n_genes", "tb", "tn", "out_dtype"))
def decoder_forward(z, batch, prepared, *, n_genes, tb=1024, tn=1024,
                    out_dtype=jnp.float32):
    """z: (B, enc_dim) f32; batch: (B, n_batch) f32; prepared from
    prepare_decoder_params.  Returns (mu, theta) of shape (B, n_genes)."""
    B, enc_dim = z.shape
    n_batch = batch.shape[1]
    g_pad = prepared["wom"].shape[1]
    assert g_pad % tn == 0, "tn must match prepare_decoder_params padding"

    # Batch tile: large (head weights streamed once) but never larger than the
    # padded batch.
    tb_eff = min(tb, _round_up(B, 8))
    b_pad = _round_up(B, tb_eff)
    if b_pad != B:
        z = jnp.pad(z, ((0, b_pad - B), (0, 0)))
        batch = jnp.pad(batch, ((0, b_pad - B), (0, 0)))

    full = lambda i: (0, 0)
    row = lambda i: (i, 0)

    # ---- trunk: per-head 512-wide hidden activations, computed once per
    #      batch tile and written to HBM in bf16 (tiny: 2 * B * 512 * 2 bytes).
    muh, thh = pl.pallas_call(
        trunk_kernel,
        out_shape=(jax.ShapeDtypeStruct((b_pad, HH), jnp.bfloat16),
                   jax.ShapeDtypeStruct((b_pad, HH), jnp.bfloat16)),
        grid_spec=pltpu.PrefetchScalarGridSpec(
            num_scalar_prefetch=0,
            grid=(b_pad // tb_eff,),
            in_specs=[
                pl.BlockSpec((tb_eff, enc_dim), row),    # z
                pl.BlockSpec((tb_eff, n_batch), row),    # batch matrix
                pl.BlockSpec((n_batch, n_batch), full),  # fcb (bnb folded)
                pl.BlockSpec((1, n_batch), full),
                pl.BlockSpec((enc_dim, H4), full),       # fc4 (z part)
                pl.BlockSpec((n_batch, H4), full),       # fc4 (b part)
                pl.BlockSpec((1, H4), full),
                pl.BlockSpec((H4, H5), full),            # fc5
                pl.BlockSpec((1, H5), full),
                pl.BlockSpec((H5, 2 * HH), full),        # fused fc5_mu|fc5_theta
                pl.BlockSpec((1, 2 * HH), full),
            ],
            out_specs=[
                pl.BlockSpec((tb_eff, HH), row),
                pl.BlockSpec((tb_eff, HH), row),
            ],
        ),
        compiler_params=pltpu.CompilerParams(
            dimension_semantics=("parallel",)),
    )(z, batch, prepared["wb"], prepared["bb"], prepared["w4z"],
      prepared["w4b"], prepared["b4"], prepared["w5"], prepared["b5"],
      prepared["w5h"], prepared["b5h"])

    # ---- output heads: gene axis OUTER (head weights streamed exactly once),
    #      batch axis inner; both axes parallel so gene tiles shard across
    #      TensorCores on v7x megacore.
    out_sds = jax.ShapeDtypeStruct((b_pad, g_pad), out_dtype)
    act_map = lambda g, i: (i, 0)     # muh / thh
    w_map = lambda g, i: (0, g)       # wom / woa / biases
    out_map = lambda g, i: (i, g)

    mu, theta = pl.pallas_call(
        heads_kernel,
        out_shape=(out_sds, out_sds),
        grid_spec=pltpu.PrefetchScalarGridSpec(
            num_scalar_prefetch=0,
            grid=(g_pad // tn, b_pad // tb_eff),
            in_specs=[
                pl.BlockSpec((tb_eff, HH), act_map),     # mu head input
                pl.BlockSpec((tb_eff, HH), act_map),     # theta head input
                pl.BlockSpec((HH, tn), w_map),           # out_mu weights
                pl.BlockSpec((HH, tn), w_map),           # out_alpha weights
                pl.BlockSpec((1, tn), w_map),            # out_mu bias
                pl.BlockSpec((1, tn), w_map),            # out_alpha bias
            ],
            out_specs=[
                pl.BlockSpec((tb_eff, tn), out_map),     # mu
                pl.BlockSpec((tb_eff, tn), out_map),     # theta
            ],
        ),
        compiler_params=pltpu.CompilerParams(
            dimension_semantics=("parallel", "parallel"),
            vmem_limit_bytes=_heads_vmem_limit(tb_eff, tn, out_dtype),
        ),
    )(muh, thh, prepared["wom"], prepared["woa"], prepared["bom"],
      prepared["boa"])

    return mu[:B, :n_genes], theta[:B, :n_genes]


# ----------------------------------------------------------------------------
# Synthetic params + pure-JAX references
# ----------------------------------------------------------------------------
def init_params(key, n_genes, enc_dim, n_batch):
    ks = iter(jax.random.split(key, 24))

    def linear(fan_in, fan_out):
        bound = fan_in ** -0.5
        w = jax.random.uniform(next(ks), (fan_in, fan_out), jnp.float32, -bound, bound)
        b = jax.random.uniform(next(ks), (fan_out,), jnp.float32, -bound, bound)
        return w, b

    def bn_stats(dim):
        g = jnp.ones((dim,), jnp.float32)
        be = jnp.zeros((dim,), jnp.float32)
        rm = 0.05 * jax.random.normal(next(ks), (dim,), jnp.float32)
        rv = 1.0 + 0.1 * jnp.abs(jax.random.normal(next(ks), (dim,), jnp.float32))
        return g, be, rm, rv

    wb, bb = linear(n_batch, n_batch)
    gb, beb, rmb, rvb = bn_stats(n_batch)
    w4, b4 = linear(enc_dim + n_batch, H4)
    g4, be4, rm4, rv4 = bn_stats(H4)
    w5, b5 = linear(H4, H5)
    g5, be5, rm5, rv5 = bn_stats(H5)
    w5m, b5m = linear(H5, HH)
    g5m, be5m, rm5m, rv5m = bn_stats(HH)
    w5t, b5t = linear(H5, HH)
    g5t, be5t, rm5t, rv5t = bn_stats(HH)
    wom, bom = linear(HH, n_genes)
    woa, boa = linear(HH, n_genes)

    return dict(wb=wb, bb=bb, gb=gb, beb=beb, rmb=rmb, rvb=rvb,
                w4=w4, b4=b4, g4=g4, be4=be4, rm4=rm4, rv4=rv4,
                w5=w5, b5=b5, g5=g5, be5=be5, rm5=rm5, rv5=rv5,
                w5m=w5m, b5m=b5m, g5m=g5m, be5m=be5m, rm5m=rm5m, rv5m=rv5m,
                w5t=w5t, b5t=b5t, g5t=g5t, be5t=be5t, rm5t=rm5t, rv5t=rv5t,
                wom=wom, bom=bom, woa=woa, boa=boa)


def reference_forward_f32(z, batch, p):
    """Pure f32 un-folded reference (mirrors the PyTorch module in eval mode)."""
    def bn(h, g, be, rm, rv):
        return (h - rm) / jnp.sqrt(rv + BN_EPS) * g + be

    b = _selu(bn(batch @ p["wb"] + p["bb"], p["gb"], p["beb"], p["rmb"], p["rvb"]))
    nz = jnp.concatenate([z, b], axis=1)
    dec = _selu(bn(nz @ p["w4"] + p["b4"], p["g4"], p["be4"], p["rm4"], p["rv4"]))
    dec = _selu(bn(dec @ p["w5"] + p["b5"], p["g5"], p["be5"], p["rm5"], p["rv5"]))
    mu = _selu(bn(dec @ p["w5m"] + p["b5m"], p["g5m"], p["be5m"], p["rm5m"], p["rv5m"]))
    th = _selu(bn(dec @ p["w5t"] + p["b5t"], p["g5t"], p["be5t"], p["rm5t"], p["rv5t"]))
    mu = _softplus(mu @ p["wom"] + p["bom"])
    th = _softplus(th @ p["woa"] + p["boa"])
    return mu, th


def reference_forward_bf16(z, batch, params):
    """Pure-JAX reference with the same bf16 matmul precision as the kernel."""
    fp = _fold_params(params)
    bf16, f32 = jnp.bfloat16, jnp.float32
    mm = lambda a, w: jnp.dot(a.astype(bf16), w, preferred_element_type=f32)

    b = _selu(mm(batch, fp["wb"]) + fp["bb"])
    dec = _selu(mm(z, fp["w4z"]) + mm(b, fp["w4b"]) + fp["b4"])
    dec = _selu(mm(dec, fp["w5"]) + fp["b5"])
    h = _selu(mm(dec, fp["w5h"]) + fp["b5h"])
    h = h.astype(bf16)   # kernel round-trips the trunk output through bf16
    mu = _softplus(jnp.dot(h[:, :HH], fp["wom"], preferred_element_type=f32) + fp["bom"])
    th = _softplus(jnp.dot(h[:, HH:], fp["woa"], preferred_element_type=f32) + fp["boa"])
    return mu, th


if __name__ == "__main__":
    B, N_GENES, ENC_DIM, N_BATCH = 16, 512, 32, 8

    key = jax.random.PRNGKey(0)
    kz, kb, kp = jax.random.split(key, 3)

    z = jax.random.normal(kz, (B, ENC_DIM), jnp.float32)
    batch_ids = jax.random.randint(kb, (B,), 0, N_BATCH)
    batch = jax.nn.one_hot(batch_ids, N_BATCH, dtype=jnp.float32)
    params = init_params(kp, N_GENES, ENC_DIM, N_BATCH)

    # One-time param preparation (BN fold, bf16 cast, gene-dim padding).
    prepared, cfg = prepare_decoder_params(params, tn=1024)

    mu, theta = decoder_forward(z, batch, prepared,
                                n_genes=cfg["n_genes"], tn=cfg["tn"])
    jax.block_until_ready((mu, theta))

    # Matching-precision check (same bf16 matmul path in pure JAX).
    ref_mu_bf, ref_th_bf = reference_forward_bf16(z, batch, params)
    assert jnp.allclose(mu, ref_mu_bf, rtol=2e-3, atol=2e-3)
    assert jnp.allclose(theta, ref_th_bf, rtol=2e-3, atol=2e-3)

    # Loose check against the full-f32 un-folded spec semantics.
    ref_mu, ref_th = reference_forward_f32(z, batch, params)
    assert jnp.allclose(mu, ref_mu, rtol=0.1, atol=0.1)
    assert jnp.allclose(theta, ref_th, rtol=0.1, atol=0.1)

    print("KERNEL_OK")
</pallas_src>

<mosaic_0001>
module attributes {stable_mosaic.version = 11 : i64} {
  func.func @heads_kernel(%arg0: i32, %arg1: i32, %arg2: memref<16x512xbf16, #tpu.memory_space<vmem>>, %arg3: memref<16x512xbf16, #tpu.memory_space<vmem>>, %arg4: memref<512x512xbf16, #tpu.memory_space<vmem>>, %arg5: memref<512x512xbf16, #tpu.memory_space<vmem>>, %arg6: memref<1x512xf32, #tpu.memory_space<vmem>>, %arg7: memref<1x512xf32, #tpu.memory_space<vmem>>, %arg8: memref<16x512xf32, #tpu.memory_space<vmem>>, %arg9: memref<16x512xf32, #tpu.memory_space<vmem>>) attributes {dimension_semantics = [#tpu.dimension_semantics<parallel>, #tpu.dimension_semantics<parallel>], iteration_bounds = array<i64: 1, 1>, scalar_prefetch = 0 : i64, scratch_operands = 0 : i64, tpu.core_type = #tpu.core_type<tc>, window_params = [{transform_indices = @transform_0, window_bounds = array<i64: 16, 512>}, {transform_indices = @transform_1, window_bounds = array<i64: 16, 512>}, {transform_indices = @transform_2, window_bounds = array<i64: 512, 512>}, {transform_indices = @transform_3, window_bounds = array<i64: 512, 512>}, {transform_indices = @transform_4, window_bounds = array<i64: 1, 512>}, {transform_indices = @transform_5, window_bounds = array<i64: 1, 512>}, {transform_indices = @transform_6, window_bounds = array<i64: 16, 512>}, {transform_indices = @transform_7, window_bounds = array<i64: 16, 512>}]} {
    %c0 = arith.constant 0 : index
    %c0_0 = arith.constant 0 : index
    %0 = vector.load %arg2[%c0, %c0_0] : memref<16x512xbf16, #tpu.memory_space<vmem>>, vector<16x512xbf16>
    %c0_1 = arith.constant 0 : index
    %c0_2 = arith.constant 0 : index
    %1 = vector.load %arg4[%c0_1, %c0_2] : memref<512x512xbf16, #tpu.memory_space<vmem>>, vector<512x512xbf16>
    %cst = arith.constant dense<0.000000e+00> : vector<16x512xf32>
    %2 = tpu.matmul %0, %1, %cst {dimension_numbers = #tpu.dot_dimension_numbers<[1], [0], [0], [1], [0, 0, 1, 1], [], []>} : vector<16x512xbf16>, vector<512x512xbf16>, vector<16x512xf32> -> vector<16x512xf32>
    %c0_3 = arith.constant 0 : index
    %c0_4 = arith.constant 0 : index
    %3 = vector.load %arg6[%c0_3, %c0_4] : memref<1x512xf32, #tpu.memory_space<vmem>>, vector<1x512xf32>
    %4 = vector.broadcast %3 : vector<1x512xf32> to vector<16x512xf32>
    %5 = arith.addf %2, %4 : vector<16x512xf32>
    %c0_5 = arith.constant 0 : index
    %c0_6 = arith.constant 0 : index
    %6 = vector.load %arg3[%c0_5, %c0_6] : memref<16x512xbf16, #tpu.memory_space<vmem>>, vector<16x512xbf16>
    %c0_7 = arith.constant 0 : index
    %c0_8 = arith.constant 0 : index
    %7 = vector.load %arg5[%c0_7, %c0_8] : memref<512x512xbf16, #tpu.memory_space<vmem>>, vector<512x512xbf16>
    %cst_9 = arith.constant dense<0.000000e+00> : vector<16x512xf32>
    %8 = tpu.matmul %6, %7, %cst_9 {dimension_numbers = #tpu.dot_dimension_numbers<[1], [0], [0], [1], [0, 0, 1, 1], [], []>} : vector<16x512xbf16>, vector<512x512xbf16>, vector<16x512xf32> -> vector<16x512xf32>
    %c0_10 = arith.constant 0 : index
    %c0_11 = arith.constant 0 : index
    %9 = vector.load %arg7[%c0_10, %c0_11] : memref<1x512xf32, #tpu.memory_space<vmem>>, vector<1x512xf32>
    %10 = vector.broadcast %9 : vector<1x512xf32> to vector<16x512xf32>
    %11 = arith.addf %8, %10 : vector<16x512xf32>
    %cst_12 = arith.constant 0.000000e+00 : f32
    %12 = vector.broadcast %cst_12 : f32 to vector<16x512xf32>
    %13 = arith.maximumf %5, %12 : vector<16x512xf32>
    %14 = math.absf %5 : vector<16x512xf32>
    %cst_13 = arith.constant 0.000000e+00 : f32
    %15 = vector.broadcast %cst_13 : f32 to vector<16x512xf32>
    %16 = arith.subf %15, %14 : vector<16x512xf32>
    %17 = math.exp %16 : vector<16x512xf32>
    %cst_14 = arith.constant 1.000000e+00 : f32
    %18 = vector.broadcast %cst_14 : f32 to vector<16x512xf32>
    %19 = arith.addf %18, %17 : vector<16x512xf32>
    %20 = math.log %19 : vector<16x512xf32>
    %21 = arith.addf %13, %20 : vector<16x512xf32>
    %c0_15 = arith.constant 0 : index
    %c0_16 = arith.constant 0 : index
    %22 = vector.load %arg8[%c0_15, %c0_16] : memref<16x512xf32, #tpu.memory_space<vmem>>, vector<16x512xf32>
    tpu.vector_store %arg8[%c0_15, %c0_16], %21 {strides = array<i32>} : memref<16x512xf32, #tpu.memory_space<vmem>>, vector<16x512xf32>,
    %cst_17 = arith.constant 0.000000e+00 : f32
    %23 = vector.broadcast %cst_17 : f32 to vector<16x512xf32>
    %24 = arith.maximumf %11, %23 : vector<16x512xf32>
    %25 = math.absf %11 : vector<16x512xf32>
    %cst_18 = arith.constant 0.000000e+00 : f32
    %26 = vector.broadcast %cst_18 : f32 to vector<16x512xf32>
    %27 = arith.subf %26, %25 : vector<16x512xf32>
    %28 = math.exp %27 : vector<16x512xf32>
    %cst_19 = arith.constant 1.000000e+00 : f32
    %29 = vector.broadcast %cst_19 : f32 to vector<16x512xf32>
    %30 = arith.addf %29, %28 : vector<16x512xf32>
    %31 = math.log %30 : vector<16x512xf32>
    %32 = arith.addf %24, %31 : vector<16x512xf32>
    %c0_20 = arith.constant 0 : index
    %c0_21 = arith.constant 0 : index
    %33 = vector.load %arg9[%c0_20, %c0_21] : memref<16x512xf32, #tpu.memory_space<vmem>>, vector<16x512xf32>
    tpu.vector_store %arg9[%c0_20, %c0_21], %32 {strides = array<i32>} : memref<16x512xf32, #tpu.memory_space<vmem>>, vector<16x512xf32>,
    return
  }
  func.func @transform_0(%arg0: i32, %arg1: i32) -> (i32, i32) {
    %c0_i32 = arith.constant 0 : i32
    %c0_i32_0 = arith.constant 0 : i32
    return %arg1, %c0_i32 : i32, i32
  }
  func.func @transform_1(%arg0: i32, %arg1: i32) -> (i32, i32) {
    %c0_i32 = arith.constant 0 : i32
    %c0_i32_0 = arith.constant 0 : i32
    return %arg1, %c0_i32 : i32, i32
  }
  func.func @transform_2(%arg0: i32, %arg1: i32) -> (i32, i32) {
    %c0_i32 = arith.constant 0 : i32
    %c0_i32_0 = arith.constant 0 : i32
    return %c0_i32, %arg0 : i32, i32
  }
  func.func @transform_3(%arg0: i32, %arg1: i32) -> (i32, i32) {
    %c0_i32 = arith.constant 0 : i32
    %c0_i32_0 = arith.constant 0 : i32
    return %c0_i32, %arg0 : i32, i32
  }
  func.func @transform_4(%arg0: i32, %arg1: i32) -> (i32, i32) {
    %c0_i32 = arith.constant 0 : i32
    %c0_i32_0 = arith.constant 0 : i32
    return %c0_i32, %arg0 : i32, i32
  }
  func.func @transform_5(%arg0: i32, %arg1: i32) -> (i32, i32) {
    %c0_i32 = arith.constant 0 : i32
    %c0_i32_0 = arith.constant 0 : i32
    return %c0_i32, %arg0 : i32, i32
  }
  func.func @transform_6(%arg0: i32, %arg1: i32) -> (i32, i32) {
    %c0_i32 = arith.constant 0 : i32
    return %arg1, %arg0 : i32, i32
  }
  func.func @transform_7(%arg0: i32, %arg1: i32) -> (i32, i32) {
    %c0_i32 = arith.constant 0 : i32
    return %arg1, %arg0 : i32, i32
  }
}

module attributes {stable_mosaic.version = 11 : i64} {
  func.func @trunk_kernel(%arg0: i32, %arg1: memref<16x32xf32, #tpu.memory_space<vmem>>, %arg2: memref<16x8xf32, #tpu.memory_space<vmem>>, %arg3: memref<8x8xbf16, #tpu.memory_space<vmem>>, %arg4: memref<1x8xf32, #tpu.memory_space<vmem>>, %arg5: memref<32x128xbf16, #tpu.memory_space<vmem>>, %arg6: memref<8x128xbf16, #tpu.memory_space<vmem>>, %arg7: memref<1x128xf32, #tpu.memory_space<vmem>>, %arg8: memref<128x256xbf16, #tpu.memory_space<vmem>>, %arg9: memref<1x256xf32, #tpu.memory_space<vmem>>, %arg10: memref<256x1024xbf16, #tpu.memory_space<vmem>>, %arg11: memref<1x1024xf32, #tpu.memory_space<vmem>>, %arg12: memref<16x512xbf16, #tpu.memory_space<vmem>>, %arg13: memref<16x512xbf16, #tpu.memory_space<vmem>>) attributes {dimension_semantics = [#tpu.dimension_semantics<parallel>], iteration_bounds = array<i64: 1>, scalar_prefetch = 0 : i64, scratch_operands = 0 : i64, tpu.core_type = #tpu.core_type<tc>, window_params = [{transform_indices = @transform_0, window_bounds = array<i64: 16, 32>}, {transform_indices = @transform_1, window_bounds = array<i64: 16, 8>}, {pipeline_mode = #tpu.pipeline_mode<synchronous>, transform_indices = @transform_2, window_bounds = array<i64: 8, 8>}, {pipeline_mode = #tpu.pipeline_mode<synchronous>, transform_indices = @transform_3, window_bounds = array<i64: 1, 8>}, {pipeline_mode = #tpu.pipeline_mode<synchronous>, transform_indices = @transform_4, window_bounds = array<i64: 32, 128>}, {pipeline_mode = #tpu.pipeline_mode<synchronous>, transform_indices = @transform_5, window_bounds = array<i64: 8, 128>}, {pipeline_mode = #tpu.pipeline_mode<synchronous>, transform_indices = @transform_6, window_bounds = array<i64: 1, 128>}, {pipeline_mode = #tpu.pipeline_mode<synchronous>, transform_indices = @transform_7, window_bounds = array<i64: 128, 256>}, {pipeline_mode = #tpu.pipeline_mode<synchronous>, transform_indices = @transform_8, window_bounds = array<i64: 1, 256>}, {pipeline_mode = #tpu.pipeline_mode<synchronous>, transform_indices = @transform_9, window_bounds = array<i64: 256, 1024>}, {pipeline_mode = #tpu.pipeline_mode<synchronous>, transform_indices = @transform_10, window_bounds = array<i64: 1, 1024>}, {transform_indices = @transform_11, window_bounds = array<i64: 16, 512>}, {transform_indices = @transform_12, window_bounds = array<i64: 16, 512>}]} {
    %c0 = arith.constant 0 : index
    %c0_0 = arith.constant 0 : index
    %0 = vector.load %arg2[%c0, %c0_0] : memref<16x8xf32, #tpu.memory_space<vmem>>, vector<16x8xf32>
    %1 = arith.truncf %0 : vector<16x8xf32> to vector<16x8xbf16>
    %c0_1 = arith.constant 0 : index
    %c0_2 = arith.constant 0 : index
    %2 = vector.load %arg3[%c0_1, %c0_2] : memref<8x8xbf16, #tpu.memory_space<vmem>>, vector<8x8xbf16>
    %cst = arith.constant dense<0.000000e+00> : vector<16x8xf32>
    %3 = tpu.matmul %1, %2, %cst {dimension_numbers = #tpu.dot_dimension_numbers<[1], [0], [0], [1], [0, 0, 1, 1], [], []>} : vector<16x8xbf16>, vector<8x8xbf16>, vector<16x8xf32> -> vector<16x8xf32>
    %c0_3 = arith.constant 0 : index
    %c0_4 = arith.constant 0 : index
    %4 = vector.load %arg4[%c0_3, %c0_4] : memref<1x8xf32, #tpu.memory_space<vmem>>, vector<1x8xf32>
    %5 = vector.broadcast %4 : vector<1x8xf32> to vector<16x8xf32>
    %6 = arith.addf %3, %5 : vector<16x8xf32>
    %cst_5 = arith.constant 0.000000e+00 : f32
    %7 = vector.broadcast %cst_5 : f32 to vector<16x8xf32>
    %8 = arith.cmpf ogt, %6, %7 : vector<16x8xf32>
    %9 = math.exp %6 : vector<16x8xf32>
    %cst_6 = arith.constant 1.000000e+00 : f32
    %10 = vector.broadcast %cst_6 : f32 to vector<16x8xf32>
    %11 = arith.subf %9, %10 : vector<16x8xf32>
    %cst_7 = arith.constant 1.67326319 : f32
    %12 = vector.broadcast %cst_7 : f32 to vector<16x8xf32>
    %13 = arith.mulf %12, %11 : vector<16x8xf32>
    %14 = arith.select %8, %6, %13 : vector<16x8xi1>, vector<16x8xf32>
    %cst_8 = arith.constant 1.05070102 : f32
    %15 = vector.broadcast %cst_8 : f32 to vector<16x8xf32>
    %16 = arith.mulf %15, %14 : vector<16x8xf32>
    %c0_9 = arith.constant 0 : index
    %c0_10 = arith.constant 0 : index
    %17 = vector.load %arg1[%c0_9, %c0_10] : memref<16x32xf32, #tpu.memory_space<vmem>>, vector<16x32xf32>
    %18 = arith.truncf %17 : vector<16x32xf32> to vector<16x32xbf16>
    %c0_11 = arith.constant 0 : index
    %c0_12 = arith.constant 0 : index
    %19 = vector.load %arg5[%c0_11, %c0_12] : memref<32x128xbf16, #tpu.memory_space<vmem>>, vector<32x128xbf16>
    %cst_13 = arith.constant dense<0.000000e+00> : vector<16x128xf32>
    %20 = tpu.matmul %18, %19, %cst_13 {dimension_numbers = #tpu.dot_dimension_numbers<[1], [0], [0], [1], [0, 0, 1, 1], [], []>} : vector<16x32xbf16>, vector<32x128xbf16>, vector<16x128xf32> -> vector<16x128xf32>
    %21 = arith.truncf %16 : vector<16x8xf32> to vector<16x8xbf16>
    %c0_14 = arith.constant 0 : index
    %c0_15 = arith.constant 0 : index
    %22 = vector.load %arg6[%c0_14, %c0_15] : memref<8x128xbf16, #tpu.memory_space<vmem>>, vector<8x128xbf16>
    %cst_16 = arith.constant dense<0.000000e+00> : vector<16x128xf32>
    %23 = tpu.matmul %21, %22, %cst_16 {dimension_numbers = #tpu.dot_dimension_numbers<[1], [0], [0], [1], [0, 0, 1, 1], [], []>} : vector<16x8xbf16>, vector<8x128xbf16>, vector<16x128xf32> -> vector<16x128xf32>
    %24 = arith.addf %20, %23 : vector<16x128xf32>
    %c0_17 = arith.constant 0 : index
    %c0_18 = arith.constant 0 : index
    %25 = vector.load %arg7[%c0_17, %c0_18] : memref<1x128xf32, #tpu.memory_space<vmem>>, vector<1x128xf32>
    %26 = vector.broadcast %25 : vector<1x128xf32> to vector<16x128xf32>
    %27 = arith.addf %24, %26 : vector<16x128xf32>
    %cst_19 = arith.constant 0.000000e+00 : f32
    %28 = vector.broadcast %cst_19 : f32 to vector<16x128xf32>
    %29 = arith.cmpf ogt, %27, %28 : vector<16x128xf32>
    %30 = math.exp %27 : vector<16x128xf32>
    %cst_20 = arith.constant 1.000000e+00 : f32
    %31 = vector.broadcast %cst_20 : f32 to vector<16x128xf32>
    %32 = arith.subf %30, %31 : vector<16x128xf32>
    %cst_21 = arith.constant 1.67326319 : f32
    %33 = vector.broadcast %cst_21 : f32 to vector<16x128xf32>
    %34 = arith.mulf %33, %32 : vector<16x128xf32>
    %35 = arith.select %29, %27, %34 : vector<16x128xi1>, vector<16x128xf32>
    %cst_22 = arith.constant 1.05070102 : f32
    %36 = vector.broadcast %cst_22 : f32 to vector<16x128xf32>
    %37 = arith.mulf %36, %35 : vector<16x128xf32>
    %38 = arith.truncf %37 : vector<16x128xf32> to vector<16x128xbf16>
    %c0_23 = arith.constant 0 : index
    %c0_24 = arith.constant 0 : index
    %39 = vector.load %arg8[%c0_23, %c0_24] : memref<128x256xbf16, #tpu.memory_space<vmem>>, vector<128x256xbf16>
    %cst_25 = arith.constant dense<0.000000e+00> : vector<16x256xf32>
    %40 = tpu.matmul %38, %39, %cst_25 {dimension_numbers = #tpu.dot_dimension_numbers<[1], [0], [0], [1], [0, 0, 1, 1], [], []>} : vector<16x128xbf16>, vector<128x256xbf16>, vector<16x256xf32> -> vector<16x256xf32>
    %c0_26 = arith.constant 0 : index
    %c0_27 = arith.constant 0 : index
    %41 = vector.load %arg9[%c0_26, %c0_27] : memref<1x256xf32, #tpu.memory_space<vmem>>, vector<1x256xf32>
    %42 = vector.broadcast %41 : vector<1x256xf32> to vector<16x256xf32>
    %43 = arith.addf %40, %42 : vector<16x256xf32>
    %cst_28 = arith.constant 0.000000e+00 : f32
    %44 = vector.broadcast %cst_28 : f32 to vector<16x256xf32>
    %45 = arith.cmpf ogt, %43, %44 : vector<16x256xf32>
    %46 = math.exp %43 : vector<16x256xf32>
    %cst_29 = arith.constant 1.000000e+00 : f32
    %47 = vector.broadcast %cst_29 : f32 to vector<16x256xf32>
    %48 = arith.subf %46, %47 : vector<16x256xf32>
    %cst_30 = arith.constant 1.67326319 : f32
    %49 = vector.broadcast %cst_30 : f32 to vector<16x256xf32>
    %50 = arith.mulf %49, %48 : vector<16x256xf32>
    %51 = arith.select %45, %43, %50 : vector<16x256xi1>, vector<16x256xf32>
    %cst_31 = arith.constant 1.05070102 : f32
    %52 = vector.broadcast %cst_31 : f32 to vector<16x256xf32>
    %53 = arith.mulf %52, %51 : vector<16x256xf32>
    %54 = arith.truncf %53 : vector<16x256xf32> to vector<16x256xbf16>
    %c0_32 = arith.constant 0 : index
    %c0_33 = arith.constant 0 : index
    %55 = vector.load %arg10[%c0_32, %c0_33] : memref<256x1024xbf16, #tpu.memory_space<vmem>>, vector<256x1024xbf16>
    %cst_34 = arith.constant dense<0.000000e+00> : vector<16x1024xf32>
    %56 = tpu.matmul %54, %55, %cst_34 {dimension_numbers = #tpu.dot_dimension_numbers<[1], [0], [0], [1], [0, 0, 1, 1], [], []>} : vector<16x256xbf16>, vector<256x1024xbf16>, vector<16x1024xf32> -> vector<16x1024xf32>
    %c0_35 = arith.constant 0 : index
    %c0_36 = arith.constant 0 : index
    %57 = vector.load %arg11[%c0_35, %c0_36] : memref<1x1024xf32, #tpu.memory_space<vmem>>, vector<1x1024xf32>
    %58 = vector.broadcast %57 : vector<1x1024xf32> to vector<16x1024xf32>
    %59 = arith.addf %56, %58 : vector<16x1024xf32>
    %cst_37 = arith.constant 0.000000e+00 : f32
    %60 = vector.broadcast %cst_37 : f32 to vector<16x1024xf32>
    %61 = arith.cmpf ogt, %59, %60 : vector<16x1024xf32>
    %62 = math.exp %59 : vector<16x1024xf32>
    %cst_38 = arith.constant 1.000000e+00 : f32
    %63 = vector.broadcast %cst_38 : f32 to vector<16x1024xf32>
    %64 = arith.subf %62, %63 : vector<16x1024xf32>
    %cst_39 = arith.constant 1.67326319 : f32
    %65 = vector.broadcast %cst_39 : f32 to vector<16x1024xf32>
    %66 = arith.mulf %65, %64 : vector<16x1024xf32>
    %67 = arith.select %61, %59, %66 : vector<16x1024xi1>, vector<16x1024xf32>
    %cst_40 = arith.constant 1.05070102 : f32
    %68 = vector.broadcast %cst_40 : f32 to vector<16x1024xf32>
    %69 = arith.mulf %68, %67 : vector<16x1024xf32>
    %70 = vector.extract_strided_slice %69 {offsets = [0, 0], sizes = [16, 512], strides = [1, 1]} : vector<16x1024xf32> to vector<16x512xf32>
    %71 = arith.truncf %70 : vector<16x512xf32> to vector<16x512xbf16>
    %c0_41 = arith.constant 0 : index
    %c0_42 = arith.constant 0 : index
    %72 = vector.load %arg12[%c0_41, %c0_42] : memref<16x512xbf16, #tpu.memory_space<vmem>>, vector<16x512xbf16>
    tpu.vector_store %arg12[%c0_41, %c0_42], %71 {strides = array<i32>} : memref<16x512xbf16, #tpu.memory_space<vmem>>, vector<16x512xbf16>,
    %73 = vector.extract_strided_slice %69 {offsets = [0, 512], sizes = [16, 512], strides = [1, 1]} : vector<16x1024xf32> to vector<16x512xf32>
    %74 = arith.truncf %73 : vector<16x512xf32> to vector<16x512xbf16>
    %c0_43 = arith.constant 0 : index
    %c0_44 = arith.constant 0 : index
    %75 = vector.load %arg13[%c0_43, %c0_44] : memref<16x512xbf16, #tpu.memory_space<vmem>>, vector<16x512xbf16>
    tpu.vector_store %arg13[%c0_43, %c0_44], %74 {strides = array<i32>} : memref<16x512xbf16, #tpu.memory_space<vmem>>, vector<16x512xbf16>,
    return
  }
  func.func @transform_0(%arg0: i32) -> (i32, i32) {
    %c0_i32 = arith.constant 0 : i32
    %c0_i32_0 = arith.constant 0 : i32
    return %arg0, %c0_i32 : i32, i32
  }
  func.func @transform_1(%arg0: i32) -> (i32, i32) {
    %c0_i32 = arith.constant 0 : i32
    %c0_i32_0 = arith.constant 0 : i32
    return %arg0, %c0_i32 : i32, i32
  }
  func.func @transform_2(%arg0: i32) -> (i32, i32) {
    %c0_i32 = arith.constant 0 : i32
    %c0_i32_0 = arith.constant 0 : i32
    %c0_i32_1 = arith.constant 0 : i32
    return %c0_i32, %c0_i32_0 : i32, i32
  }
  func.func @transform_3(%arg0: i32) -> (i32, i32) {
    %c0_i32 = arith.constant 0 : i32
    %c0_i32_0 = arith.constant 0 : i32
    %c0_i32_1 = arith.constant 0 : i32
    return %c0_i32, %c0_i32_0 : i32, i32
  }
  func.func @transform_4(%arg0: i32) -> (i32, i32) {
    %c0_i32 = arith.constant 0 : i32
    %c0_i32_0 = arith.constant 0 : i32
    %c0_i32_1 = arith.constant 0 : i32
    return %c0_i32, %c0_i32_0 : i32, i32
  }
  func.func @transform_5(%arg0: i32) -> (i32, i32) {
    %c0_i32 = arith.constant 0 : i32
    %c0_i32_0 = arith.constant 0 : i32
    %c0_i32_1 = arith.constant 0 : i32
    return %c0_i32, %c0_i32_0 : i32, i32
  }
  func.func @transform_6(%arg0: i32) -> (i32, i32) {
    %c0_i32 = arith.constant 0 : i32
    %c0_i32_0 = arith.constant 0 : i32
    %c0_i32_1 = arith.constant 0 : i32
    return %c0_i32, %c0_i32_0 : i32, i32
  }
  func.func @transform_7(%arg0: i32) -> (i32, i32) {
    %c0_i32 = arith.constant 0 : i32
    %c0_i32_0 = arith.constant 0 : i32
    %c0_i32_1 = arith.constant 0 : i32
    return %c0_i32, %c0_i32_0 : i32, i32
  }
  func.func @transform_8(%arg0: i32) -> (i32, i32) {
    %c0_i32 = arith.constant 0 : i32
    %c0_i32_0 = arith.constant 0 : i32
    %c0_i32_1 = arith.constant 0 : i32
    return %c0_i32, %c0_i32_0 : i32, i32
  }
  func.func @transform_9(%arg0: i32) -> (i32, i32) {
    %c0_i32 = arith.constant 0 : i32
    %c0_i32_0 = arith.constant 0 : i32
    %c0_i32_1 = arith.constant 0 : i32
    return %c0_i32, %c0_i32_0 : i32, i32
  }
  func.func @transform_10(%arg0: i32) -> (i32, i32) {
    %c0_i32 = arith.constant 0 : i32
    %c0_i32_0 = arith.constant 0 : i32
    %c0_i32_1 = arith.constant 0 : i32
    return %c0_i32, %c0_i32_0 : i32, i32
  }
  func.func @transform_11(%arg0: i32) -> (i32, i32) {
    %c0_i32 = arith.constant 0 : i32
    %c0_i32_0 = arith.constant 0 : i32
    return %arg0, %c0_i32 : i32, i32
  }
  func.func @transform_12(%arg0: i32) -> (i32, i32) {
    %c0_i32 = arith.constant 0 : i32
    %c0_i32_0 = arith.constant 0 : i32
    return %arg0, %c0_i32 : i32, i32
  }
}

</mosaic_0001>

<llo_original>
// kernel: decoder_forward.3
$region0: #{decoder_forward.3}
  #allocation0 [shape = 'u32[]', space=smem, size = 0x4, offset = 0x4, fixed_abs, tag = 'smem constant byte address 0x4 - core index']
  #allocation1 [shape = 'u32[144,128]{1,0:T(1,128)}', space=vmem, size = 0x12000, scoped, tag = 'internal scratch']
  %s0 = inlined_call_operand.vmem [shape: bf16[16,512], index: 0, kind: input, shape index: {}]
  %s1 = inlined_call_operand.vmem [shape: bf16[16,512], index: 1, kind: input, shape index: {}]
  %s2 = inlined_call_operand.vmem [shape: bf16[512,512], index: 2, kind: input, shape index: {}]
  %s3 = inlined_call_operand.hbm [shape: bf16[512,512], index: 3, kind: input, shape index: {}]
  %s4 = inlined_call_operand.vmem [shape: f32[1,512], index: 4, kind: input, shape index: {}]
  %s5 = inlined_call_operand.vmem [shape: f32[1,512], index: 5, kind: input, shape index: {}]
  %s6 = inlined_call_operand.hbm [shape: f32[16,512], index: 6, kind: output, shape index: {0}]
  %s7 = inlined_call_operand.hbm [shape: f32[16,512], index: 7, kind: output, shape index: {1}]
  %8 = xla_tuple %s6, %s7
  %s9 = sld [smem:[#allocation0]]
  $region46: #{decoder_forward.3} parent=0
    _
  %s11 = ssub.s32 1, %s9
  %s12 = scalar_select 0, %s11, %s9
  $region1: #{decoder_forward.3} parent=0
    #allocation2 [shape = 'u8[524288]{0}', space=vmem, size = 0x80000, scoped, tag = 'input window, operand 3, single buffered']
    #allocation3 [shape = 's32[1]{0}', space=sflag, size = 0x4, scoped, tag = 'scoped memory for decoder_forward.3']
    #allocation4 [shape = 's32[1]{0}', space=sflag, size = 0x4, scoped, tag = 'scoped memory for decoder_forward.3']
    #allocation5 [shape = 'u8[32768]{0}', space=vmem, size = 0x8000, scoped, tag = 'output window, operand 0, single buffered']
    #allocation6 [shape = 'u8[32768]{0}', space=vmem, size = 0x8000, scoped, tag = 'output window, operand 1, single buffered']
    #allocation7 [shape = 's32[1]{0}', space=sflag, size = 0x4, scoped, tag = 'scoped memory for decoder_forward.3']
    %13 = vsyncpa [#allocation3], 0
    %14 = vsyncpa [#allocation4], 0
    %15 = vsyncpa [#allocation7], 0
    // Predicated region
    $region2: #{decoder_forward.3} parent=1 // pred_check
      _
    $region3: #{decoder_forward.3} parent=1 // pred_check_branch
      %17 = sbr.rel (0) target = $region5
    $region4: #{decoder_forward.3} parent=1 // pred_region
      _
    $region5: #{decoder_forward.3} parent=1 // pred_fallthru
      _
    // Predicated region
    $region6: #{decoder_forward.3} parent=1 // pred_check
      _
    $region7: #{decoder_forward.3} parent=1 // pred_check_branch
      %19 = sbr.rel (0) target = $region9
    $region8: #{decoder_forward.3} parent=1 // pred_region
      _
    $region9: #{decoder_forward.3} parent=1 // pred_fallthru
      _
    // Predicated region
    $region10: #{decoder_forward.3} parent=1 // pred_check
      _
    $region11: #{decoder_forward.3} parent=1 // pred_check_branch
      %21 = sbr.rel (0) target = $region13
    $region12: #{decoder_forward.3} parent=1 // pred_region
      _
    $region13: #{decoder_forward.3} parent=1 // pred_fallthru
      _
    // Predicated region
    $region14: #{decoder_forward.3} parent=1 // pred_check
      _
    $region15: #{decoder_forward.3} parent=1 // pred_check_branch
      %23 = sbr.rel (0) target = $region17
    $region16: #{decoder_forward.3} parent=1 // pred_region
      %s25 = ssub.s32 16384, 16384
      %26 = vsyncadd [#allocation3], %s25
      %s27 = sshll.u32 [#allocation2], 4
      %s28 = int_to_ptr.vmem [resolvable:$true] %s27
      %33 = dma.hbm_to_vmem [thread:$0]  %s3, 16384, %s28, [#allocation3], 256, 256, 16
    $region17: #{decoder_forward.3} parent=1 // pred_fallthru
      _
    // Predicated region
    $region18: #{decoder_forward.3} parent=1 // pred_check
      _
    $region19: #{decoder_forward.3} parent=1 // pred_check_branch
      %35 = sbr.rel (0) target = $region21
    $region20: #{decoder_forward.3} parent=1 // pred_region
      _
    $region21: #{decoder_forward.3} parent=1 // pred_fallthru
      _
    // Predicated region
    $region22: #{decoder_forward.3} parent=1 // pred_check
      _
    $region23: #{decoder_forward.3} parent=1 // pred_check_branch
      %37 = sbr.rel (0) target = $region25
    $region24: #{decoder_forward.3} parent=1 // pred_region
      _
    $region25: #{decoder_forward.3} parent=1 // pred_fallthru
      _
    // Predicated region
    $region26: #{decoder_forward.3} parent=1 // pred_check
      _
    $region27: #{decoder_forward.3} parent=1 // pred_check_branch
      %39 = sbr.rel (0) target = $region29
    $region28: #{decoder_forward.3} parent=1 // pred_region
      %40 = dma.done [#allocation3], 16384
    $region29: #{decoder_forward.3} parent=1 // pred_fallthru
      _
    %v41 = vld [vmem:[%s0] sm:$0xff]
    %v42 = vld [vmem:[%s0 + $0x8] sm:$0xff]
    %v43 = vld [vmem:[%s0 + $0x10] sm:$0xff]
    %v44 = vld [vmem:[%s0 + $0x18] sm:$0xff]
    %v45 = vld [vmem:[%s2] sm:$0xff]
    %v46 = vld [vmem:[%s2 + $0x8] sm:$0xff]
    %v47 = vld [vmem:[%s2 + $0x10] sm:$0xff]
    %v48 = vld [vmem:[%s2 + $0x18] sm:$0xff]
    %v49 = vld [vmem:[%s2 + $0x20] sm:$0xff]
    %v50 = vld [vmem:[%s2 + $0x28] sm:$0xff]
    %v51 = vld [vmem:[%s2 + $0x30] sm:$0xff]
    %v52 = vld [vmem:[%s2 + $0x38] sm:$0xff]
    %v53 = vld [vmem:[%s2 + $0x40] sm:$0xff]
    %v54 = vld [vmem:[%s2 + $0x48] sm:$0xff]
    %v55 = vld [vmem:[%s2 + $0x50] sm:$0xff]
    %v56 = vld [vmem:[%s2 + $0x58] sm:$0xff]
    %v57 = vld [vmem:[%s2 + $0x60] sm:$0xff]
    %v58 = vld [vmem:[%s2 + $0x68] sm:$0xff]
    %v59 = vld [vmem:[%s2 + $0x70] sm:$0xff]
    %v60 = vld [vmem:[%s2 + $0x78] sm:$0xff]
    %v61 = vld [vmem:[%s2 + $0x80] sm:$0xff]
    %v62 = vld [vmem:[%s2 + $0x88] sm:$0xff]
    %v63 = vld [vmem:[%s2 + $0x90] sm:$0xff]
    %v64 = vld [vmem:[%s2 + $0x98] sm:$0xff]
    %v65 = vld [vmem:[%s2 + $0xa0] sm:$0xff]
    %v66 = vld [vmem:[%s2 + $0xa8] sm:$0xff]
    %v67 = vld [vmem:[%s2 + $0xb0] sm:$0xff]
    %v68 = vld [vmem:[%s2 + $0xb8] sm:$0xff]
    %v69 = vld [vmem:[%s2 + $0xc0] sm:$0xff]
    %v70 = vld [vmem:[%s2 + $0xc8] sm:$0xff]
    %v71 = vld [vmem:[%s2 + $0xd0] sm:$0xff]
    %v72 = vld [vmem:[%s2 + $0xd8] sm:$0xff]
    %v73 = vld [vmem:[%s2 + $0xe0] sm:$0xff]
    %v74 = vld [vmem:[%s2 + $0xe8] sm:$0xff]
    %v75 = vld [vmem:[%s2 + $0xf0] sm:$0xff]
    %v76 = vld [vmem:[%s2 + $0xf8] sm:$0xff]
    %v77 = vld [vmem:[%s2 + $0x100] sm:$0xff]
    %v78 = vld [vmem:[%s2 + $0x108] sm:$0xff]
    %v79 = vld [vmem:[%s2 + $0x110] sm:$0xff]
    %v80 = vld [vmem:[%s2 + $0x118] sm:$0xff]
    %v81 = vld [vmem:[%s2 + $0x120] sm:$0xff]
    %v82 = vld [vmem:[%s2 + $0x128] sm:$0xff]
    %v83 = vld [vmem:[%s2 + $0x130] sm:$0xff]
    %v84 = vld [vmem:[%s2 + $0x138] sm:$0xff]
    %v85 = vld [vmem:[%s2 + $0x140] sm:$0xff]
    %v86 = vld [vmem:[%s2 + $0x148] sm:$0xff]
    %v87 = vld [vmem:[%s2 + $0x150] sm:$0xff]
    %v88 = vld [vmem:[%s2 + $0x158] sm:$0xff]
    %v89 = vld [vmem:[%s2 + $0x160] sm:$0xff]
    %v90 = vld [vmem:[%s2 + $0x168] sm:$0xff]
    %v91 = vld [vmem:[%s2 + $0x170] sm:$0xff]
    %v92 = vld [vmem:[%s2 + $0x178] sm:$0xff]
    %v93 = vld [vmem:[%s2 + $0x180] sm:$0xff]
    %v94 = vld [vmem:[%s2 + $0x188] sm:$0xff]
    %v95 = vld [vmem:[%s2 + $0x190] sm:$0xff]
    %v96 = vld [vmem:[%s2 + $0x198] sm:$0xff]
    %v97 = vld [vmem:[%s2 + $0x1a0] sm:$0xff]
    %v98 = vld [vmem:[%s2 + $0x1a8] sm:$0xff]
    %v99 = vld [vmem:[%s2 + $0x1b0] sm:$0xff]
    %v100 = vld [vmem:[%s2 + $0x1b8] sm:$0xff]
    %v101 = vld [vmem:[%s2 + $0x1c0] sm:$0xff]
    %v102 = vld [vmem:[%s2 + $0x1c8] sm:$0xff]
    %v103 = vld [vmem:[%s2 + $0x1d0] sm:$0xff]
    %v104 = vld [vmem:[%s2 + $0x1d8] sm:$0xff]
    %v105 = vld [vmem:[%s2 + $0x1e0] sm:$0xff]
    %v106 = vld [vmem:[%s2 + $0x1e8] sm:$0xff]
    %v107 = vld [vmem:[%s2 + $0x1f0] sm:$0xff]
    %v108 = vld [vmem:[%s2 + $0x1f8] sm:$0xff]
    %v109 = vld [vmem:[%s2 + $0x200] sm:$0xff]
    %v110 = vld [vmem:[%s2 + $0x208] sm:$0xff]
    %v111 = vld [vmem:[%s2 + $0x210] sm:$0xff]
    %v112 = vld [vmem:[%s2 + $0x218] sm:$0xff]
    %v113 = vld [vmem:[%s2 + $0x220] sm:$0xff]
    %v114 = vld [vmem:[%s2 + $0x228] sm:$0xff]
    %v115 = vld [vmem:[%s2 + $0x230] sm:$0xff]
    %v116 = vld [vmem:[%s2 + $0x238] sm:$0xff]
    %v117 = vld [vmem:[%s2 + $0x240] sm:$0xff]
    %v118 = vld [vmem:[%s2 + $0x248] sm:$0xff]
    %v119 = vld [vmem:[%s2 + $0x250] sm:$0xff]
    %v120 = vld [vmem:[%s2 + $0x258] sm:$0xff]
    %v121 = vld [vmem:[%s2 + $0x260] sm:$0xff]
    %v122 = vld [vmem:[%s2 + $0x268] sm:$0xff]
    %v123 = vld [vmem:[%s2 + $0x270] sm:$0xff]
    %v124 = vld [vmem:[%s2 + $0x278] sm:$0xff]
    %v125 = vld [vmem:[%s2 + $0x280] sm:$0xff]
    %v126 = vld [vmem:[%s2 + $0x288] sm:$0xff]
    %v127 = vld [vmem:[%s2 + $0x290] sm:$0xff]
    %v128 = vld [vmem:[%s2 + $0x298] sm:$0xff]
    %v129 = vld [vmem:[%s2 + $0x2a0] sm:$0xff]
    %v130 = vld [vmem:[%s2 + $0x2a8] sm:$0xff]
    %v131 = vld [vmem:[%s2 + $0x2b0] sm:$0xff]
    %v132 = vld [vmem:[%s2 + $0x2b8] sm:$0xff]
    %v133 = vld [vmem:[%s2 + $0x2c0] sm:$0xff]
    %v134 = vld [vmem:[%s2 + $0x2c8] sm:$0xff]
    %v135 = vld [vmem:[%s2 + $0x2d0] sm:$0xff]
    %v136 = vld [vmem:[%s2 + $0x2d8] sm:$0xff]
    %v137 = vld [vmem:[%s2 + $0x2e0] sm:$0xff]
    %v138 = vld [vmem:[%s2 + $0x2e8] sm:$0xff]
    %v139 = vld [vmem:[%s2 + $0x2f0] sm:$0xff]
    %v140 = vld [vmem:[%s2 + $0x2f8] sm:$0xff]
    %v141 = vld [vmem:[%s2 + $0x300] sm:$0xff]
    %v142 = vld [vmem:[%s2 + $0x308] sm:$0xff]
    %v143 = vld [vmem:[%s2 + $0x310] sm:$0xff]
    %v144 = vld [vmem:[%s2 + $0x318] sm:$0xff]
    %v145 = vld [vmem:[%s2 + $0x320] sm:$0xff]
    %v146 = vld [vmem:[%s2 + $0x328] sm:$0xff]
    %v147 = vld [vmem:[%s2 + $0x330] sm:$0xff]
    %v148 = vld [vmem:[%s2 + $0x338] sm:$0xff]
    %v149 = vld [vmem:[%s2 + $0x340] sm:$0xff]
    %v150 = vld [vmem:[%s2 + $0x348] sm:$0xff]
    %v151 = vld [vmem:[%s2 + $0x350] sm:$0xff]
    %v152 = vld [vmem:[%s2 + $0x358] sm:$0xff]
    %v153 = vld [vmem:[%s2 + $0x360] sm:$0xff]
    %v154 = vld [vmem:[%s2 + $0x368] sm:$0xff]
    %v155 = vld [vmem:[%s2 + $0x370] sm:$0xff]
    %v156 = vld [vmem:[%s2 + $0x378] sm:$0xff]
    %v157 = vld [vmem:[%s2 + $0x380] sm:$0xff]
    %v158 = vld [vmem:[%s2 + $0x388] sm:$0xff]
    %v159 = vld [vmem:[%s2 + $0x390] sm:$0xff]
    %v160 = vld [vmem:[%s2 + $0x398] sm:$0xff]
    %v161 = vld [vmem:[%s2 + $0x3a0] sm:$0xff]
    %v162 = vld [vmem:[%s2 + $0x3a8] sm:$0xff]
    %v163 = vld [vmem:[%s2 + $0x3b0] sm:$0xff]
    %v164 = vld [vmem:[%s2 + $0x3b8] sm:$0xff]
    %v165 = vld [vmem:[%s2 + $0x3c0] sm:$0xff]
    %v166 = vld [vmem:[%s2 + $0x3c8] sm:$0xff]
    %v167 = vld [vmem:[%s2 + $0x3d0] sm:$0xff]
    %v168 = vld [vmem:[%s2 + $0x3d8] sm:$0xff]
    %v169 = vld [vmem:[%s2 + $0x3e0] sm:$0xff]
    %v170 = vld [vmem:[%s2 + $0x3e8] sm:$0xff]
    %v171 = vld [vmem:[%s2 + $0x3f0] sm:$0xff]
    %v172 = vld [vmem:[%s2 + $0x3f8] sm:$0xff]
    %v173 = vld [vmem:[%s4] sm:$0xf]
    %v175 = vlaneseq
    %v176 = vshrl.u32 %v175, 7
    %v177 = vsub.s32 0, %v176
    %v178 = vrot.slane %v173, %v177
    %v179 = vlaneseq
    %v180 = vshrl.u32 %v179, 7
    %v181 = vsub.s32 1, %v180
    %v182 = vrot.slane %v173, %v181
    %v183 = vlaneseq
    %v184 = vshrl.u32 %v183, 7
    %v185 = vsub.s32 2, %v184
    %v186 = vrot.slane %v173, %v185
    %v187 = vlaneseq
    %v188 = vshrl.u32 %v187, 7
    %v189 = vsub.s32 3, %v188
    %v190 = vrot.slane %v173, %v189
    %v199 = vunpack.c.l.b16 %v41
    %v200 = vunpack.c.h.b16 %v41
    %v201 = vunpack.c.l.b16 %v42
    %v202 = vunpack.c.h.b16 %v42
    %v203 = vunpack.c.l.b16 %v43
    %v204 = vunpack.c.h.b16 %v43
    %v205 = vunpack.c.l.b16 %v44
    %v206 = vunpack.c.h.b16 %v44
    %v207 = vpack.c.b16 %v203, %v199
    %v208 = vpack.c.b16 %v204, %v200
    %v209 = vpack.c.b16 %v205, %v201
    %v210 = vpack.c.b16 %v206, %v202
    %v343 = vunpack.c.l.b16 %v45
    %v344 = vunpack.c.h.b16 %v45
    %v345 = vunpack.c.l.b16 %v46
    %v346 = vunpack.c.h.b16 %v46
    %v347 = vunpack.c.l.b16 %v47
    %v348 = vunpack.c.h.b16 %v47
    %v349 = vunpack.c.l.b16 %v48
    %v350 = vunpack.c.h.b16 %v48
    %v351 = vunpack.c.l.b16 %v49
    %v352 = vunpack.c.h.b16 %v49
    %v353 = vunpack.c.l.b16 %v50
    %v354 = vunpack.c.h.b16 %v50
    %v355 = vunpack.c.l.b16 %v51
    %v356 = vunpack.c.h.b16 %v51
    %v357 = vunpack.c.l.b16 %v52
    %v358 = vunpack.c.h.b16 %v52
    %v359 = vunpack.c.l.b16 %v53
    %v360 = vunpack.c.h.b16 %v53
    %v361 = vunpack.c.l.b16 %v54
    %v362 = vunpack.c.h.b16 %v54
    %v363 = vunpack.c.l.b16 %v55
    %v364 = vunpack.c.h.b16 %v55
    %v365 = vunpack.c.l.b16 %v56
    %v366 = vunpack.c.h.b16 %v56
    %v367 = vunpack.c.l.b16 %v57
    %v368 = vunpack.c.h.b16 %v57
    %v369 = vunpack.c.l.b16 %v58
    %v370 = vunpack.c.h.b16 %v58
    %v371 = vunpack.c.l.b16 %v59
    %v372 = vunpack.c.h.b16 %v59
    %v373 = vunpack.c.l.b16 %v60
    %v374 = vunpack.c.h.b16 %v60
    %v375 = vunpack.c.l.b16 %v61
    %v376 = vunpack.c.h.b16 %v61
    %v377 = vunpack.c.l.b16 %v62
    %v378 = vunpack.c.h.b16 %v62
    %v379 = vunpack.c.l.b16 %v63
    %v380 = vunpack.c.h.b16 %v63
    %v381 = vunpack.c.l.b16 %v64
    %v382 = vunpack.c.h.b16 %v64
    %v383 = vunpack.c.l.b16 %v65
    %v384 = vunpack.c.h.b16 %v65
    %v385 = vunpack.c.l.b16 %v66
    %v386 = vunpack.c.h.b16 %v66
    %v387 = vunpack.c.l.b16 %v67
    %v388 = vunpack.c.h.b16 %v67
    %v389 = vunpack.c.l.b16 %v68
    %v390 = vunpack.c.h.b16 %v68
    %v391 = vunpack.c.l.b16 %v69
    %v392 = vunpack.c.h.b16 %v69
    %v393 = vunpack.c.l.b16 %v70
    %v394 = vunpack.c.h.b16 %v70
    %v395 = vunpack.c.l.b16 %v71
    %v396 = vunpack.c.h.b16 %v71
    %v397 = vunpack.c.l.b16 %v72
    %v398 = vunpack.c.h.b16 %v72
    %v399 = vunpack.c.l.b16 %v73
    %v400 = vunpack.c.h.b16 %v73
    %v401 = vunpack.c.l.b16 %v74
    %v402 = vunpack.c.h.b16 %v74
    %v403 = vunpack.c.l.b16 %v75
    %v404 = vunpack.c.h.b16 %v75
    %v405 = vunpack.c.l.b16 %v76
    %v406 = vunpack.c.h.b16 %v76
    %v407 = vunpack.c.l.b16 %v77
    %v408 = vunpack.c.h.b16 %v77
    %v409 = vunpack.c.l.b16 %v78
    %v410 = vunpack.c.h.b16 %v78
    %v411 = vunpack.c.l.b16 %v79
    %v412 = vunpack.c.h.b16 %v79
    %v413 = vunpack.c.l.b16 %v80
    %v414 = vunpack.c.h.b16 %v80
    %v415 = vunpack.c.l.b16 %v81
    %v416 = vunpack.c.h.b16 %v81
    %v417 = vunpack.c.l.b16 %v82
    %v418 = vunpack.c.h.b16 %v82
    %v419 = vunpack.c.l.b16 %v83
    %v420 = vunpack.c.h.b16 %v83
    %v421 = vunpack.c.l.b16 %v84
    %v422 = vunpack.c.h.b16 %v84
    %v423 = vunpack.c.l.b16 %v85
    %v424 = vunpack.c.h.b16 %v85
    %v425 = vunpack.c.l.b16 %v86
    %v426 = vunpack.c.h.b16 %v86
    %v427 = vunpack.c.l.b16 %v87
    %v428 = vunpack.c.h.b16 %v87
    %v429 = vunpack.c.l.b16 %v88
    %v430 = vunpack.c.h.b16 %v88
    %v431 = vunpack.c.l.b16 %v89
    %v432 = vunpack.c.h.b16 %v89
    %v433 = vunpack.c.l.b16 %v90
    %v434 = vunpack.c.h.b16 %v90
    %v435 = vunpack.c.l.b16 %v91
    %v436 = vunpack.c.h.b16 %v91
    %v437 = vunpack.c.l.b16 %v92
    %v438 = vunpack.c.h.b16 %v92
    %v439 = vunpack.c.l.b16 %v93
    %v440 = vunpack.c.h.b16 %v93
    %v441 = vunpack.c.l.b16 %v94
    %v442 = vunpack.c.h.b16 %v94
    %v443 = vunpack.c.l.b16 %v95
    %v444 = vunpack.c.h.b16 %v95
    %v445 = vunpack.c.l.b16 %v96
    %v446 = vunpack.c.h.b16 %v96
    %v447 = vunpack.c.l.b16 %v97
    %v448 = vunpack.c.h.b16 %v97
    %v449 = vunpack.c.l.b16 %v98
    %v450 = vunpack.c.h.b16 %v98
    %v451 = vunpack.c.l.b16 %v99
    %v452 = vunpack.c.h.b16 %v99
    %v453 = vunpack.c.l.b16 %v100
    %v454 = vunpack.c.h.b16 %v100
    %v455 = vunpack.c.l.b16 %v101
    %v456 = vunpack.c.h.b16 %v101
    %v457 = vunpack.c.l.b16 %v102
    %v458 = vunpack.c.h.b16 %v102
    %v459 = vunpack.c.l.b16 %v103
    %v460 = vunpack.c.h.b16 %v103
    %v461 = vunpack.c.l.b16 %v104
    %v462 = vunpack.c.h.b16 %v104
    %v463 = vunpack.c.l.b16 %v105
    %v464 = vunpack.c.h.b16 %v105
    %v465 = vunpack.c.l.b16 %v106
    %v466 = vunpack.c.h.b16 %v106
    %v467 = vunpack.c.l.b16 %v107
    %v468 = vunpack.c.h.b16 %v107
    %v469 = vunpack.c.l.b16 %v108
    %v470 = vunpack.c.h.b16 %v108
    %v471 = vunpack.c.l.b16 %v109
    %v472 = vunpack.c.h.b16 %v109
    %v473 = vunpack.c.l.b16 %v110
    %v474 = vunpack.c.h.b16 %v110
    %v475 = vunpack.c.l.b16 %v111
    %v476 = vunpack.c.h.b16 %v111
    %v477 = vunpack.c.l.b16 %v112
    %v478 = vunpack.c.h.b16 %v112
    %v479 = vunpack.c.l.b16 %v113
    %v480 = vunpack.c.h.b16 %v113
    %v481 = vunpack.c.l.b16 %v114
    %v482 = vunpack.c.h.b16 %v114
    %v483 = vunpack.c.l.b16 %v115
    %v484 = vunpack.c.h.b16 %v115
    %v485 = vunpack.c.l.b16 %v116
    %v486 = vunpack.c.h.b16 %v116
    %v487 = vunpack.c.l.b16 %v117
    %v488 = vunpack.c.h.b16 %v117
    %v489 = vunpack.c.l.b16 %v118
    %v490 = vunpack.c.h.b16 %v118
    %v491 = vunpack.c.l.b16 %v119
    %v492 = vunpack.c.h.b16 %v119
    %v493 = vunpack.c.l.b16 %v120
    %v494 = vunpack.c.h.b16 %v120
    %v495 = vunpack.c.l.b16 %v121
    %v496 = vunpack.c.h.b16 %v121
    %v497 = vunpack.c.l.b16 %v122
    %v498 = vunpack.c.h.b16 %v122
    %v499 = vunpack.c.l.b16 %v123
    %v500 = vunpack.c.h.b16 %v123
    %v501 = vunpack.c.l.b16 %v124
    %v502 = vunpack.c.h.b16 %v124
    %v503 = vunpack.c.l.b16 %v125
    %v504 = vunpack.c.h.b16 %v125
    %v505 = vunpack.c.l.b16 %v126
    %v506 = vunpack.c.h.b16 %v126
    %v507 = vunpack.c.l.b16 %v127
    %v508 = vunpack.c.h.b16 %v127
    %v509 = vunpack.c.l.b16 %v128
    %v510 = vunpack.c.h.b16 %v128
    %v511 = vunpack.c.l.b16 %v129
    %v512 = vunpack.c.h.b16 %v129
    %v513 = vunpack.c.l.b16 %v130
    %v514 = vunpack.c.h.b16 %v130
    %v515 = vunpack.c.l.b16 %v131
    %v516 = vunpack.c.h.b16 %v131
    %v517 = vunpack.c.l.b16 %v132
    %v518 = vunpack.c.h.b16 %v132
    %v519 = vunpack.c.l.b16 %v133
    %v520 = vunpack.c.h.b16 %v133
    %v521 = vunpack.c.l.b16 %v134
    %v522 = vunpack.c.h.b16 %v134
    %v523 = vunpack.c.l.b16 %v135
    %v524 = vunpack.c.h.b16 %v135
    %v525 = vunpack.c.l.b16 %v136
    %v526 = vunpack.c.h.b16 %v136
    %v527 = vunpack.c.l.b16 %v137
    %v528 = vunpack.c.h.b16 %v137
    %v529 = vunpack.c.l.b16 %v138
    %v530 = vunpack.c.h.b16 %v138
    %v531 = vunpack.c.l.b16 %v139
    %v532 = vunpack.c.h.b16 %v139
    %v533 = vunpack.c.l.b16 %v140
    %v534 = vunpack.c.h.b16 %v140
    %v535 = vunpack.c.l.b16 %v141
    %v536 = vunpack.c.h.b16 %v141
    %v537 = vunpack.c.l.b16 %v142
    %v538 = vunpack.c.h.b16 %v142
    %v539 = vunpack.c.l.b16 %v143
    %v540 = vunpack.c.h.b16 %v143
    %v541 = vunpack.c.l.b16 %v144
    %v542 = vunpack.c.h.b16 %v144
    %v543 = vunpack.c.l.b16 %v145
    %v544 = vunpack.c.h.b16 %v145
    %v545 = vunpack.c.l.b16 %v146
    %v546 = vunpack.c.h.b16 %v146
    %v547 = vunpack.c.l.b16 %v147
    %v548 = vunpack.c.h.b16 %v147
    %v549 = vunpack.c.l.b16 %v148
    %v550 = vunpack.c.h.b16 %v148
    %v551 = vunpack.c.l.b16 %v149
    %v552 = vunpack.c.h.b16 %v149
    %v553 = vunpack.c.l.b16 %v150
    %v554 = vunpack.c.h.b16 %v150
    %v555 = vunpack.c.l.b16 %v151
    %v556 = vunpack.c.h.b16 %v151
    %v557 = vunpack.c.l.b16 %v152
    %v558 = vunpack.c.h.b16 %v152
    %v559 = vunpack.c.l.b16 %v153
    %v560 = vunpack.c.h.b16 %v153
    %v561 = vunpack.c.l.b16 %v154
    %v562 = vunpack.c.h.b16 %v154
    %v563 = vunpack.c.l.b16 %v155
    %v564 = vunpack.c.h.b16 %v155
    %v565 = vunpack.c.l.b16 %v156
    %v566 = vunpack.c.h.b16 %v156
    %v567 = vunpack.c.l.b16 %v157
    %v568 = vunpack.c.h.b16 %v157
    %v569 = vunpack.c.l.b16 %v158
    %v570 = vunpack.c.h.b16 %v158
    %v571 = vunpack.c.l.b16 %v159
    %v572 = vunpack.c.h.b16 %v159
    %v573 = vunpack.c.l.b16 %v160
    %v574 = vunpack.c.h.b16 %v160
    %v575 = vunpack.c.l.b16 %v161
    %v576 = vunpack.c.h.b16 %v161
    %v577 = vunpack.c.l.b16 %v162
    %v578 = vunpack.c.h.b16 %v162
    %v579 = vunpack.c.l.b16 %v163
    %v580 = vunpack.c.h.b16 %v163
    %v581 = vunpack.c.l.b16 %v164
    %v582 = vunpack.c.h.b16 %v164
    %v583 = vunpack.c.l.b16 %v165
    %v584 = vunpack.c.h.b16 %v165
    %v585 = vunpack.c.l.b16 %v166
    %v586 = vunpack.c.h.b16 %v166
    %v587 = vunpack.c.l.b16 %v167
    %v588 = vunpack.c.h.b16 %v167
    %v589 = vunpack.c.l.b16 %v168
    %v590 = vunpack.c.h.b16 %v168
    %v591 = vunpack.c.l.b16 %v169
    %v592 = vunpack.c.h.b16 %v169
    %v593 = vunpack.c.l.b16 %v170
    %v594 = vunpack.c.h.b16 %v170
    %v595 = vunpack.c.l.b16 %v171
    %v596 = vunpack.c.h.b16 %v171
    %v597 = vunpack.c.l.b16 %v172
    %v598 = vunpack.c.h.b16 %v172
    %v599 = vpack.c.b16 %v347, %v343
    %v600 = vpack.c.b16 %v348, %v344
    %v601 = vpack.c.b16 %v349, %v345
    %v602 = vpack.c.b16 %v350, %v346
    %v603 = vpack.c.b16 %v355, %v351
    %v604 = vpack.c.b16 %v356, %v352
    %v605 = vpack.c.b16 %v357, %v353
    %v606 = vpack.c.b16 %v358, %v354
    %v607 = vpack.c.b16 %v363, %v359
    %v608 = vpack.c.b16 %v364, %v360
    %v609 = vpack.c.b16 %v365, %v361
    %v610 = vpack.c.b16 %v366, %v362
    %v611 = vpack.c.b16 %v371, %v367
    %v612 = vpack.c.b16 %v372, %v368
    %v613 = vpack.c.b16 %v373, %v369
    %v614 = vpack.c.b16 %v374, %v370
    %v615 = vpack.c.b16 %v379, %v375
    %v616 = vpack.c.b16 %v380, %v376
    %v617 = vpack.c.b16 %v381, %v377
    %v618 = vpack.c.b16 %v382, %v378
    %v619 = vpack.c.b16 %v387, %v383
    %v620 = vpack.c.b16 %v388, %v384
    %v621 = vpack.c.b16 %v389, %v385
    %v622 = vpack.c.b16 %v390, %v386
    %v623 = vpack.c.b16 %v395, %v391
    %v624 = vpack.c.b16 %v396, %v392
    %v625 = vpack.c.b16 %v397, %v393
    %v626 = vpack.c.b16 %v398, %v394
    %v627 = vpack.c.b16 %v403, %v399
    %v628 = vpack.c.b16 %v404, %v400
    %v629 = vpack.c.b16 %v405, %v401
    %v630 = vpack.c.b16 %v406, %v402
    %v631 = vpack.c.b16 %v411, %v407
    %v632 = vpack.c.b16 %v412, %v408
    %v633 = vpack.c.b16 %v413, %v409
    %v634 = vpack.c.b16 %v414, %v410
    %v635 = vpack.c.b16 %v419, %v415
    %v636 = vpack.c.b16 %v420, %v416
    %v637 = vpack.c.b16 %v421, %v417
    %v638 = vpack.c.b16 %v422, %v418
    %v639 = vpack.c.b16 %v427, %v423
    %v640 = vpack.c.b16 %v428, %v424
    %v641 = vpack.c.b16 %v429, %v425
    %v642 = vpack.c.b16 %v430, %v426
    %v643 = vpack.c.b16 %v435, %v431
    %v644 = vpack.c.b16 %v436, %v432
    %v645 = vpack.c.b16 %v437, %v433
    %v646 = vpack.c.b16 %v438, %v434
    %v647 = vpack.c.b16 %v443, %v439
    %v648 = vpack.c.b16 %v444, %v440
    %v649 = vpack.c.b16 %v445, %v441
    %v650 = vpack.c.b16 %v446, %v442
    %v651 = vpack.c.b16 %v451, %v447
    %v652 = vpack.c.b16 %v452, %v448
    %v653 = vpack.c.b16 %v453, %v449
    %v654 = vpack.c.b16 %v454, %v450
    %v655 = vpack.c.b16 %v459, %v455
    %v656 = vpack.c.b16 %v460, %v456
    %v657 = vpack.c.b16 %v461, %v457
    %v658 = vpack.c.b16 %v462, %v458
    %v659 = vpack.c.b16 %v467, %v463
    %v660 = vpack.c.b16 %v468, %v464
    %v661 = vpack.c.b16 %v469, %v465
    %v662 = vpack.c.b16 %v470, %v466
    %v663 = vpack.c.b16 %v475, %v471
    %v664 = vpack.c.b16 %v476, %v472
    %v665 = vpack.c.b16 %v477, %v473
    %v666 = vpack.c.b16 %v478, %v474
    %v667 = vpack.c.b16 %v483, %v479
    %v668 = vpack.c.b16 %v484, %v480
    %v669 = vpack.c.b16 %v485, %v481
    %v670 = vpack.c.b16 %v486, %v482
    %v671 = vpack.c.b16 %v491, %v487
    %v672 = vpack.c.b16 %v492, %v488
    %v673 = vpack.c.b16 %v493, %v489
    %v674 = vpack.c.b16 %v494, %v490
    %v675 = vpack.c.b16 %v499, %v495
    %v676 = vpack.c.b16 %v500, %v496
    %v677 = vpack.c.b16 %v501, %v497
    %v678 = vpack.c.b16 %v502, %v498
    %v679 = vpack.c.b16 %v507, %v503
    %v680 = vpack.c.b16 %v508, %v504
    %v681 = vpack.c.b16 %v509, %v505
    %v682 = vpack.c.b16 %v510, %v506
    %v683 = vpack.c.b16 %v515, %v511
    %v684 = vpack.c.b16 %v516, %v512
    %v685 = vpack.c.b16 %v517, %v513
    %v686 = vpack.c.b16 %v518, %v514
    %v687 = vpack.c.b16 %v523, %v519
    %v688 = vpack.c.b16 %v524, %v520
    %v689 = vpack.c.b16 %v525, %v521
    %v690 = vpack.c.b16 %v526, %v522
    %v691 = vpack.c.b16 %v531, %v527
    %v692 = vpack.c.b16 %v532, %v528
    %v693 = vpack.c.b16 %v533, %v529
    %v694 = vpack.c.b16 %v534, %v530
    %v695 = vpack.c.b16 %v539, %v535
    %v696 = vpack.c.b16 %v540, %v536
    %v697 = vpack.c.b16 %v541, %v537
    %v698 = vpack.c.b16 %v542, %v538
    %v699 = vpack.c.b16 %v547, %v543
    %v700 = vpack.c.b16 %v548, %v544
    %v701 = vpack.c.b16 %v549, %v545
    %v702 = vpack.c.b16 %v550, %v546
    %v703 = vpack.c.b16 %v555, %v551
    %v704 = vpack.c.b16 %v556, %v552
    %v705 = vpack.c.b16 %v557, %v553
    %v706 = vpack.c.b16 %v558, %v554
    %v707 = vpack.c.b16 %v563, %v559
    %v708 = vpack.c.b16 %v564, %v560
    %v709 = vpack.c.b16 %v565, %v561
    %v710 = vpack.c.b16 %v566, %v562
    %v711 = vpack.c.b16 %v571, %v567
    %v712 = vpack.c.b16 %v572, %v568
    %v713 = vpack.c.b16 %v573, %v569
    %v714 = vpack.c.b16 %v574, %v570
    %v715 = vpack.c.b16 %v579, %v575
    %v716 = vpack.c.b16 %v580, %v576
    %v717 = vpack.c.b16 %v581, %v577
    %v718 = vpack.c.b16 %v582, %v578
    %v719 = vpack.c.b16 %v587, %v583
    %v720 = vpack.c.b16 %v588, %v584
    %v721 = vpack.c.b16 %v589, %v585
    %v722 = vpack.c.b16 %v590, %v586
    %v723 = vpack.c.b16 %v595, %v591
    %v724 = vpack.c.b16 %v596, %v592
    %v725 = vpack.c.b16 %v597, %v593
    %v726 = vpack.c.b16 %v598, %v594
    %855 = vmatprep.subr.bf16.mxu0 %v628
    %856 = vmatpush1.bf16.msra.mxu0 %v627
    %857 = vmatprep.subr.bf16.mxu0 %v624
    %858 = vmatpush1.bf16.msra.mxu0 %v623
    %859 = vmatprep.subr.bf16.mxu0 %v620
    %860 = vmatpush1.bf16.msra.mxu0 %v619
    %861 = vmatprep.subr.bf16.mxu0 %v616
    %862 = vmatpush1.bf16.msra.mxu0 %v615
    %863 = vmatprep.subr.bf16.mxu0 %v612
    %864 = vmatpush1.bf16.msra.mxu0 %v611
    %865 = vmatprep.subr.bf16.mxu0 %v608
    %866 = vmatpush1.bf16.msra.mxu0 %v607
    %867 = vmatprep.subr.bf16.mxu0 %v604
    %868 = vmatpush1.bf16.msra.mxu0 %v603
    %869 = vmatprep.subr.bf16.mxu0 %v600
    %870 = vmatpush1.bf16.msra.mxu0 %v599
    %871 = vmatprep.subr.bf16.mxu0 %v660
    %872 = vmatpush2.bf16.msra.mxu0 %v659
    %873 = vmatprep.subr.bf16.mxu0 %v656
    %874 = vmatpush2.bf16.msra.mxu0 %v655
    %875 = vmatprep.subr.bf16.mxu0 %v652
    %876 = vmatpush2.bf16.msra.mxu0 %v651
    %877 = vmatprep.subr.bf16.mxu0 %v648
    %878 = vmatpush2.bf16.msra.mxu0 %v647
    %879 = vmatprep.subr.bf16.mxu0 %v644
    %880 = vmatpush2.bf16.msra.mxu0 %v643
    %881 = vmatprep.subr.bf16.mxu0 %v640
    %882 = vmatpush2.bf16.msra.mxu0 %v639
    %883 = vmatprep.subr.bf16.mxu0 %v636
    %884 = vmatpush2.bf16.msra.mxu0 %v635
    %885 = vmatprep.subr.bf16.mxu0 %v632
    %886 = vmatpush2.bf16.msra.mxu0 %v631
    %887 = vmatprep.mubr.bf16.mxu0 %v208
    %888 = vmatmul.mubr.bf16.gmra.mxu0 %v207
    %v889 = vpop.f32.mrf.mxu0
    %v890 = vadd.f32 %v178, %v889
    %v891 = vpop.f32.mrf.mxu0
    %v892 = vadd.f32 %v182, %v891
    %v893 = vpop.f32.mrf.mxu0
    %v894 = vadd.f32 %v178, %v893
    %v895 = vpop.f32.mrf.mxu0
    %v896 = vadd.f32 %v182, %v895
    %897 = vdwg.mxu0
    %898 = vmatprep.subr.bf16.mxu0 %v692
    %899 = vmatpush1.bf16.msra.mxu0 %v691
    %900 = vmatprep.subr.bf16.mxu0 %v688
    %901 = vmatpush1.bf16.msra.mxu0 %v687
    %902 = vmatprep.subr.bf16.mxu0 %v684
    %903 = vmatpush1.bf16.msra.mxu0 %v683
    %904 = vmatprep.subr.bf16.mxu0 %v680
    %905 = vmatpush1.bf16.msra.mxu0 %v679
    %906 = vmatprep.subr.bf16.mxu0 %v676
    %907 = vmatpush1.bf16.msra.mxu0 %v675
    %908 = vmatprep.subr.bf16.mxu0 %v672
    %909 = vmatpush1.bf16.msra.mxu0 %v671
    %910 = vmatprep.subr.bf16.mxu0 %v668
    %911 = vmatpush1.bf16.msra.mxu0 %v667
    %912 = vmatprep.subr.bf16.mxu0 %v664
    %913 = vmatpush1.bf16.msra.mxu0 %v663
    %914 = vmatprep.subr.bf16.mxu0 %v724
    %915 = vmatpush2.bf16.msra.mxu0 %v723
    %916 = vmatprep.subr.bf16.mxu0 %v720
    %917 = vmatpush2.bf16.msra.mxu0 %v719
    %918 = vmatprep.subr.bf16.mxu0 %v716
    %919 = vmatpush2.bf16.msra.mxu0 %v715
    %920 = vmatprep.subr.bf16.mxu0 %v712
    %921 = vmatpush2.bf16.msra.mxu0 %v711
    %922 = vmatprep.subr.bf16.mxu0 %v708
    %923 = vmatpush2.bf16.msra.mxu0 %v707
    %924 = vmatprep.subr.bf16.mxu0 %v704
    %925 = vmatpush2.bf16.msra.mxu0 %v703
    %926 = vmatprep.subr.bf16.mxu0 %v700
    %927 = vmatpush2.bf16.msra.mxu0 %v699
    %928 = vmatprep.subr.bf16.mxu0 %v696
    %929 = vmatpush2.bf16.msra.mxu0 %v695
    %930 = vmatprep.mubr.bf16.mxu0 %v210
    %931 = vmatmul.mubr.bf16.gmra.mxu0 %v209
    %v932 = vpop.f32.mrf.mxu0
    %v933 = vadd.f32 %v890, %v932
    %v934 = vpop.f32.mrf.mxu0
    %v935 = vadd.f32 %v892, %v934
    %v936 = vpop.f32.mrf.mxu0
    %v937 = vadd.f32 %v894, %v936
    %v938 = vpop.f32.mrf.mxu0
    %v939 = vadd.f32 %v896, %v938
    %940 = vdwg.mxu0
    %941 = vmatprep.subr.bf16.mxu0 %v630
    %942 = vmatpush1.bf16.msra.mxu0 %v629
    %943 = vmatprep.subr.bf16.mxu0 %v626
    %944 = vmatpush1.bf16.msra.mxu0 %v625
    %945 = vmatprep.subr.bf16.mxu0 %v622
    %946 = vmatpush1.bf16.msra.mxu0 %v621
    %947 = vmatprep.subr.bf16.mxu0 %v618
    %948 = vmatpush1.bf16.msra.mxu0 %v617
    %949 = vmatprep.subr.bf16.mxu0 %v614
    %950 = vmatpush1.bf16.msra.mxu0 %v613
    %951 = vmatprep.subr.bf16.mxu0 %v610
    %952 = vmatpush1.bf16.msra.mxu0 %v609
    %953 = vmatprep.subr.bf16.mxu0 %v606
    %954 = vmatpush1.bf16.msra.mxu0 %v605
    %955 = vmatprep.subr.bf16.mxu0 %v602
    %956 = vmatpush1.bf16.msra.mxu0 %v601
    %957 = vmatprep.subr.bf16.mxu0 %v662
    %958 = vmatpush2.bf16.msra.mxu0 %v661
    %959 = vmatprep.subr.bf16.mxu0 %v658
    %960 = vmatpush2.bf16.msra.mxu0 %v657
    %961 = vmatprep.subr.bf16.mxu0 %v654
    %962 = vmatpush2.bf16.msra.mxu0 %v653
    %963 = vmatprep.subr.bf16.mxu0 %v650
    %964 = vmatpush2.bf16.msra.mxu0 %v649
    %965 = vmatprep.subr.bf16.mxu0 %v646
    %966 = vmatpush2.bf16.msra.mxu0 %v645
    %967 = vmatprep.subr.bf16.mxu0 %v642
    %968 = vmatpush2.bf16.msra.mxu0 %v641
    %969 = vmatprep.subr.bf16.mxu0 %v638
    %970 = vmatpush2.bf16.msra.mxu0 %v637
    %971 = vmatprep.subr.bf16.mxu0 %v634
    %972 = vmatpush2.bf16.msra.mxu0 %v633
    %973 = vmatprep.mubr.bf16.mxu0 %v208
    %974 = vmatmul.mubr.bf16.gmra.mxu0 %v207
    %v975 = vpop.f32.mrf.mxu0
    %v976 = vadd.f32 %v186, %v975
    %v977 = vpop.f32.mrf.mxu0
    %v978 = vadd.f32 %v190, %v977
    %v979 = vpop.f32.mrf.mxu0
    %v980 = vadd.f32 %v186, %v979
    %v981 = vpop.f32.mrf.mxu0
    %v982 = vadd.f32 %v190, %v981
    %983 = vdwg.mxu0
    %984 = vmatprep.subr.bf16.mxu0 %v694
    %985 = vmatpush1.bf16.msra.mxu0 %v693
    %986 = vmatprep.subr.bf16.mxu0 %v690
    %987 = vmatpush1.bf16.msra.mxu0 %v689
    %988 = vmatprep.subr.bf16.mxu0 %v686
    %989 = vmatpush1.bf16.msra.mxu0 %v685
    %990 = vmatprep.subr.bf16.mxu0 %v682
    %991 = vmatpush1.bf16.msra.mxu0 %v681
    %992 = vmatprep.subr.bf16.mxu0 %v678
    %993 = vmatpush1.bf16.msra.mxu0 %v677
    %994 = vmatprep.subr.bf16.mxu0 %v674
    %995 = vmatpush1.bf16.msra.mxu0 %v673
    %996 = vmatprep.subr.bf16.mxu0 %v670
    %997 = vmatpush1.bf16.msra.mxu0 %v669
    %998 = vmatprep.subr.bf16.mxu0 %v666
    %999 = vmatpush1.bf16.msra.mxu0 %v665
    %1000 = vmatprep.subr.bf16.mxu0 %v726
    %1001 = vmatpush2.bf16.msra.mxu0 %v725
    %1002 = vmatprep.subr.bf16.mxu0 %v722
    %1003 = vmatpush2.bf16.msra.mxu0 %v721
    %1004 = vmatprep.subr.bf16.mxu0 %v718
    %1005 = vmatpush2.bf16.msra.mxu0 %v717
    %1006 = vmatprep.subr.bf16.mxu0 %v714
    %1007 = vmatpush2.bf16.msra.mxu0 %v713
    %1008 = vmatprep.subr.bf16.mxu0 %v710
    %1009 = vmatpush2.bf16.msra.mxu0 %v709
    %1010 = vmatprep.subr.bf16.mxu0 %v706
    %1011 = vmatpush2.bf16.msra.mxu0 %v705
    %1012 = vmatprep.subr.bf16.mxu0 %v702
    %1013 = vmatpush2.bf16.msra.mxu0 %v701
    %1014 = vmatprep.subr.bf16.mxu0 %v698
    %1015 = vmatpush2.bf16.msra.mxu0 %v697
    %1016 = vmatprep.mubr.bf16.mxu0 %v210
    %1017 = vmatmul.mubr.bf16.gmra.mxu0 %v209
    %v1018 = vpop.f32.mrf.mxu0
    %v1019 = vadd.f32 %v976, %v1018
    %v1020 = vpop.f32.mrf.mxu0
    %v1021 = vadd.f32 %v978, %v1020
    %v1022 = vpop.f32.mrf.mxu0
    %v1023 = vadd.f32 %v980, %v1022
    %v1024 = vpop.f32.mrf.mxu0
    %v1025 = vadd.f32 %v982, %v1024
    %1026 = vdwg.mxu0
    %v1027 = vld [vmem:[%s1] sm:$0xff]
    %v1028 = vld [vmem:[%s1 + $0x8] sm:$0xff]
    %v1029 = vld [vmem:[%s1 + $0x10] sm:$0xff]
    %v1030 = vld [vmem:[%s1 + $0x18] sm:$0xff]
    %v1031 = vld [vmem:[#allocation2] sm:$0xff]
    %v1032 = vld [vmem:[#allocation2 + $0x8] sm:$0xff]
    %v1033 = vld [vmem:[#allocation2 + $0x10] sm:$0xff]
    %v1034 = vld [vmem:[#allocation2 + $0x18] sm:$0xff]
    %v1035 = vld [vmem:[#allocation2 + $0x20] sm:$0xff]
    %v1036 = vld [vmem:[#allocation2 + $0x28] sm:$0xff]
    %v1037 = vld [vmem:[#allocation2 + $0x30] sm:$0xff]
    %v1038 = vld [vmem:[#allocation2 + $0x38] sm:$0xff]
    %v1039 = vld [vmem:[#allocation2 + $0x40] sm:$0xff]
    %v1040 = vld [vmem:[#allocation2 + $0x48] sm:$0xff]
    %v1041 = vld [vmem:[#allocation2 + $0x50] sm:$0xff]
    %v1042 = vld [vmem:[#allocation2 + $0x58] sm:$0xff]
    %v1043 = vld [vmem:[#allocation2 + $0x60] sm:$0xff]
    %v1044 = vld [vmem:[#allocation2 + $0x68] sm:$0xff]
    %v1045 = vld [vmem:[#allocation2 + $0x70] sm:$0xff]
    %v1046 = vld [vmem:[#allocation2 + $0x78] sm:$0xff]
    %v1047 = vld [vmem:[#allocation2 + $0x80] sm:$0xff]
    %v1048 = vld [vmem:[#allocation2 + $0x88] sm:$0xff]
    %v1049 = vld [vmem:[#allocation2 + $0x90] sm:$0xff]
    %v1050 = vld [vmem:[#allocation2 + $0x98] sm:$0xff]
    %v1051 = vld [vmem:[#allocation2 + $0xa0] sm:$0xff]
    %v1052 = vld [vmem:[#allocation2 + $0xa8] sm:$0xff]
    %v1053 = vld [vmem:[#allocation2 + $0xb0] sm:$0xff]
    %v1054 = vld [vmem:[#allocation2 + $0xb8] sm:$0xff]
    %v1055 = vld [vmem:[#allocation2 + $0xc0] sm:$0xff]
    %v1056 = vld [vmem:[#allocation2 + $0xc8] sm:$0xff]
    %v1057 = vld [vmem:[#allocation2 + $0xd0] sm:$0xff]
    %v1058 = vld [vmem:[#allocation2 + $0xd8] sm:$0xff]
    %v1059 = vld [vmem:[#allocation2 + $0xe0] sm:$0xff]
    %v1060 = vld [vmem:[#allocation2 + $0xe8] sm:$0xff]
    %v1061 = vld [vmem:[#allocation2 + $0xf0] sm:$0xff]
    %v1062 = vld [vmem:[#allocation2 + $0xf8] sm:$0xff]
    %v1063 = vld [vmem:[#allocation2 + $0x100] sm:$0xff]
    %v1064 = vld [vmem:[#allocation2 + $0x108] sm:$0xff]
    %v1065 = vld [vmem:[#allocation2 + $0x110] sm:$0xff]
    %v1066 = vld [vmem:[#allocation2 + $0x118] sm:$0xff]
    %v1067 = vld [vmem:[#allocation2 + $0x120] sm:$0xff]
    %v1068 = vld [vmem:[#allocation2 + $0x128] sm:$0xff]
    %v1069 = vld [vmem:[#allocation2 + $0x130] sm:$0xff]
    %v1070 = vld [vmem:[#allocation2 + $0x138] sm:$0xff]
    %v1071 = vld [vmem:[#allocation2 + $0x140] sm:$0xff]
    %v1072 = vld [vmem:[#allocation2 + $0x148] sm:$0xff]
    %v1073 = vld [vmem:[#allocation2 + $0x150] sm:$0xff]
    %v1074 = vld [vmem:[#allocation2 + $0x158] sm:$0xff]
    %v1075 = vld [vmem:[#allocation2 + $0x160] sm:$0xff]
    %v1076 = vld [vmem:[#allocation2 + $0x168] sm:$0xff]
    %v1077 = vld [vmem:[#allocation2 + $0x170] sm:$0xff]
    %v1078 = vld [vmem:[#allocation2 + $0x178] sm:$0xff]
    %v1079 = vld [vmem:[#allocation2 + $0x180] sm:$0xff]
    %v1080 = vld [vmem:[#allocation2 + $0x188] sm:$0xff]
    %v1081 = vld [vmem:[#allocation2 + $0x190] sm:$0xff]
    %v1082 = vld [vmem:[#allocation2 + $0x198] sm:$0xff]
    %v1083 = vld [vmem:[#allocation2 + $0x1a0] sm:$0xff]
    %v1084 = vld [vmem:[#allocation2 + $0x1a8] sm:$0xff]
    %v1085 = vld [vmem:[#allocation2 + $0x1b0] sm:$0xff]
    %v1086 = vld [vmem:[#allocation2 + $0x1b8] sm:$0xff]
    %v1087 = vld [vmem:[#allocation2 + $0x1c0] sm:$0xff]
    %v1088 = vld [vmem:[#allocation2 + $0x1c8] sm:$0xff]
    %v1089 = vld [vmem:[#allocation2 + $0x1d0] sm:$0xff]
    %v1090 = vld [vmem:[#allocation2 + $0x1d8] sm:$0xff]
    %v1091 = vld [vmem:[#allocation2 + $0x1e0] sm:$0xff]
    %v1092 = vld [vmem:[#allocation2 + $0x1e8] sm:$0xff]
    %v1093 = vld [vmem:[#allocation2 + $0x1f0] sm:$0xff]
    %v1094 = vld [vmem:[#allocation2 + $0x1f8] sm:$0xff]
    %v1095 = vld [vmem:[#allocation2 + $0x200] sm:$0xff]
    %v1096 = vld [vmem:[#allocation2 + $0x208] sm:$0xff]
    %v1097 = vld [vmem:[#allocation2 + $0x210] sm:$0xff]
    %v1098 = vld [vmem:[#allocation2 + $0x218] sm:$0xff]
    %v1099 = vld [vmem:[#allocation2 + $0x220] sm:$0xff]
    %v1100 = vld [vmem:[#allocation2 + $0x228] sm:$0xff]
    %v1101 = vld [vmem:[#allocation2 + $0x230] sm:$0xff]
    %v1102 = vld [vmem:[#allocation2 + $0x238] sm:$0xff]
    %v1103 = vld [vmem:[#allocation2 + $0x240] sm:$0xff]
    %v1104 = vld [vmem:[#allocation2 + $0x248] sm:$0xff]
    %v1105 = vld [vmem:[#allocation2 + $0x250] sm:$0xff]
    %v1106 = vld [vmem:[#allocation2 + $0x258] sm:$0xff]
    %v1107 = vld [vmem:[#allocation2 + $0x260] sm:$0xff]
    %v1108 = vld [vmem:[#allocation2 + $0x268] sm:$0xff]
    %v1109 = vld [vmem:[#allocation2 + $0x270] sm:$0xff]
    %v1110 = vld [vmem:[#allocation2 + $0x278] sm:$0xff]
    %v1111 = vld [vmem:[#allocation2 + $0x280] sm:$0xff]
    %v1112 = vld [vmem:[#allocation2 + $0x288] sm:$0xff]
    %v1113 = vld [vmem:[#allocation2 + $0x290] sm:$0xff]
    %v1114 = vld [vmem:[#allocation2 + $0x298] sm:$0xff]
    %v1115 = vld [vmem:[#allocation2 + $0x2a0] sm:$0xff]
    %v1116 = vld [vmem:[#allocation2 + $0x2a8] sm:$0xff]
    %v1117 = vld [vmem:[#allocation2 + $0x2b0] sm:$0xff]
    %v1118 = vld [vmem:[#allocation2 + $0x2b8] sm:$0xff]
    %v1119 = vld [vmem:[#allocation2 + $0x2c0] sm:$0xff]
    %v1120 = vld [vmem:[#allocation2 + $0x2c8] sm:$0xff]
    %v1121 = vld [vmem:[#allocation2 + $0x2d0] sm:$0xff]
    %v1122 = vld [vmem:[#allocation2 + $0x2d8] sm:$0xff]
    %v1123 = vld [vmem:[#allocation2 + $0x2e0] sm:$0xff]
    %v1124 = vld [vmem:[#allocation2 + $0x2e8] sm:$0xff]
    %v1125 = vld [vmem:[#allocation2 + $0x2f0] sm:$0xff]
    %v1126 = vld [vmem:[#allocation2 + $0x2f8] sm:$0xff]
    %v1127 = vld [vmem:[#allocation2 + $0x300] sm:$0xff]
    %v1128 = vld [vmem:[#allocation2 + $0x308] sm:$0xff]
    %v1129 = vld [vmem:[#allocation2 + $0x310] sm:$0xff]
    %v1130 = vld [vmem:[#allocation2 + $0x318] sm:$0xff]
    %v1131 = vld [vmem:[#allocation2 + $0x320] sm:$0xff]
    %v1132 = vld [vmem:[#allocation2 + $0x328] sm:$0xff]
    %v1133 = vld [vmem:[#allocation2 + $0x330] sm:$0xff]
    %v1134 = vld [vmem:[#allocation2 + $0x338] sm:$0xff]
    %v1135 = vld [vmem:[#allocation2 + $0x340] sm:$0xff]
    %v1136 = vld [vmem:[#allocation2 + $0x348] sm:$0xff]
    %v1137 = vld [vmem:[#allocation2 + $0x350] sm:$0xff]
    %v1138 = vld [vmem:[#allocation2 + $0x358] sm:$0xff]
    %v1139 = vld [vmem:[#allocation2 + $0x360] sm:$0xff]
    %v1140 = vld [vmem:[#allocation2 + $0x368] sm:$0xff]
    %v1141 = vld [vmem:[#allocation2 + $0x370] sm:$0xff]
    %v1142 = vld [vmem:[#allocation2 + $0x378] sm:$0xff]
    %v1143 = vld [vmem:[#allocation2 + $0x380] sm:$0xff]
    %v1144 = vld [vmem:[#allocation2 + $0x388] sm:$0xff]
    %v1145 = vld [vmem:[#allocation2 + $0x390] sm:$0xff]
    %v1146 = vld [vmem:[#allocation2 + $0x398] sm:$0xff]
    %v1147 = vld [vmem:[#allocation2 + $0x3a0] sm:$0xff]
    %v1148 = vld [vmem:[#allocation2 + $0x3a8] sm:$0xff]
    %v1149 = vld [vmem:[#allocation2 + $0x3b0] sm:$0xff]
    %v1150 = vld [vmem:[#allocation2 + $0x3b8] sm:$0xff]
    %v1151 = vld [vmem:[#allocation2 + $0x3c0] sm:$0xff]
    %v1152 = vld [vmem:[#allocation2 + $0x3c8] sm:$0xff]
    %v1153 = vld [vmem:[#allocation2 + $0x3d0] sm:$0xff]
    %v1154 = vld [vmem:[#allocation2 + $0x3d8] sm:$0xff]
    %v1155 = vld [vmem:[#allocation2 + $0x3e0] sm:$0xff]
    %v1156 = vld [vmem:[#allocation2 + $0x3e8] sm:$0xff]
    %v1157 = vld [vmem:[#allocation2 + $0x3f0] sm:$0xff]
    %v1158 = vld [vmem:[#allocation2 + $0x3f8] sm:$0xff]
    %v1159 = vld [vmem:[%s5] sm:$0xf]
    %v1161 = vlaneseq
    %v1162 = vshrl.u32 %v1161, 7
    %v1163 = vsub.s32 0, %v1162
    %v1164 = vrot.slane %v1159, %v1163
    %v1165 = vlaneseq
    %v1166 = vshrl.u32 %v1165, 7
    %v1167 = vsub.s32 1, %v1166
    %v1168 = vrot.slane %v1159, %v1167
    %v1169 = vlaneseq
    %v1170 = vshrl.u32 %v1169, 7
    %v1171 = vsub.s32 2, %v1170
    %v1172 = vrot.slane %v1159, %v1171
    %v1173 = vlaneseq
    %v1174 = vshrl.u32 %v1173, 7
    %v1175 = vsub.s32 3, %v1174
    %v1176 = vrot.slane %v1159, %v1175
    %v1185 = vunpack.c.l.b16 %v1027
    %v1186 = vunpack.c.h.b16 %v1027
    %v1187 = vunpack.c.l.b16 %v1028
    %v1188 = vunpack.c.h.b16 %v1028
    %v1189 = vunpack.c.l.b16 %v1029
    %v1190 = vunpack.c.h.b16 %v1029
    %v1191 = vunpack.c.l.b16 %v1030
    %v1192 = vunpack.c.h.b16 %v1030
    %v1193 = vpack.c.b16 %v1189, %v1185
    %v1194 = vpack.c.b16 %v1190, %v1186
    %v1195 = vpack.c.b16 %v1191, %v1187
    %v1196 = vpack.c.b16 %v1192, %v1188
    %v1329 = vunpack.c.l.b16 %v1031
    %v1330 = vunpack.c.h.b16 %v1031
    %v1331 = vunpack.c.l.b16 %v1032
    %v1332 = vunpack.c.h.b16 %v1032
    %v1333 = vunpack.c.l.b16 %v1033
    %v1334 = vunpack.c.h.b16 %v1033
    %v1335 = vunpack.c.l.b16 %v1034
    %v1336 = vunpack.c.h.b16 %v1034
    %v1337 = vunpack.c.l.b16 %v1035
    %v1338 = vunpack.c.h.b16 %v1035
    %v1339 = vunpack.c.l.b16 %v1036
    %v1340 = vunpack.c.h.b16 %v1036
    %v1341 = vunpack.c.l.b16 %v1037
    %v1342 = vunpack.c.h.b16 %v1037
    %v1343 = vunpack.c.l.b16 %v1038
    %v1344 = vunpack.c.h.b16 %v1038
    %v1345 = vunpack.c.l.b16 %v1039
    %v1346 = vunpack.c.h.b16 %v1039
    %v1347 = vunpack.c.l.b16 %v1040
    %v1348 = vunpack.c.h.b16 %v1040
    %v1349 = vunpack.c.l.b16 %v1041
    %v1350 = vunpack.c.h.b16 %v1041
    %v1351 = vunpack.c.l.b16 %v1042
    %v1352 = vunpack.c.h.b16 %v1042
    %v1353 = vunpack.c.l.b16 %v1043
    %v1354 = vunpack.c.h.b16 %v1043
    %v1355 = vunpack.c.l.b16 %v1044
    %v1356 = vunpack.c.h.b16 %v1044
    %v1357 = vunpack.c.l.b16 %v1045
    %v1358 = vunpack.c.h.b16 %v1045
    %v1359 = vunpack.c.l.b16 %v1046
    %v1360 = vunpack.c.h.b16 %v1046
    %v1361 = vunpack.c.l.b16 %v1047
    %v1362 = vunpack.c.h.b16 %v1047
    %v1363 = vunpack.c.l.b16 %v1048
    %v1364 = vunpack.c.h.b16 %v1048
    %v1365 = vunpack.c.l.b16 %v1049
    %v1366 = vunpack.c.h.b16 %v1049
    %v1367 = vunpack.c.l.b16 %v1050
    %v1368 = vunpack.c.h.b16 %v1050
    %v1369 = vunpack.c.l.b16 %v1051
    %v1370 = vunpack.c.h.b16 %v1051
    %v1371 = vunpack.c.l.b16 %v1052
    %v1372 = vunpack.c.h.b16 %v1052
    %v1373 = vunpack.c.l.b16 %v1053
    %v1374 = vunpack.c.h.b16 %v1053
    %v1375 = vunpack.c.l.b16 %v1054
    %v1376 = vunpack.c.h.b16 %v1054
    %v1377 = vunpack.c.l.b16 %v1055
    %v1378 = vunpack.c.h.b16 %v1055
    %v1379 = vunpack.c.l.b16 %v1056
    %v1380 = vunpack.c.h.b16 %v1056
    %v1381 = vunpack.c.l.b16 %v1057
    %v1382 = vunpack.c.h.b16 %v1057
    %v1383 = vunpack.c.l.b16 %v1058
    %v1384 = vunpack.c.h.b16 %v1058
    %v1385 = vunpack.c.l.b16 %v1059
    %v1386 = vunpack.c.h.b16 %v1059
    %v1387 = vunpack.c.l.b16 %v1060
    %v1388 = vunpack.c.h.b16 %v1060
    %v1389 = vunpack.c.l.b16 %v1061
    %v1390 = vunpack.c.h.b16 %v1061
    %v1391 = vunpack.c.l.b16 %v1062
    %v1392 = vunpack.c.h.b16 %v1062
    %v1393 = vunpack.c.l.b16 %v1063
    %v1394 = vunpack.c.h.b16 %v1063
    %v1395 = vunpack.c.l.b16 %v1064
    %v1396 = vunpack.c.h.b16 %v1064
    %v1397 = vunpack.c.l.b16 %v1065
    %v1398 = vunpack.c.h.b16 %v1065
    %v1399 = vunpack.c.l.b16 %v1066
    %v1400 = vunpack.c.h.b16 %v1066
    %v1401 = vunpack.c.l.b16 %v1067
    %v1402 = vunpack.c.h.b16 %v1067
    %v1403 = vunpack.c.l.b16 %v1068
    %v1404 = vunpack.c.h.b16 %v1068
    %v1405 = vunpack.c.l.b16 %v1069
    %v1406 = vunpack.c.h.b16 %v1069
    %v1407 = vunpack.c.l.b16 %v1070
    %v1408 = vunpack.c.h.b16 %v1070
    %v1409 = vunpack.c.l.b16 %v1071
    %v1410 = vunpack.c.h.b16 %v1071
    %v1411 = vunpack.c.l.b16 %v1072
    %v1412 = vunpack.c.h.b16 %v1072
    %v1413 = vunpack.c.l.b16 %v1073
    %v1414 = vunpack.c.h.b16 %v1073
    %v1415 = vunpack.c.l.b16 %v1074
    %v1416 = vunpack.c.h.b16 %v1074
    %v1417 = vunpack.c.l.b16 %v1075
    %v1418 = vunpack.c.h.b16 %v1075
    %v1419 = vunpack.c.l.b16 %v1076
    %v1420 = vunpack.c.h.b16 %v1076
    %v1421 = vunpack.c.l.b16 %v1077
    %v1422 = vunpack.c.h.b16 %v1077
    %v1423 = vunpack.c.l.b16 %v1078
    %v1424 = vunpack.c.h.b16 %v1078
    %v1425 = vunpack.c.l.b16 %v1079
    %v1426 = vunpack.c.h.b16 %v1079
    %v1427 = vunpack.c.l.b16 %v1080
    %v1428 = vunpack.c.h.b16 %v1080
    %v1429 = vunpack.c.l.b16 %v1081
    %v1430 = vunpack.c.h.b16 %v1081
    %v1431 = vunpack.c.l.b16 %v1082
    %v1432 = vunpack.c.h.b16 %v1082
    %v1433 = vunpack.c.l.b16 %v1083
    %v1434 = vunpack.c.h.b16 %v1083
    %v1435 = vunpack.c.l.b16 %v1084
    %v1436 = vunpack.c.h.b16 %v1084
    %v1437 = vunpack.c.l.b16 %v1085
    %v1438 = vunpack.c.h.b16 %v1085
    %v1439 = vunpack.c.l.b16 %v1086
    %v1440 = vunpack.c.h.b16 %v1086
    %v1441 = vunpack.c.l.b16 %v1087
    %v1442 = vunpack.c.h.b16 %v1087
    %v1443 = vunpack.c.l.b16 %v1088
    %v1444 = vunpack.c.h.b16 %v1088
    %v1445 = vunpack.c.l.b16 %v1089
    %v1446 = vunpack.c.h.b16 %v1089
    %v1447 = vunpack.c.l.b16 %v1090
    %v1448 = vunpack.c.h.b16 %v1090
    %v1449 = vunpack.c.l.b16 %v1091
    %v1450 = vunpack.c.h.b16 %v1091
    %v1451 = vunpack.c.l.b16 %v1092
    %v1452 = vunpack.c.h.b16 %v1092
    %v1453 = vunpack.c.l.b16 %v1093
    %v1454 = vunpack.c.h.b16 %v1093
    %v1455 = vunpack.c.l.b16 %v1094
    %v1456 = vunpack.c.h.b16 %v1094
    %v1457 = vunpack.c.l.b16 %v1095
    %v1458 = vunpack.c.h.b16 %v1095
    %v1459 = vunpack.c.l.b16 %v1096
    %v1460 = vunpack.c.h.b16 %v1096
    %v1461 = vunpack.c.l.b16 %v1097
    %v1462 = vunpack.c.h.b16 %v1097
    %v1463 = vunpack.c.l.b16 %v1098
    %v1464 = vunpack.c.h.b16 %v1098
    %v1465 = vunpack.c.l.b16 %v1099
    %v1466 = vunpack.c.h.b16 %v1099
    %v1467 = vunpack.c.l.b16 %v1100
    %v1468 = vunpack.c.h.b16 %v1100
    %v1469 = vunpack.c.l.b16 %v1101
    %v1470 = vunpack.c.h.b16 %v1101
    %v1471 = vunpack.c.l.b16 %v1102
    %v1472 = vunpack.c.h.b16 %v1102
    %v1473 = vunpack.c.l.b16 %v1103
    %v1474 = vunpack.c.h.b16 %v1103
    %v1475 = vunpack.c.l.b16 %v1104
    %v1476 = vunpack.c.h.b16 %v1104
    %v1477 = vunpack.c.l.b16 %v1105
    %v1478 = vunpack.c.h.b16 %v1105
    %v1479 = vunpack.c.l.b16 %v1106
    %v1480 = vunpack.c.h.b16 %v1106
    %v1481 = vunpack.c.l.b16 %v1107
    %v1482 = vunpack.c.h.b16 %v1107
    %v1483 = vunpack.c.l.b16 %v1108
    %v1484 = vunpack.c.h.b16 %v1108
    %v1485 = vunpack.c.l.b16 %v1109
    %v1486 = vunpack.c.h.b16 %v1109
    %v1487 = vunpack.c.l.b16 %v1110
    %v1488 = vunpack.c.h.b16 %v1110
    %v1489 = vunpack.c.l.b16 %v1111
    %v1490 = vunpack.c.h.b16 %v1111
    %v1491 = vunpack.c.l.b16 %v1112
    %v1492 = vunpack.c.h.b16 %v1112
    %v1493 = vunpack.c.l.b16 %v1113
    %v1494 = vunpack.c.h.b16 %v1113
    %v1495 = vunpack.c.l.b16 %v1114
    %v1496 = vunpack.c.h.b16 %v1114
    %v1497 = vunpack.c.l.b16 %v1115
    %v1498 = vunpack.c.h.b16 %v1115
    %v1499 = vunpack.c.l.b16 %v1116
    %v1500 = vunpack.c.h.b16 %v1116
    %v1501 = vunpack.c.l.b16 %v1117
    %v1502 = vunpack.c.h.b16 %v1117
    %v1503 = vunpack.c.l.b16 %v1118
    %v1504 = vunpack.c.h.b16 %v1118
    %v1505 = vunpack.c.l.b16 %v1119
    %v1506 = vunpack.c.h.b16 %v1119
    %v1507 = vunpack.c.l.b16 %v1120
    %v1508 = vunpack.c.h.b16 %v1120
    %v1509 = vunpack.c.l.b16 %v1121
    %v1510 = vunpack.c.h.b16 %v1121
    %v1511 = vunpack.c.l.b16 %v1122
    %v1512 = vunpack.c.h.b16 %v1122
    %v1513 = vunpack.c.l.b16 %v1123
    %v1514 = vunpack.c.h.b16 %v1123
    %v1515 = vunpack.c.l.b16 %v1124
    %v1516 = vunpack.c.h.b16 %v1124
    %v1517 = vunpack.c.l.b16 %v1125
    %v1518 = vunpack.c.h.b16 %v1125
    %v1519 = vunpack.c.l.b16 %v1126
    %v1520 = vunpack.c.h.b16 %v1126
    %v1521 = vunpack.c.l.b16 %v1127
    %v1522 = vunpack.c.h.b16 %v1127
    %v1523 = vunpack.c.l.b16 %v1128
    %v1524 = vunpack.c.h.b16 %v1128
    %v1525 = vunpack.c.l.b16 %v1129
    %v1526 = vunpack.c.h.b16 %v1129
    %v1527 = vunpack.c.l.b16 %v1130
    %v1528 = vunpack.c.h.b16 %v1130
    %v1529 = vunpack.c.l.b16 %v1131
    %v1530 = vunpack.c.h.b16 %v1131
    %v1531 = vunpack.c.l.b16 %v1132
    %v1532 = vunpack.c.h.b16 %v1132
    %v1533 = vunpack.c.l.b16 %v1133
    %v1534 = vunpack.c.h.b16 %v1133
    %v1535 = vunpack.c.l.b16 %v1134
    %v1536 = vunpack.c.h.b16 %v1134
    %v1537 = vunpack.c.l.b16 %v1135
    %v1538 = vunpack.c.h.b16 %v1135
    %v1539 = vunpack.c.l.b16 %v1136
    %v1540 = vunpack.c.h.b16 %v1136
    %v1541 = vunpack.c.l.b16 %v1137
    %v1542 = vunpack.c.h.b16 %v1137
    %v1543 = vunpack.c.l.b16 %v1138
    %v1544 = vunpack.c.h.b16 %v1138
    %v1545 = vunpack.c.l.b16 %v1139
    %v1546 = vunpack.c.h.b16 %v1139
    %v1547 = vunpack.c.l.b16 %v1140
    %v1548 = vunpack.c.h.b16 %v1140
    %v1549 = vunpack.c.l.b16 %v1141
    %v1550 = vunpack.c.h.b16 %v1141
    %v1551 = vunpack.c.l.b16 %v1142
    %v1552 = vunpack.c.h.b16 %v1142
    %v1553 = vunpack.c.l.b16 %v1143
    %v1554 = vunpack.c.h.b16 %v1143
    %v1555 = vunpack.c.l.b16 %v1144
    %v1556 = vunpack.c.h.b16 %v1144
    %v1557 = vunpack.c.l.b16 %v1145
    %v1558 = vunpack.c.h.b16 %v1145
    %v1559 = vunpack.c.l.b16 %v1146
    %v1560 = vunpack.c.h.b16 %v1146
    %v1561 = vunpack.c.l.b16 %v1147
    %v1562 = vunpack.c.h.b16 %v1147
    %v1563 = vunpack.c.l.b16 %v1148
    %v1564 = vunpack.c.h.b16 %v1148
    %v1565 = vunpack.c.l.b16 %v1149
    %v1566 = vunpack.c.h.b16 %v1149
    %v1567 = vunpack.c.l.b16 %v1150
    %v1568 = vunpack.c.h.b16 %v1150
    %v1569 = vunpack.c.l.b16 %v1151
    %v1570 = vunpack.c.h.b16 %v1151
    %v1571 = vunpack.c.l.b16 %v1152
    %v1572 = vunpack.c.h.b16 %v1152
    %v1573 = vunpack.c.l.b16 %v1153
    %v1574 = vunpack.c.h.b16 %v1153
    %v1575 = vunpack.c.l.b16 %v1154
    %v1576 = vunpack.c.h.b16 %v1154
    %v1577 = vunpack.c.l.b16 %v1155
    %v1578 = vunpack.c.h.b16 %v1155
    %v1579 = vunpack.c.l.b16 %v1156
    %v1580 = vunpack.c.h.b16 %v1156
    %v1581 = vunpack.c.l.b16 %v1157
    %v1582 = vunpack.c.h.b16 %v1157
    %v1583 = vunpack.c.l.b16 %v1158
    %v1584 = vunpack.c.h.b16 %v1158
    %v1585 = vpack.c.b16 %v1333, %v1329
    %v1586 = vpack.c.b16 %v1334, %v1330
    %v1587 = vpack.c.b16 %v1335, %v1331
    %v1588 = vpack.c.b16 %v1336, %v1332
    %v1589 = vpack.c.b16 %v1341, %v1337
    %v1590 = vpack.c.b16 %v1342, %v1338
    %v1591 = vpack.c.b16 %v1343, %v1339
    %v1592 = vpack.c.b16 %v1344, %v1340
    %v1593 = vpack.c.b16 %v1349, %v1345
    %v1594 = vpack.c.b16 %v1350, %v1346
    %v1595 = vpack.c.b16 %v1351, %v1347
    %v1596 = vpack.c.b16 %v1352, %v1348
    %v1597 = vpack.c.b16 %v1357, %v1353
    %v1598 = vpack.c.b16 %v1358, %v1354
    %v1599 = vpack.c.b16 %v1359, %v1355
    %v1600 = vpack.c.b16 %v1360, %v1356
    %v1601 = vpack.c.b16 %v1365, %v1361
    %v1602 = vpack.c.b16 %v1366, %v1362
    %v1603 = vpack.c.b16 %v1367, %v1363
    %v1604 = vpack.c.b16 %v1368, %v1364
    %v1605 = vpack.c.b16 %v1373, %v1369
    %v1606 = vpack.c.b16 %v1374, %v1370
    %v1607 = vpack.c.b16 %v1375, %v1371
    %v1608 = vpack.c.b16 %v1376, %v1372
    %v1609 = vpack.c.b16 %v1381, %v1377
    %v1610 = vpack.c.b16 %v1382, %v1378
    %v1611 = vpack.c.b16 %v1383, %v1379
    %v1612 = vpack.c.b16 %v1384, %v1380
    %v1613 = vpack.c.b16 %v1389, %v1385
    %v1614 = vpack.c.b16 %v1390, %v1386
    %v1615 = vpack.c.b16 %v1391, %v1387
    %v1616 = vpack.c.b16 %v1392, %v1388
    %v1617 = vpack.c.b16 %v1397, %v1393
    %v1618 = vpack.c.b16 %v1398, %v1394
    %v1619 = vpack.c.b16 %v1399, %v1395
    %v1620 = vpack.c.b16 %v1400, %v1396
    %v1621 = vpack.c.b16 %v1405, %v1401
    %v1622 = vpack.c.b16 %v1406, %v1402
    %v1623 = vpack.c.b16 %v1407, %v1403
    %v1624 = vpack.c.b16 %v1408, %v1404
    %v1625 = vpack.c.b16 %v1413, %v1409
    %v1626 = vpack.c.b16 %v1414, %v1410
    %v1627 = vpack.c.b16 %v1415, %v1411
    %v1628 = vpack.c.b16 %v1416, %v1412
    %v1629 = vpack.c.b16 %v1421, %v1417
    %v1630 = vpack.c.b16 %v1422, %v1418
    %v1631 = vpack.c.b16 %v1423, %v1419
    %v1632 = vpack.c.b16 %v1424, %v1420
    %v1633 = vpack.c.b16 %v1429, %v1425
    %v1634 = vpack.c.b16 %v1430, %v1426
    %v1635 = vpack.c.b16 %v1431, %v1427
    %v1636 = vpack.c.b16 %v1432, %v1428
    %v1637 = vpack.c.b16 %v1437, %v1433
    %v1638 = vpack.c.b16 %v1438, %v1434
    %v1639 = vpack.c.b16 %v1439, %v1435
    %v1640 = vpack.c.b16 %v1440, %v1436
    %v1641 = vpack.c.b16 %v1445, %v1441
    %v1642 = vpack.c.b16 %v1446, %v1442
    %v1643 = vpack.c.b16 %v1447, %v1443
    %v1644 = vpack.c.b16 %v1448, %v1444
    %v1645 = vpack.c.b16 %v1453, %v1449
    %v1646 = vpack.c.b16 %v1454, %v1450
    %v1647 = vpack.c.b16 %v1455, %v1451
    %v1648 = vpack.c.b16 %v1456, %v1452
    %v1649 = vpack.c.b16 %v1461, %v1457
    %v1650 = vpack.c.b16 %v1462, %v1458
    %v1651 = vpack.c.b16 %v1463, %v1459
    %v1652 = vpack.c.b16 %v1464, %v1460
    %v1653 = vpack.c.b16 %v1469, %v1465
    %v1654 = vpack.c.b16 %v1470, %v1466
    %v1655 = vpack.c.b16 %v1471, %v1467
    %v1656 = vpack.c.b16 %v1472, %v1468
    %v1657 = vpack.c.b16 %v1477, %v1473
    %v1658 = vpack.c.b16 %v1478, %v1474
    %v1659 = vpack.c.b16 %v1479, %v1475
    %v1660 = vpack.c.b16 %v1480, %v1476
    %v1661 = vpack.c.b16 %v1485, %v1481
    %v1662 = vpack.c.b16 %v1486, %v1482
    %v1663 = vpack.c.b16 %v1487, %v1483
    %v1664 = vpack.c.b16 %v1488, %v1484
    %v1665 = vpack.c.b16 %v1493, %v1489
    %v1666 = vpack.c.b16 %v1494, %v1490
    %v1667 = vpack.c.b16 %v1495, %v1491
    %v1668 = vpack.c.b16 %v1496, %v1492
    %v1669 = vpack.c.b16 %v1501, %v1497
    %v1670 = vpack.c.b16 %v1502, %v1498
    %v1671 = vpack.c.b16 %v1503, %v1499
    %v1672 = vpack.c.b16 %v1504, %v1500
    %v1673 = vpack.c.b16 %v1509, %v1505
    %v1674 = vpack.c.b16 %v1510, %v1506
    %v1675 = vpack.c.b16 %v1511, %v1507
    %v1676 = vpack.c.b16 %v1512, %v1508
    %v1677 = vpack.c.b16 %v1517, %v1513
    %v1678 = vpack.c.b16 %v1518, %v1514
    %v1679 = vpack.c.b16 %v1519, %v1515
    %v1680 = vpack.c.b16 %v1520, %v1516
    %v1681 = vpack.c.b16 %v1525, %v1521
    %v1682 = vpack.c.b16 %v1526, %v1522
    %v1683 = vpack.c.b16 %v1527, %v1523
    %v1684 = vpack.c.b16 %v1528, %v1524
    %v1685 = vpack.c.b16 %v1533, %v1529
    %v1686 = vpack.c.b16 %v1534, %v1530
    %v1687 = vpack.c.b16 %v1535, %v1531
    %v1688 = vpack.c.b16 %v1536, %v1532
    %v1689 = vpack.c.b16 %v1541, %v1537
    %v1690 = vpack.c.b16 %v1542, %v1538
    %v1691 = vpack.c.b16 %v1543, %v1539
    %v1692 = vpack.c.b16 %v1544, %v1540
    %v1693 = vpack.c.b16 %v1549, %v1545
    %v1694 = vpack.c.b16 %v1550, %v1546
    %v1695 = vpack.c.b16 %v1551, %v1547
    %v1696 = vpack.c.b16 %v1552, %v1548
    %v1697 = vpack.c.b16 %v1557, %v1553
    %v1698 = vpack.c.b16 %v1558, %v1554
    %v1699 = vpack.c.b16 %v1559, %v1555
    %v1700 = vpack.c.b16 %v1560, %v1556
    %v1701 = vpack.c.b16 %v1565, %v1561
    %v1702 = vpack.c.b16 %v1566, %v1562
    %v1703 = vpack.c.b16 %v1567, %v1563
    %v1704 = vpack.c.b16 %v1568, %v1564
    %v1705 = vpack.c.b16 %v1573, %v1569
    %v1706 = vpack.c.b16 %v1574, %v1570
    %v1707 = vpack.c.b16 %v1575, %v1571
    %v1708 = vpack.c.b16 %v1576, %v1572
    %v1709 = vpack.c.b16 %v1581, %v1577
    %v1710 = vpack.c.b16 %v1582, %v1578
    %v1711 = vpack.c.b16 %v1583, %v1579
    %v1712 = vpack.c.b16 %v1584, %v1580
    %1841 = vmatprep.subr.bf16.mxu0 %v1614
    %1842 = vmatpush1.bf16.msra.mxu0 %v1613
    %1843 = vmatprep.subr.bf16.mxu0 %v1610
    %1844 = vmatpush1.bf16.msra.mxu0 %v1609
    %1845 = vmatprep.subr.bf16.mxu0 %v1606
    %1846 = vmatpush1.bf16.msra.mxu0 %v1605
    %1847 = vmatprep.subr.bf16.mxu0 %v1602
    %1848 = vmatpush1.bf16.msra.mxu0 %v1601
    %1849 = vmatprep.subr.bf16.mxu0 %v1598
    %1850 = vmatpush1.bf16.msra.mxu0 %v1597
    %1851 = vmatprep.subr.bf16.mxu0 %v1594
    %1852 = vmatpush1.bf16.msra.mxu0 %v1593
    %1853 = vmatprep.subr.bf16.mxu0 %v1590
    %1854 = vmatpush1.bf16.msra.mxu0 %v1589
    %1855 = vmatprep.subr.bf16.mxu0 %v1586
    %1856 = vmatpush1.bf16.msra.mxu0 %v1585
    %1857 = vmatprep.subr.bf16.mxu0 %v1646
    %1858 = vmatpush2.bf16.msra.mxu0 %v1645
    %1859 = vmatprep.subr.bf16.mxu0 %v1642
    %1860 = vmatpush2.bf16.msra.mxu0 %v1641
    %1861 = vmatprep.subr.bf16.mxu0 %v1638
    %1862 = vmatpush2.bf16.msra.mxu0 %v1637
    %1863 = vmatprep.subr.bf16.mxu0 %v1634
    %1864 = vmatpush2.bf16.msra.mxu0 %v1633
    %1865 = vmatprep.subr.bf16.mxu0 %v1630
    %1866 = vmatpush2.bf16.msra.mxu0 %v1629
    %1867 = vmatprep.subr.bf16.mxu0 %v1626
    %1868 = vmatpush2.bf16.msra.mxu0 %v1625
    %1869 = vmatprep.subr.bf16.mxu0 %v1622
    %1870 = vmatpush2.bf16.msra.mxu0 %v1621
    %1871 = vmatprep.subr.bf16.mxu0 %v1618
    %1872 = vmatpush2.bf16.msra.mxu0 %v1617
    %1873 = vmatprep.mubr.bf16.mxu0 %v1194
    %1874 = vmatmul.mubr.bf16.gmra.mxu0 %v1193
    %v1875 = vpop.f32.mrf.mxu0
    %v1876 = vadd.f32 %v1164, %v1875
    %v1877 = vpop.f32.mrf.mxu0
    %v1878 = vadd.f32 %v1168, %v1877
    %v1879 = vpop.f32.mrf.mxu0
    %v1880 = vadd.f32 %v1164, %v1879
    %v1881 = vpop.f32.mrf.mxu0
    %v1882 = vadd.f32 %v1168, %v1881
    %1883 = vdwg.mxu0
    %1884 = vmatprep.subr.bf16.mxu0 %v1678
    %1885 = vmatpush1.bf16.msra.mxu0 %v1677
    %1886 = vmatprep.subr.bf16.mxu0 %v1674
    %1887 = vmatpush1.bf16.msra.mxu0 %v1673
    %1888 = vmatprep.subr.bf16.mxu0 %v1670
    %1889 = vmatpush1.bf16.msra.mxu0 %v1669
    %1890 = vmatprep.subr.bf16.mxu0 %v1666
    %1891 = vmatpush1.bf16.msra.mxu0 %v1665
    %1892 = vmatprep.subr.bf16.mxu0 %v1662
    %1893 = vmatpush1.bf16.msra.mxu0 %v1661
    %1894 = vmatprep.subr.bf16.mxu0 %v1658
    %1895 = vmatpush1.bf16.msra.mxu0 %v1657
    %1896 = vmatprep.subr.bf16.mxu0 %v1654
    %1897 = vmatpush1.bf16.msra.mxu0 %v1653
    %1898 = vmatprep.subr.bf16.mxu0 %v1650
    %1899 = vmatpush1.bf16.msra.mxu0 %v1649
    %1900 = vmatprep.subr.bf16.mxu0 %v1710
    %1901 = vmatpush2.bf16.msra.mxu0 %v1709
    %1902 = vmatprep.subr.bf16.mxu0 %v1706
    %1903 = vmatpush2.bf16.msra.mxu0 %v1705
    %1904 = vmatprep.subr.bf16.mxu0 %v1702
    %1905 = vmatpush2.bf16.msra.mxu0 %v1701
    %1906 = vmatprep.subr.bf16.mxu0 %v1698
    %1907 = vmatpush2.bf16.msra.mxu0 %v1697
    %1908 = vmatprep.subr.bf16.mxu0 %v1694
    %1909 = vmatpush2.bf16.msra.mxu0 %v1693
    %1910 = vmatprep.subr.bf16.mxu0 %v1690
    %1911 = vmatpush2.bf16.msra.mxu0 %v1689
    %1912 = vmatprep.subr.bf16.mxu0 %v1686
    %1913 = vmatpush2.bf16.msra.mxu0 %v1685
    %1914 = vmatprep.subr.bf16.mxu0 %v1682
    %1915 = vmatpush2.bf16.msra.mxu0 %v1681
    %1916 = vmatprep.mubr.bf16.mxu0 %v1196
    %1917 = vmatmul.mubr.bf16.gmra.mxu0 %v1195
    %v1918 = vpop.f32.mrf.mxu0
    %v1919 = vadd.f32 %v1876, %v1918
    %v1920 = vpop.f32.mrf.mxu0
    %v1921 = vadd.f32 %v1878, %v1920
    %v1922 = vpop.f32.mrf.mxu0
    %v1923 = vadd.f32 %v1880, %v1922
    %v1924 = vpop.f32.mrf.mxu0
    %v1925 = vadd.f32 %v1882, %v1924
    %1926 = vdwg.mxu0
    %1927 = vmatprep.subr.bf16.mxu0 %v1616
    %1928 = vmatpush1.bf16.msra.mxu0 %v1615
    %1929 = vmatprep.subr.bf16.mxu0 %v1612
    %1930 = vmatpush1.bf16.msra.mxu0 %v1611
    %1931 = vmatprep.subr.bf16.mxu0 %v1608
    %1932 = vmatpush1.bf16.msra.mxu0 %v1607
    %1933 = vmatprep.subr.bf16.mxu0 %v1604
    %1934 = vmatpush1.bf16.msra.mxu0 %v1603
    %1935 = vmatprep.subr.bf16.mxu0 %v1600
    %1936 = vmatpush1.bf16.msra.mxu0 %v1599
    %1937 = vmatprep.subr.bf16.mxu0 %v1596
    %1938 = vmatpush1.bf16.msra.mxu0 %v1595
    %1939 = vmatprep.subr.bf16.mxu0 %v1592
    %1940 = vmatpush1.bf16.msra.mxu0 %v1591
    %1941 = vmatprep.subr.bf16.mxu0 %v1588
    %1942 = vmatpush1.bf16.msra.mxu0 %v1587
    %1943 = vmatprep.subr.bf16.mxu0 %v1648
    %1944 = vmatpush2.bf16.msra.mxu0 %v1647
    %1945 = vmatprep.subr.bf16.mxu0 %v1644
    %1946 = vmatpush2.bf16.msra.mxu0 %v1643
    %1947 = vmatprep.subr.bf16.mxu0 %v1640
    %1948 = vmatpush2.bf16.msra.mxu0 %v1639
    %1949 = vmatprep.subr.bf16.mxu0 %v1636
    %1950 = vmatpush2.bf16.msra.mxu0 %v1635
    %1951 = vmatprep.subr.bf16.mxu0 %v1632
    %1952 = vmatpush2.bf16.msra.mxu0 %v1631
    %1953 = vmatprep.subr.bf16.mxu0 %v1628
    %1954 = vmatpush2.bf16.msra.mxu0 %v1627
    %1955 = vmatprep.subr.bf16.mxu0 %v1624
    %1956 = vmatpush2.bf16.msra.mxu0 %v1623
    %1957 = vmatprep.subr.bf16.mxu0 %v1620
    %1958 = vmatpush2.bf16.msra.mxu0 %v1619
    %1959 = vmatprep.mubr.bf16.mxu0 %v1194
    %1960 = vmatmul.mubr.bf16.gmra.mxu0 %v1193
    %v1961 = vpop.f32.mrf.mxu0
    %v1962 = vadd.f32 %v1172, %v1961
    %v1963 = vpop.f32.mrf.mxu0
    %v1964 = vadd.f32 %v1176, %v1963
    %v1965 = vpop.f32.mrf.mxu0
    %v1966 = vadd.f32 %v1172, %v1965
    %v1967 = vpop.f32.mrf.mxu0
    %v1968 = vadd.f32 %v1176, %v1967
    %1969 = vdwg.mxu0
    %1970 = vmatprep.subr.bf16.mxu0 %v1680
    %1971 = vmatpush1.bf16.msra.mxu0 %v1679
    %1972 = vmatprep.subr.bf16.mxu0 %v1676
    %1973 = vmatpush1.bf16.msra.mxu0 %v1675
    %1974 = vmatprep.subr.bf16.mxu0 %v1672
    %1975 = vmatpush1.bf16.msra.mxu0 %v1671
    %1976 = vmatprep.subr.bf16.mxu0 %v1668
    %1977 = vmatpush1.bf16.msra.mxu0 %v1667
    %1978 = vmatprep.subr.bf16.mxu0 %v1664
    %1979 = vmatpush1.bf16.msra.mxu0 %v1663
    %1980 = vmatprep.subr.bf16.mxu0 %v1660
    %1981 = vmatpush1.bf16.msra.mxu0 %v1659
    %1982 = vmatprep.subr.bf16.mxu0 %v1656
    %1983 = vmatpush1.bf16.msra.mxu0 %v1655
    %1984 = vmatprep.subr.bf16.mxu0 %v1652
    %1985 = vmatpush1.bf16.msra.mxu0 %v1651
    %1986 = vmatprep.subr.bf16.mxu0 %v1712
    %1987 = vmatpush2.bf16.msra.mxu0 %v1711
    %1988 = vmatprep.subr.bf16.mxu0 %v1708
    %1989 = vmatpush2.bf16.msra.mxu0 %v1707
    %1990 = vmatprep.subr.bf16.mxu0 %v1704
    %1991 = vmatpush2.bf16.msra.mxu0 %v1703
    %1992 = vmatprep.subr.bf16.mxu0 %v1700
    %1993 = vmatpush2.bf16.msra.mxu0 %v1699
    %1994 = vmatprep.subr.bf16.mxu0 %v1696
    %1995 = vmatpush2.bf16.msra.mxu0 %v1695
    %1996 = vmatprep.subr.bf16.mxu0 %v1692
    %1997 = vmatpush2.bf16.msra.mxu0 %v1691
    %1998 = vmatprep.subr.bf16.mxu0 %v1688
    %1999 = vmatpush2.bf16.msra.mxu0 %v1687
    %2000 = vmatprep.subr.bf16.mxu0 %v1684
    %2001 = vmatpush2.bf16.msra.mxu0 %v1683
    %2002 = vmatprep.mubr.bf16.mxu0 %v1196
    %2003 = vmatmul.mubr.bf16.gmra.mxu0 %v1195
    %v2004 = vpop.f32.mrf.mxu0
    %v2005 = vadd.f32 %v1962, %v2004
    %v2006 = vpop.f32.mrf.mxu0
    %v2007 = vadd.f32 %v1964, %v2006
    %v2008 = vpop.f32.mrf.mxu0
    %v2009 = vadd.f32 %v1966, %v2008
    %v2010 = vpop.f32.mrf.mxu0
    %v2011 = vadd.f32 %v1968, %v2010
    %2012 = vdwg.mxu0
    %v2013 = vmax.f32 %v933, 0.0
    %v2014 = vmax.f32 %v935, 0.0
    %v2015 = vmax.f32 %v1019, 0.0
    %v2016 = vmax.f32 %v1021, 0.0
    %v2017 = vmax.f32 %v937, 0.0
    %v2018 = vmax.f32 %v939, 0.0
    %v2019 = vmax.f32 %v1023, 0.0
    %v2020 = vmax.f32 %v1025, 0.0
    %v2021 = vand.u32 2147483647, %v933
    %v2022 = vand.u32 2147483647, %v935
    %v2023 = vand.u32 2147483647, %v1019
    %v2024 = vand.u32 2147483647, %v1021
    %v2025 = vand.u32 2147483647, %v937
    %v2026 = vand.u32 2147483647, %v939
    %v2027 = vand.u32 2147483647, %v1023
    %v2028 = vand.u32 2147483647, %v1025
    %v2029 = vsub.f32 0.0, %v2021
    %v2030 = vsub.f32 0.0, %v2022
    %v2031 = vsub.f32 0.0, %v2023
    %v2032 = vsub.f32 0.0, %v2024
    %v2033 = vsub.f32 0.0, %v2025
    %v2034 = vsub.f32 0.0, %v2026
    %v2035 = vsub.f32 0.0, %v2027
    %v2036 = vsub.f32 0.0, %v2028
    %v2037 = vmul.f32 %v2029, 1.442695
    %v2038 = vpow.pop %v2037
    %v2039 = vmul.f32 %v2030, 1.442695
    %v2040 = vpow.pop %v2039
    %v2041 = vmul.f32 %v2031, 1.442695
    %v2042 = vpow.pop %v2041
    %v2043 = vmul.f32 %v2032, 1.442695
    %v2044 = vpow.pop %v2043
    %v2045 = vmul.f32 %v2033, 1.442695
    %v2046 = vpow.pop %v2045
    %v2047 = vmul.f32 %v2034, 1.442695
    %v2048 = vpow.pop %v2047
    %v2049 = vmul.f32 %v2035, 1.442695
    %v2050 = vpow.pop %v2049
    %v2051 = vmul.f32 %v2036, 1.442695
    %v2052 = vpow.pop %v2051
    %v2053 = vadd.f32 %v2038, 1.0
    %v2054 = vadd.f32 %v2040, 1.0
    %v2055 = vadd.f32 %v2042, 1.0
    %v2056 = vadd.f32 %v2044, 1.0
    %v2057 = vadd.f32 %v2046, 1.0
    %v2058 = vadd.f32 %v2048, 1.0
    %v2059 = vadd.f32 %v2050, 1.0
    %v2060 = vadd.f32 %v2052, 1.0
    %v2061 = vlog2.pop %v2053
    %v2062 = vmul.f32 %v2061, 0.6931472
    %v2063 = vlog2.pop %v2054
    %v2064 = vmul.f32 %v2063, 0.6931472
    %v2065 = vlog2.pop %v2055
    %v2066 = vmul.f32 %v2065, 0.6931472
    %v2067 = vlog2.pop %v2056
    %v2068 = vmul.f32 %v2067, 0.6931472
    %v2069 = vlog2.pop %v2057
    %v2070 = vmul.f32 %v2069, 0.6931472
    %v2071 = vlog2.pop %v2058
    %v2072 = vmul.f32 %v2071, 0.6931472
    %v2073 = vlog2.pop %v2059
    %v2074 = vmul.f32 %v2073, 0.6931472
    %v2075 = vlog2.pop %v2060
    %v2076 = vmul.f32 %v2075, 0.6931472
    %v2077 = vadd.f32 %v2013, %v2062
    %v2078 = vadd.f32 %v2014, %v2064
    %v2079 = vadd.f32 %v2015, %v2066
    %v2080 = vadd.f32 %v2016, %v2068
    %v2081 = vadd.f32 %v2017, %v2070
    %v2082 = vadd.f32 %v2018, %v2072
    %v2083 = vadd.f32 %v2019, %v2074
    %v2084 = vadd.f32 %v2020, %v2076
    %2085 = vst [vmem:[#allocation5] sm:$0xff] %v2077
    %2086 = vst [vmem:[#allocation5 + $0x8] sm:$0xff] %v2078
    %2087 = vst [vmem:[#allocation5 + $0x10] sm:$0xff] %v2079
    %2088 = vst [vmem:[#allocation5 + $0x18] sm:$0xff] %v2080
    %2089 = vst [vmem:[#allocation5 + $0x20] sm:$0xff] %v2081
    %2090 = vst [vmem:[#allocation5 + $0x28] sm:$0xff] %v2082
    %2091 = vst [vmem:[#allocation5 + $0x30] sm:$0xff] %v2083
    %2092 = vst [vmem:[#allocation5 + $0x38] sm:$0xff] %v2084
    %v2093 = vmax.f32 %v1919, 0.0
    %v2094 = vmax.f32 %v1921, 0.0
    %v2095 = vmax.f32 %v2005, 0.0
    %v2096 = vmax.f32 %v2007, 0.0
    %v2097 = vmax.f32 %v1923, 0.0
    %v2098 = vmax.f32 %v1925, 0.0
    %v2099 = vmax.f32 %v2009, 0.0
    %v2100 = vmax.f32 %v2011, 0.0
    %v2101 = vand.u32 2147483647, %v1919
    %v2102 = vand.u32 2147483647, %v1921
    %v2103 = vand.u32 2147483647, %v2005
    %v2104 = vand.u32 2147483647, %v2007
    %v2105 = vand.u32 2147483647, %v1923
    %v2106 = vand.u32 2147483647, %v1925
    %v2107 = vand.u32 2147483647, %v2009
    %v2108 = vand.u32 2147483647, %v2011
    %v2109 = vsub.f32 0.0, %v2101
    %v2110 = vsub.f32 0.0, %v2102
    %v2111 = vsub.f32 0.0, %v2103
    %v2112 = vsub.f32 0.0, %v2104
    %v2113 = vsub.f32 0.0, %v2105
    %v2114 = vsub.f32 0.0, %v2106
    %v2115 = vsub.f32 0.0, %v2107
    %v2116 = vsub.f32 0.0, %v2108
    %v2117 = vmul.f32 %v2109, 1.442695
    %v2118 = vpow.pop %v2117
    %v2119 = vmul.f32 %v2110, 1.442695
    %v2120 = vpow.pop %v2119
    %v2121 = vmul.f32 %v2111, 1.442695
    %v2122 = vpow.pop %v2121
    %v2123 = vmul.f32 %v2112, 1.442695
    %v2124 = vpow.pop %v2123
    %v2125 = vmul.f32 %v2113, 1.442695
    %v2126 = vpow.pop %v2125
    %v2127 = vmul.f32 %v2114, 1.442695
    %v2128 = vpow.pop %v2127
    %v2129 = vmul.f32 %v2115, 1.442695
    %v2130 = vpow.pop %v2129
    %v2131 = vmul.f32 %v2116, 1.442695
    %v2132 = vpow.pop %v2131
    %v2133 = vadd.f32 %v2118, 1.0
    %v2134 = vadd.f32 %v2120, 1.0
    %v2135 = vadd.f32 %v2122, 1.0
    %v2136 = vadd.f32 %v2124, 1.0
    %v2137 = vadd.f32 %v2126, 1.0
    %v2138 = vadd.f32 %v2128, 1.0
    %v2139 = vadd.f32 %v2130, 1.0
    %v2140 = vadd.f32 %v2132, 1.0
    %v2141 = vlog2.pop %v2133
    %v2142 = vmul.f32 %v2141, 0.6931472
    %v2143 = vlog2.pop %v2134
    %v2144 = vmul.f32 %v2143, 0.6931472
    %v2145 = vlog2.pop %v2135
    %v2146 = vmul.f32 %v2145, 0.6931472
    %v2147 = vlog2.pop %v2136
    %v2148 = vmul.f32 %v2147, 0.6931472
    %v2149 = vlog2.pop %v2137
    %v2150 = vmul.f32 %v2149, 0.6931472
    %v2151 = vlog2.pop %v2138
    %v2152 = vmul.f32 %v2151, 0.6931472
    %v2153 = vlog2.pop %v2139
    %v2154 = vmul.f32 %v2153, 0.6931472
    %v2155 = vlog2.pop %v2140
    %v2156 = vmul.f32 %v2155, 0.6931472
    %v2157 = vadd.f32 %v2093, %v2142
    %v2158 = vadd.f32 %v2094, %v2144
    %v2159 = vadd.f32 %v2095, %v2146
    %v2160 = vadd.f32 %v2096, %v2148
    %v2161 = vadd.f32 %v2097, %v2150
    %v2162 = vadd.f32 %v2098, %v2152
    %v2163 = vadd.f32 %v2099, %v2154
    %v2164 = vadd.f32 %v2100, %v2156
    %2165 = vst [vmem:[#allocation6] sm:$0xff] %v2157
    %2166 = vst [vmem:[#allocation6 + $0x8] sm:$0xff] %v2158
    %2167 = vst [vmem:[#allocation6 + $0x10] sm:$0xff] %v2159
    %2168 = vst [vmem:[#allocation6 + $0x18] sm:$0xff] %v2160
    %2169 = vst [vmem:[#allocation6 + $0x20] sm:$0xff] %v2161
    %2170 = vst [vmem:[#allocation6 + $0x28] sm:$0xff] %v2162
    %2171 = vst [vmem:[#allocation6 + $0x30] sm:$0xff] %v2163
    %2172 = vst [vmem:[#allocation6 + $0x38] sm:$0xff] %v2164
    // Predicated region
    $region30: #{decoder_forward.3} parent=1 // pred_check
      _
    $region31: #{decoder_forward.3} parent=1 // pred_check_branch
      %2174 = sbr.rel (0) target = $region33
    $region32: #{decoder_forward.3} parent=1 // pred_region
      %s2176 = ssub.s32 1024, 1024
      %2177 = vsyncadd [#allocation4], %s2176
      %s2178 = sshll.u32 [#allocation5], 4
      %s2179 = int_to_ptr.vmem [resolvable:$true] %s2178
      %2184 = dma.vmem_to_hbm [thread:$0]  %s2179, 1024, %s6, [#allocation4], 512, 512, 32
    $region33: #{decoder_forward.3} parent=1 // pred_fallthru
      _
    // Predicated region
    $region34: #{decoder_forward.3} parent=1 // pred_check
      _
    $region35: #{decoder_forward.3} parent=1 // pred_check_branch
      %2186 = sbr.rel (0) target = $region37
    $region36: #{decoder_forward.3} parent=1 // pred_region
      %s2188 = ssub.s32 1024, 1024
      %2189 = vsyncadd [#allocation7], %s2188
      %s2190 = sshll.u32 [#allocation6], 4
      %s2191 = int_to_ptr.vmem [resolvable:$true] %s2190
      %2196 = dma.vmem_to_hbm [thread:$0]  %s2191, 1024, %s7, [#allocation7], 512, 512, 32
    $region37: #{decoder_forward.3} parent=1 // pred_fallthru
      _
    // Predicated region
    $region38: #{decoder_forward.3} parent=1 // pred_check
      _
    $region39: #{decoder_forward.3} parent=1 // pred_check_branch
      %2198 = sbr.rel (0) target = $region41
    $region40: #{decoder_forward.3} parent=1 // pred_region
      %2199 = dma.done [#allocation4], 1024
    $region41: #{decoder_forward.3} parent=1 // pred_fallthru
      _
    // Predicated region
    $region42: #{decoder_forward.3} parent=1 // pred_check
      _
    $region43: #{decoder_forward.3} parent=1 // pred_check_branch
      %2201 = sbr.rel (0) target = $region45
    $region44: #{decoder_forward.3} parent=1 // pred_region
      %2202 = dma.done [#allocation7], 1024
    $region45: #{decoder_forward.3} parent=1 // pred_fallthru
      _
    %2203 = vsyncpa [#allocation3], 1
    %2204 = vsyncpa [#allocation4], 1
    %2205 = vsyncpa [#allocation7], 1

// kernel: decoder_forward.2
$region0: #{decoder_forward.2}
  #allocation0 [shape = 'u32[]', space=smem, size = 0x4, offset = 0x4, fixed_abs, tag = 'smem constant byte address 0x4 - core index']
  #allocation1 [shape = 'u32[144,128]{1,0:T(1,128)}', space=vmem, size = 0x12000, scoped, tag = 'internal scratch']
  %s0 = inlined_call_operand.hbm [shape: f32[16,32], index: 0, kind: input, shape index: {}]
  %s1 = inlined_call_operand.vmem [shape: f32[16,8], index: 1, kind: input, shape index: {}]
  %s2 = inlined_call_operand.hbm [shape: bf16[8,8], index: 2, kind: input, shape index: {}]
  %s3 = inlined_call_operand.hbm [shape: f32[1,8], index: 3, kind: input, shape index: {}]
  %s4 = inlined_call_operand.hbm [shape: bf16[32,128], index: 4, kind: input, shape index: {}]
  %s5 = inlined_call_operand.hbm [shape: bf16[8,128], index: 5, kind: input, shape index: {}]
  %s6 = inlined_call_operand.hbm [shape: f32[1,128], index: 6, kind: input, shape index: {}]
  %s7 = inlined_call_operand.hbm [shape: bf16[128,256], index: 7, kind: input, shape index: {}]
  %s8 = inlined_call_operand.hbm [shape: f32[1,256], index: 8, kind: input, shape index: {}]
  %s9 = inlined_call_operand.hbm [shape: bf16[256,1024], index: 9, kind: input, shape index: {}]
  %s10 = inlined_call_operand.hbm [shape: f32[1,1024], index: 10, kind: input, shape index: {}]
  %s11 = inlined_call_operand.vmem [shape: bf16[16,512], index: 11, kind: output, shape index: {0}]
  %s12 = inlined_call_operand.vmem [shape: bf16[16,512], index: 12, kind: output, shape index: {1}]
  %13 = xla_tuple %s11, %s12
  %s14 = sld [smem:[#allocation0]]
  $region102: #{decoder_forward.2} parent=0
    _
  %s16 = ssub.s32 1, %s14
  %s17 = scalar_select 0, %s16, %s14
  $region1: #{decoder_forward.2} parent=0
    #allocation2 [shape = 'u8[8192]{0}', space=vmem, size = 0x2000, scoped, tag = 'input window, operand 0, single buffered']
    #allocation3 [shape = 's32[1]{0}', space=sflag, size = 0x4, scoped, tag = 'scoped memory for decoder_forward.2']
    #allocation4 [shape = 'u8[2048]{0}', space=vmem, size = 0x800, scoped, tag = 'input window, operand 2, single buffered']
    #allocation5 [shape = 's32[1]{0}', space=sflag, size = 0x4, scoped, tag = 'scoped memory for decoder_forward.2']
    #allocation6 [shape = 'u8[512]{0}', space=vmem, size = 0x400, scoped, tag = 'input window, operand 3, single buffered']
    #allocation7 [shape = 'u8[8192]{0}', space=vmem, size = 0x2000, scoped, tag = 'input window, operand 4, single buffered']
    #allocation8 [shape = 's32[1]{0}', space=sflag, size = 0x4, scoped, tag = 'scoped memory for decoder_forward.2']
    #allocation9 [shape = 'u8[2048]{0}', space=vmem, size = 0x800, scoped, tag = 'input window, operand 5, single buffered']
    #allocation10 [shape = 'u8[512]{0}', space=vmem, size = 0x400, scoped, tag = 'input window, operand 6, single buffered']
    #allocation11 [shape = 's32[1]{0}', space=sflag, size = 0x4, scoped, tag = 'scoped memory for decoder_forward.2']
    #allocation12 [shape = 'u8[65536]{0}', space=vmem, size = 0x10000, scoped, tag = 'input window, operand 7, single buffered']
    #allocation13 [shape = 'u8[1024]{0}', space=vmem, size = 0x400, scoped, tag = 'input window, operand 8, single buffered']
    #allocation14 [shape = 's32[1]{0}', space=sflag, size = 0x4, scoped, tag = 'scoped memory for decoder_forward.2']
    #allocation15 [shape = 'u8[524288]{0}', space=vmem, size = 0x80000, scoped, tag = 'input window, operand 9, single buffered']
    #allocation16 [shape = 'u8[4096]{0}', space=vmem, size = 0x1000, scoped, tag = 'input window, operand 10, single buffered']
    #allocation17 [shape = 's32[1]{0}', space=sflag, size = 0x4, scoped, tag = 'scoped memory for decoder_forward.2']
    %18 = vsyncpa [#allocation3], 0
    %19 = vsyncpa [#allocation5], 0
    %20 = vsyncpa [#allocation8], 0
    %21 = vsyncpa [#allocation11], 0
    %22 = vsyncpa [#allocation14], 0
    %23 = vsyncpa [#allocation17], 0
    // Predicated region
    $region2: #{decoder_forward.2} parent=1 // pred_check
      _
    $region3: #{decoder_forward.2} parent=1 // pred_check_branch
      %25 = sbr.rel (0) target = $region5
    $region4: #{decoder_forward.2} parent=1 // pred_region
      %s27 = ssub.s32 256, 256
      %28 = vsyncadd [#allocation3], %s27
      %s29 = sshll.u32 [#allocation2], 4
      %s30 = int_to_ptr.vmem [resolvable:$true] %s29
      %35 = dma.hbm_to_vmem [thread:$0]  %s0, 256, %s30, [#allocation3], 128, 128, 8
    $region5: #{decoder_forward.2} parent=1 // pred_fallthru
      _
    // Predicated region
    $region6: #{decoder_forward.2} parent=1 // pred_check
      _
    $region7: #{decoder_forward.2} parent=1 // pred_check_branch
      %37 = sbr.rel (0) target = $region9
    $region8: #{decoder_forward.2} parent=1 // pred_region
      _
    $region9: #{decoder_forward.2} parent=1 // pred_fallthru
      _
    // Predicated region
    $region10: #{decoder_forward.2} parent=1 // pred_check
      _
    $region11: #{decoder_forward.2} parent=1 // pred_check_branch
      %39 = sbr.rel (0) target = $region13
    $region12: #{decoder_forward.2} parent=1 // pred_region
      %s41 = ssub.s32 64, 64
      %42 = vsyncadd [#allocation5], %s41
      %s44 = sshll.u32 [#allocation4], 4
      %s45 = int_to_ptr.vmem [resolvable:$true] %s44
      %47 = dma.hbm_to_vmem [thread:$0]  %s2, 64, %s45, [#allocation5]
    $region13: #{decoder_forward.2} parent=1 // pred_fallthru
      _
    // Predicated region
    $region14: #{decoder_forward.2} parent=1 // pred_check
      _
    $region15: #{decoder_forward.2} parent=1 // pred_check_branch
      %49 = sbr.rel (0) target = $region17
    $region16: #{decoder_forward.2} parent=1 // pred_region
      %s51 = ssub.s32 16, 16
      %52 = vsyncadd [#allocation5], %s51
      %s54 = sshll.u32 [#allocation6], 4
      %s55 = int_to_ptr.vmem [resolvable:$true] %s54
      %57 = dma.hbm_to_vmem [thread:$0]  %s3, 16, %s55, [#allocation5]
    $region17: #{decoder_forward.2} parent=1 // pred_fallthru
      _
    // Predicated region
    $region18: #{decoder_forward.2} parent=1 // pred_check
      _
    $region19: #{decoder_forward.2} parent=1 // pred_check_branch
      %59 = sbr.rel (0) target = $region21
    $region20: #{decoder_forward.2} parent=1 // pred_region
      %s61 = ssub.s32 256, 256
      %62 = vsyncadd [#allocation8], %s61
      %s63 = sshll.u32 [#allocation7], 4
      %s64 = int_to_ptr.vmem [resolvable:$true] %s63
      %69 = dma.hbm_to_vmem [thread:$0]  %s4, 256, %s64, [#allocation8], 64, 64, 4
    $region21: #{decoder_forward.2} parent=1 // pred_fallthru
      _
    // Predicated region
    $region22: #{decoder_forward.2} parent=1 // pred_check
      _
    $region23: #{decoder_forward.2} parent=1 // pred_check_branch
      %71 = sbr.rel (0) target = $region25
    $region24: #{decoder_forward.2} parent=1 // pred_region
      %s73 = ssub.s32 64, 64
      %74 = vsyncadd [#allocation8], %s73
      %s76 = sshll.u32 [#allocation9], 4
      %s77 = int_to_ptr.vmem [resolvable:$true] %s76
      %79 = dma.hbm_to_vmem [thread:$0]  %s5, 64, %s77, [#allocation8]
    $region25: #{decoder_forward.2} parent=1 // pred_fallthru
      _
    // Predicated region
    $region26: #{decoder_forward.2} parent=1 // pred_check
      _
    $region27: #{decoder_forward.2} parent=1 // pred_check_branch
      %81 = sbr.rel (0) target = $region29
    $region28: #{decoder_forward.2} parent=1 // pred_region
      %s83 = ssub.s32 16, 16
      %84 = vsyncadd [#allocation11], %s83
      %s86 = sshll.u32 [#allocation10], 4
      %s87 = int_to_ptr.vmem [resolvable:$true] %s86
      %89 = dma.hbm_to_vmem [thread:$0]  %s6, 16, %s87, [#allocation11]
    $region29: #{decoder_forward.2} parent=1 // pred_fallthru
      _
    // Predicated region
    $region30: #{decoder_forward.2} parent=1 // pred_check
      _
    $region31: #{decoder_forward.2} parent=1 // pred_check_branch
      %91 = sbr.rel (0) target = $region33
    $region32: #{decoder_forward.2} parent=1 // pred_region
      %s93 = ssub.s32 2048, 2048
      %94 = vsyncadd [#allocation11], %s93
      %s95 = sshll.u32 [#allocation12], 4
      %s96 = int_to_ptr.vmem [resolvable:$true] %s95
      %101 = dma.hbm_to_vmem [thread:$0]  %s7, 2048, %s96, [#allocation11], 128, 128, 8
    $region33: #{decoder_forward.2} parent=1 // pred_fallthru
      _
    // Predicated region
    $region34: #{decoder_forward.2} parent=1 // pred_check
      _
    $region35: #{decoder_forward.2} parent=1 // pred_check_branch
      %103 = sbr.rel (0) target = $region37
    $region36: #{decoder_forward.2} parent=1 // pred_region
      %s105 = ssub.s32 32, 32
      %106 = vsyncadd [#allocation14], %s105
      %s108 = sshll.u32 [#allocation13], 4
      %s109 = int_to_ptr.vmem [resolvable:$true] %s108
      %111 = dma.hbm_to_vmem [thread:$0]  %s8, 32, %s109, [#allocation14]
    $region37: #{decoder_forward.2} parent=1 // pred_fallthru
      _
    // Predicated region
    $region38: #{decoder_forward.2} parent=1 // pred_check
      _
    $region39: #{decoder_forward.2} parent=1 // pred_check_branch
      %113 = sbr.rel (0) target = $region41
    $region40: #{decoder_forward.2} parent=1 // pred_region
      %s115 = ssub.s32 16384, 16384
      %116 = vsyncadd [#allocation14], %s115
      %s117 = sshll.u32 [#allocation15], 4
      %s118 = int_to_ptr.vmem [resolvable:$true] %s117
      %123 = dma.hbm_to_vmem [thread:$0]  %s9, 16384, %s118, [#allocation14], 512, 512, 32
    $region41: #{decoder_forward.2} parent=1 // pred_fallthru
      _
    // Predicated region
    $region42: #{decoder_forward.2} parent=1 // pred_check
      _
    $region43: #{decoder_forward.2} parent=1 // pred_check_branch
      %125 = sbr.rel (0) target = $region45
    $region44: #{decoder_forward.2} parent=1 // pred_region
      %s127 = ssub.s32 128, 128
      %128 = vsyncadd [#allocation17], %s127
      %s130 = sshll.u32 [#allocation16], 4
      %s131 = int_to_ptr.vmem [resolvable:$true] %s130
      %133 = dma.hbm_to_vmem [thread:$0]  %s10, 128, %s131, [#allocation17]
    $region45: #{decoder_forward.2} parent=1 // pred_fallthru
      _
    // Predicated region
    $region46: #{decoder_forward.2} parent=1 // pred_check
      _
    $region47: #{decoder_forward.2} parent=1 // pred_check_branch
      %135 = sbr.rel (0) target = $region49
    $region48: #{decoder_forward.2} parent=1 // pred_region
      %136 = dma.done [#allocation3], 256
    $region49: #{decoder_forward.2} parent=1 // pred_fallthru
      _
    // Predicated region
    $region50: #{decoder_forward.2} parent=1 // pred_check
      _
    $region51: #{decoder_forward.2} parent=1 // pred_check_branch
      %138 = sbr.rel (0) target = $region53
    $region52: #{decoder_forward.2} parent=1 // pred_region
      %139 = dma.done [#allocation5], 64
    $region53: #{decoder_forward.2} parent=1 // pred_fallthru
      _
    // Predicated region
    $region54: #{decoder_forward.2} parent=1 // pred_check
      _
    $region55: #{decoder_forward.2} parent=1 // pred_check_branch
      %141 = sbr.rel (0) target = $region57
    $region56: #{decoder_forward.2} parent=1 // pred_region
      %142 = dma.done [#allocation5], 16
    $region57: #{decoder_forward.2} parent=1 // pred_fallthru
      _
    // Predicated region
    $region58: #{decoder_forward.2} parent=1 // pred_check
      _
    $region59: #{decoder_forward.2} parent=1 // pred_check_branch
      %144 = sbr.rel (0) target = $region61
    $region60: #{decoder_forward.2} parent=1 // pred_region
      %145 = dma.done [#allocation8], 256
    $region61: #{decoder_forward.2} parent=1 // pred_fallthru
      _
    // Predicated region
    $region62: #{decoder_forward.2} parent=1 // pred_check
      _
    $region63: #{decoder_forward.2} parent=1 // pred_check_branch
      %147 = sbr.rel (0) target = $region65
    $region64: #{decoder_forward.2} parent=1 // pred_region
      %148 = dma.done [#allocation8], 64
    $region65: #{decoder_forward.2} parent=1 // pred_fallthru
      _
    // Predicated region
    $region66: #{decoder_forward.2} parent=1 // pred_check
      _
    $region67: #{decoder_forward.2} parent=1 // pred_check_branch
      %150 = sbr.rel (0) target = $region69
    $region68: #{decoder_forward.2} parent=1 // pred_region
      %151 = dma.done [#allocation11], 16
    $region69: #{decoder_forward.2} parent=1 // pred_fallthru
      _
    // Predicated region
    $region70: #{decoder_forward.2} parent=1 // pred_check
      _
    $region71: #{decoder_forward.2} parent=1 // pred_check_branch
      %153 = sbr.rel (0) target = $region73
    $region72: #{decoder_forward.2} parent=1 // pred_region
      %154 = dma.done [#allocation11], 2048
    $region73: #{decoder_forward.2} parent=1 // pred_fallthru
      _
    // Predicated region
    $region74: #{decoder_forward.2} parent=1 // pred_check
      _
    $region75: #{decoder_forward.2} parent=1 // pred_check_branch
      %156 = sbr.rel (0) target = $region77
    $region76: #{decoder_forward.2} parent=1 // pred_region
      %157 = dma.done [#allocation14], 32
    $region77: #{decoder_forward.2} parent=1 // pred_fallthru
      _
    // Predicated region
    $region78: #{decoder_forward.2} parent=1 // pred_check
      _
    $region79: #{decoder_forward.2} parent=1 // pred_check_branch
      %159 = sbr.rel (0) target = $region81
    $region80: #{decoder_forward.2} parent=1 // pred_region
      %160 = dma.done [#allocation14], 16384
    $region81: #{decoder_forward.2} parent=1 // pred_fallthru
      _
    // Predicated region
    $region82: #{decoder_forward.2} parent=1 // pred_check
      _
    $region83: #{decoder_forward.2} parent=1 // pred_check_branch
      %162 = sbr.rel (0) target = $region85
    $region84: #{decoder_forward.2} parent=1 // pred_region
      %163 = dma.done [#allocation17], 128
    $region85: #{decoder_forward.2} parent=1 // pred_fallthru
      _
    %v165 = vld [vmem:[%s1] sm:$0xff]
    %v166 = vld [vmem:[%s1 + $0x8] sm:$0xff]
    %v167 = vpack.c.bf16 %v166, %v165
    %v168 = vld [vmem:[#allocation4] sm:$0xf]
    %v169 = vld [vmem:[#allocation6] sm:$0x1]
    %v171 = vlaneseq
    %v172 = vshrl.u32 %v171, 7
    %v173 = vsub.s32 0, %v172
    %v174 = vrot.slane %v169, %v173
    %vm176 = vcmask 64512
    %v178 = vsel %vm176, %v167, 0
    %vm180 = vcmask 1043456
    %v182 = vsel %vm180, %v168, 0
    %184 = vmatprep.subr.bf16.mxu0 0
    %185 = vmatpush1.bf16.msra.mxu0 0
    %186 = vmatprep.subr.bf16.mxu0 0
    %187 = vmatpush1.bf16.msra.mxu0 0
    %188 = vmatprep.subr.bf16.mxu0 0
    %189 = vmatpush1.bf16.msra.mxu0 0
    %190 = vmatprep.subr.bf16.mxu0 0
    %191 = vmatpush1.bf16.msra.mxu0 0
    %192 = vmatprep.subr.bf16.mxu0 0
    %193 = vmatpush1.bf16.msra.mxu0 0
    %194 = vmatprep.subr.bf16.mxu0 0
    %195 = vmatpush1.bf16.msra.mxu0 0
    %196 = vmatprep.subr.bf16.mxu0 0
    %197 = vmatpush1.bf16.msra.mxu0 0
    %198 = vmatprep.subr.bf16.mxu0 0
    %199 = vmatpush1.bf16.msra.mxu0 %v182
    %200 = vmatprep.subr.bf16.mxu0 0
    %201 = vmatpush2.bf16.msra.mxu0 0
    %202 = vmatprep.subr.bf16.mxu0 0
    %203 = vmatpush2.bf16.msra.mxu0 0
    %204 = vmatprep.subr.bf16.mxu0 0
    %205 = vmatpush2.bf16.msra.mxu0 0
    %206 = vmatprep.subr.bf16.mxu0 0
    %207 = vmatpush2.bf16.msra.mxu0 0
    %208 = vmatprep.subr.bf16.mxu0 0
    %209 = vmatpush2.bf16.msra.mxu0 0
    %210 = vmatprep.subr.bf16.mxu0 0
    %211 = vmatpush2.bf16.msra.mxu0 0
    %212 = vmatprep.subr.bf16.mxu0 0
    %213 = vmatpush2.bf16.msra.mxu0 0
    %214 = vmatprep.subr.bf16.mxu0 0
    %215 = vmatpush2.bf16.msra.mxu0 0
    %216 = vmatprep.mubr.bf16.mxu0 0
    %217 = vmatmul.mubr.bf16.gmra.mxu0 %v178
    %v218 = vpop.f32.mrf.mxu0
    %v219 = vadd.f32 %v174, %v218
    %v220 = vpop.f32.mrf.mxu0
    %v221 = vpop.f32.mrf.mxu0
    %v222 = vadd.f32 %v174, %v221
    %v223 = vpop.f32.mrf.mxu0
    %224 = vdwg.mxu0
    %vm225 = vcmp.gt.f32.partialorder %v219, 0.0
    %vm226 = vcmp.gt.f32.partialorder %v222, 0.0
    %v227 = vmul.f32 %v219, 1.442695
    %v228 = vpow.pop %v227
    %v229 = vmul.f32 %v222, 1.442695
    %v230 = vpow.pop %v229
    %v231 = vsub.f32 %v228, 1.0
    %v232 = vsub.f32 %v230, 1.0
    %v233 = vmul.f32 %v231, 1.6732632
    %v234 = vmul.f32 %v232, 1.6732632
    %v235 = vsel %vm225, %v219, %v233
    %v236 = vsel %vm226, %v222, %v234
    %v237 = vmul.f32 %v235, 1.050701
    %v238 = vmul.f32 %v236, 1.050701
    %v239 = vld [vmem:[#allocation2] sm:$0xff]
    %v240 = vld [vmem:[#allocation2 + $0x8] sm:$0xff]
    %v241 = vpack.c.bf16 %v240, %v239
    %v242 = vld [vmem:[#allocation7] sm:$0xf]
    %v243 = vld [vmem:[#allocation7 + $0x4] sm:$0xf]
    %v244 = vld [vmem:[#allocation7 + $0x8] sm:$0xf]
    %v245 = vld [vmem:[#allocation7 + $0xc] sm:$0xf]
    %v246 = vpack.c.bf16 %v238, %v237
    %v247 = vld [vmem:[#allocation9] sm:$0xf]
    %v249 = vsel %vm176, %v246, 0
    %v252 = vsel %vm180, %v247, 0
    %254 = vmatprep.subr.bf16.mxu0 0
    %255 = vmatpush1.bf16.msra.mxu0 0
    %256 = vmatprep.subr.bf16.mxu0 0
    %257 = vmatpush1.bf16.msra.mxu0 0
    %258 = vmatprep.subr.bf16.mxu0 0
    %259 = vmatpush1.bf16.msra.mxu0 0
    %260 = vmatprep.subr.bf16.mxu0 0
    %261 = vmatpush1.bf16.msra.mxu0 0
    %262 = vmatprep.subr.bf16.mxu0 0
    %263 = vmatpush1.bf16.msra.mxu0 0
    %264 = vmatprep.subr.bf16.mxu0 0
    %265 = vmatpush1.bf16.msra.mxu0 0
    %266 = vmatprep.subr.bf16.mxu0 0
    %267 = vmatpush1.bf16.msra.mxu0 0
    %268 = vmatprep.subr.bf16.mxu0 0
    %269 = vmatpush1.bf16.msra.mxu0 %v252
    %270 = vmatprep.subr.bf16.mxu0 0
    %271 = vmatpush2.bf16.msra.mxu0 0
    %272 = vmatprep.subr.bf16.mxu0 0
    %273 = vmatpush2.bf16.msra.mxu0 0
    %274 = vmatprep.subr.bf16.mxu0 0
    %275 = vmatpush2.bf16.msra.mxu0 0
    %276 = vmatprep.subr.bf16.mxu0 0
    %277 = vmatpush2.bf16.msra.mxu0 0
    %278 = vmatprep.subr.bf16.mxu0 0
    %279 = vmatpush2.bf16.msra.mxu0 0
    %280 = vmatprep.subr.bf16.mxu0 0
    %281 = vmatpush2.bf16.msra.mxu0 0
    %282 = vmatprep.subr.bf16.mxu0 0
    %283 = vmatpush2.bf16.msra.mxu0 0
    %284 = vmatprep.subr.bf16.mxu0 0
    %285 = vmatpush2.bf16.msra.mxu0 0
    %286 = vmatprep.mubr.bf16.mxu0 0
    %287 = vmatmul.mubr.bf16.gmra.mxu0 %v249
    %v288 = vpop.f32.mrf.mxu0
    %v289 = vadd.f32 0.0, %v288
    %v290 = vpop.f32.mrf.mxu0
    %v291 = vpop.f32.mrf.mxu0
    %v292 = vadd.f32 0.0, %v291
    %v293 = vpop.f32.mrf.mxu0
    %294 = vdwg.mxu0
    %v299 = vunpack.c.l.b16 %v242
    %v300 = vunpack.c.l.b16 %v243
    %v301 = vunpack.c.l.b16 %v244
    %v302 = vunpack.c.l.b16 %v245
    %v303 = vpack.c.b16 %v300, %v299
    %v304 = vpack.c.b16 %v302, %v301
    %vm307 = vcmask 261120
    %v309 = vsel %vm307, %v241, 0
    %311 = vmatprep.subr.bf16.mxu0 0
    %312 = vmatpush1.bf16.msra.mxu0 0
    %313 = vmatprep.subr.bf16.mxu0 0
    %314 = vmatpush1.bf16.msra.mxu0 0
    %315 = vmatprep.subr.bf16.mxu0 0
    %316 = vmatpush1.bf16.msra.mxu0 0
    %317 = vmatprep.subr.bf16.mxu0 0
    %318 = vmatpush1.bf16.msra.mxu0 0
    %319 = vmatprep.subr.bf16.mxu0 0
    %320 = vmatpush1.bf16.msra.mxu0 0
    %321 = vmatprep.subr.bf16.mxu0 0
    %322 = vmatpush1.bf16.msra.mxu0 0
    %323 = vmatprep.subr.bf16.mxu0 0
    %324 = vmatpush1.bf16.msra.mxu0 %v304
    %325 = vmatprep.subr.bf16.mxu0 0
    %326 = vmatpush1.bf16.msra.mxu0 %v303
    %327 = vmatprep.subr.bf16.mxu0 0
    %328 = vmatpush2.bf16.msra.mxu0 0
    %329 = vmatprep.subr.bf16.mxu0 0
    %330 = vmatpush2.bf16.msra.mxu0 0
    %331 = vmatprep.subr.bf16.mxu0 0
    %332 = vmatpush2.bf16.msra.mxu0 0
    %333 = vmatprep.subr.bf16.mxu0 0
    %334 = vmatpush2.bf16.msra.mxu0 0
    %335 = vmatprep.subr.bf16.mxu0 0
    %336 = vmatpush2.bf16.msra.mxu0 0
    %337 = vmatprep.subr.bf16.mxu0 0
    %338 = vmatpush2.bf16.msra.mxu0 0
    %339 = vmatprep.subr.bf16.mxu0 0
    %340 = vmatpush2.bf16.msra.mxu0 0
    %341 = vmatprep.subr.bf16.mxu0 0
    %342 = vmatpush2.bf16.msra.mxu0 0
    %343 = vmatprep.mubr.bf16.mxu0 0
    %344 = vmatmul.mubr.bf16.gmra.mxu0 %v309
    %v345 = vpop.f32.mrf.mxu0
    %v346 = vadd.f32 %v289, %v345
    %v347 = vpop.f32.mrf.mxu0
    %v348 = vpop.f32.mrf.mxu0
    %v349 = vadd.f32 %v292, %v348
    %v350 = vpop.f32.mrf.mxu0
    %351 = vdwg.mxu0
    %v352 = vld [vmem:[#allocation10] sm:$0x1]
    %v354 = vlaneseq
    %v355 = vshrl.u32 %v354, 7
    %v356 = vsub.s32 0, %v355
    %v357 = vrot.slane %v352, %v356
    %v359 = vadd.f32 %v346, %v357
    %v360 = vadd.f32 %v349, %v357
    %vm361 = vcmp.gt.f32.partialorder %v359, 0.0
    %vm362 = vcmp.gt.f32.partialorder %v360, 0.0
    %v363 = vmul.f32 %v359, 1.442695
    %v364 = vpow.pop %v363
    %v365 = vmul.f32 %v360, 1.442695
    %v366 = vpow.pop %v365
    %v367 = vsub.f32 %v364, 1.0
    %v368 = vsub.f32 %v366, 1.0
    %v369 = vmul.f32 %v367, 1.6732632
    %v370 = vmul.f32 %v368, 1.6732632
    %v371 = vsel %vm361, %v359, %v369
    %v372 = vsel %vm362, %v360, %v370
    %v373 = vmul.f32 %v371, 1.050701
    %v374 = vmul.f32 %v372, 1.050701
    %v375 = vpack.c.bf16 %v374, %v373
    %v376 = vld [vmem:[#allocation12] sm:$0xff]
    %v377 = vld [vmem:[#allocation12 + $0x8] sm:$0xff]
    %v378 = vld [vmem:[#allocation12 + $0x10] sm:$0xff]
    %v379 = vld [vmem:[#allocation12 + $0x18] sm:$0xff]
    %v380 = vld [vmem:[#allocation12 + $0x20] sm:$0xff]
    %v381 = vld [vmem:[#allocation12 + $0x28] sm:$0xff]
    %v382 = vld [vmem:[#allocation12 + $0x30] sm:$0xff]
    %v383 = vld [vmem:[#allocation12 + $0x38] sm:$0xff]
    %v384 = vld [vmem:[#allocation12 + $0x40] sm:$0xff]
    %v385 = vld [vmem:[#allocation12 + $0x48] sm:$0xff]
    %v386 = vld [vmem:[#allocation12 + $0x50] sm:$0xff]
    %v387 = vld [vmem:[#allocation12 + $0x58] sm:$0xff]
    %v388 = vld [vmem:[#allocation12 + $0x60] sm:$0xff]
    %v389 = vld [vmem:[#allocation12 + $0x68] sm:$0xff]
    %v390 = vld [vmem:[#allocation12 + $0x70] sm:$0xff]
    %v391 = vld [vmem:[#allocation12 + $0x78] sm:$0xff]
    %v392 = vld [vmem:[#allocation13] sm:$0x3]
    %v394 = vlaneseq
    %v395 = vshrl.u32 %v394, 7
    %v396 = vsub.s32 0, %v395
    %v397 = vrot.slane %v392, %v396
    %v398 = vlaneseq
    %v399 = vshrl.u32 %v398, 7
    %v400 = vsub.s32 1, %v399
    %v401 = vrot.slane %v392, %v400
    %v420 = vunpack.c.l.b16 %v376
    %v421 = vunpack.c.h.b16 %v376
    %v422 = vunpack.c.l.b16 %v377
    %v423 = vunpack.c.h.b16 %v377
    %v424 = vunpack.c.l.b16 %v378
    %v425 = vunpack.c.h.b16 %v378
    %v426 = vunpack.c.l.b16 %v379
    %v427 = vunpack.c.h.b16 %v379
    %v428 = vunpack.c.l.b16 %v380
    %v429 = vunpack.c.h.b16 %v380
    %v430 = vunpack.c.l.b16 %v381
    %v431 = vunpack.c.h.b16 %v381
    %v432 = vunpack.c.l.b16 %v382
    %v433 = vunpack.c.h.b16 %v382
    %v434 = vunpack.c.l.b16 %v383
    %v435 = vunpack.c.h.b16 %v383
    %v436 = vunpack.c.l.b16 %v384
    %v437 = vunpack.c.h.b16 %v384
    %v438 = vunpack.c.l.b16 %v385
    %v439 = vunpack.c.h.b16 %v385
    %v440 = vunpack.c.l.b16 %v386
    %v441 = vunpack.c.h.b16 %v386
    %v442 = vunpack.c.l.b16 %v387
    %v443 = vunpack.c.h.b16 %v387
    %v444 = vunpack.c.l.b16 %v388
    %v445 = vunpack.c.h.b16 %v388
    %v446 = vunpack.c.l.b16 %v389
    %v447 = vunpack.c.h.b16 %v389
    %v448 = vunpack.c.l.b16 %v390
    %v449 = vunpack.c.h.b16 %v390
    %v450 = vunpack.c.l.b16 %v391
    %v451 = vunpack.c.h.b16 %v391
    %v452 = vpack.c.b16 %v422, %v420
    %v453 = vpack.c.b16 %v423, %v421
    %v454 = vpack.c.b16 %v426, %v424
    %v455 = vpack.c.b16 %v427, %v425
    %v456 = vpack.c.b16 %v430, %v428
    %v457 = vpack.c.b16 %v431, %v429
    %v458 = vpack.c.b16 %v434, %v432
    %v459 = vpack.c.b16 %v435, %v433
    %v460 = vpack.c.b16 %v438, %v436
    %v461 = vpack.c.b16 %v439, %v437
    %v462 = vpack.c.b16 %v442, %v440
    %v463 = vpack.c.b16 %v443, %v441
    %v464 = vpack.c.b16 %v446, %v444
    %v465 = vpack.c.b16 %v447, %v445
    %v466 = vpack.c.b16 %v450, %v448
    %v467 = vpack.c.b16 %v451, %v449
    %484 = vmatprep.subr.bf16.mxu0 %v467
    %485 = vmatpush1.bf16.msra.mxu0 %v466
    %486 = vmatprep.subr.bf16.mxu0 %v465
    %487 = vmatpush1.bf16.msra.mxu0 %v464
    %488 = vmatprep.subr.bf16.mxu0 %v463
    %489 = vmatpush1.bf16.msra.mxu0 %v462
    %490 = vmatprep.subr.bf16.mxu0 %v461
    %491 = vmatpush1.bf16.msra.mxu0 %v460
    %492 = vmatprep.subr.bf16.mxu0 %v459
    %493 = vmatpush1.bf16.msra.mxu0 %v458
    %494 = vmatprep.subr.bf16.mxu0 %v457
    %495 = vmatpush1.bf16.msra.mxu0 %v456
    %496 = vmatprep.subr.bf16.mxu0 %v455
    %497 = vmatpush1.bf16.msra.mxu0 %v454
    %498 = vmatprep.subr.bf16.mxu0 %v453
    %499 = vmatpush1.bf16.msra.mxu0 %v452
    %500 = vmatprep.subr.bf16.mxu0 0
    %501 = vmatpush2.bf16.msra.mxu0 0
    %502 = vmatprep.subr.bf16.mxu0 0
    %503 = vmatpush2.bf16.msra.mxu0 0
    %504 = vmatprep.subr.bf16.mxu0 0
    %505 = vmatpush2.bf16.msra.mxu0 0
    %506 = vmatprep.subr.bf16.mxu0 0
    %507 = vmatpush2.bf16.msra.mxu0 0
    %508 = vmatprep.subr.bf16.mxu0 0
    %509 = vmatpush2.bf16.msra.mxu0 0
    %510 = vmatprep.subr.bf16.mxu0 0
    %511 = vmatpush2.bf16.msra.mxu0 0
    %512 = vmatprep.subr.bf16.mxu0 0
    %513 = vmatpush2.bf16.msra.mxu0 0
    %514 = vmatprep.subr.bf16.mxu0 0
    %515 = vmatpush2.bf16.msra.mxu0 0
    %516 = vmatprep.mubr.bf16.mxu0 0
    %517 = vmatmul.mubr.bf16.gmra.mxu0 %v375
    %v518 = vpop.f32.mrf.mxu0
    %v519 = vadd.f32 %v397, %v518
    %v520 = vpop.f32.mrf.mxu0
    %v521 = vadd.f32 %v401, %v520
    %v522 = vpop.f32.mrf.mxu0
    %v523 = vadd.f32 %v397, %v522
    %v524 = vpop.f32.mrf.mxu0
    %v525 = vadd.f32 %v401, %v524
    %526 = vdwg.mxu0
    %vm527 = vcmp.gt.f32.partialorder %v519, 0.0
    %vm528 = vcmp.gt.f32.partialorder %v521, 0.0
    %vm529 = vcmp.gt.f32.partialorder %v523, 0.0
    %vm530 = vcmp.gt.f32.partialorder %v525, 0.0
    %v531 = vmul.f32 %v519, 1.442695
    %v532 = vpow.pop %v531
    %v533 = vmul.f32 %v521, 1.442695
    %v534 = vpow.pop %v533
    %v535 = vmul.f32 %v523, 1.442695
    %v536 = vpow.pop %v535
    %v537 = vmul.f32 %v525, 1.442695
    %v538 = vpow.pop %v537
    %v539 = vsub.f32 %v532, 1.0
    %v540 = vsub.f32 %v534, 1.0
    %v541 = vsub.f32 %v536, 1.0
    %v542 = vsub.f32 %v538, 1.0
    %v543 = vmul.f32 %v539, 1.6732632
    %v544 = vmul.f32 %v540, 1.6732632
    %v545 = vmul.f32 %v541, 1.6732632
    %v546 = vmul.f32 %v542, 1.6732632
    %v547 = vsel %vm527, %v519, %v543
    %v548 = vsel %vm528, %v521, %v544
    %v549 = vsel %vm529, %v523, %v545
    %v550 = vsel %vm530, %v525, %v546
    %v551 = vmul.f32 %v547, 1.050701
    %v552 = vmul.f32 %v548, 1.050701
    %v553 = vmul.f32 %v549, 1.050701
    %v554 = vmul.f32 %v550, 1.050701
    %v555 = vpack.c.bf16 %v553, %v551
    %v556 = vpack.c.bf16 %v554, %v552
    %v557 = vld [vmem:[#allocation15] sm:$0xff]
    %v558 = vld [vmem:[#allocation15 + $0x8] sm:$0xff]
    %v559 = vld [vmem:[#allocation15 + $0x10] sm:$0xff]
    %v560 = vld [vmem:[#allocation15 + $0x18] sm:$0xff]
    %v561 = vld [vmem:[#allocation15 + $0x20] sm:$0xff]
    %v562 = vld [vmem:[#allocation15 + $0x28] sm:$0xff]
    %v563 = vld [vmem:[#allocation15 + $0x30] sm:$0xff]
    %v564 = vld [vmem:[#allocation15 + $0x38] sm:$0xff]
    %v565 = vld [vmem:[#allocation15 + $0x40] sm:$0xff]
    %v566 = vld [vmem:[#allocation15 + $0x48] sm:$0xff]
    %v567 = vld [vmem:[#allocation15 + $0x50] sm:$0xff]
    %v568 = vld [vmem:[#allocation15 + $0x58] sm:$0xff]
    %v569 = vld [vmem:[#allocation15 + $0x60] sm:$0xff]
    %v570 = vld [vmem:[#allocation15 + $0x68] sm:$0xff]
    %v571 = vld [vmem:[#allocation15 + $0x70] sm:$0xff]
    %v572 = vld [vmem:[#allocation15 + $0x78] sm:$0xff]
    %v573 = vld [vmem:[#allocation15 + $0x80] sm:$0xff]
    %v574 = vld [vmem:[#allocation15 + $0x88] sm:$0xff]
    %v575 = vld [vmem:[#allocation15 + $0x90] sm:$0xff]
    %v576 = vld [vmem:[#allocation15 + $0x98] sm:$0xff]
    %v577 = vld [vmem:[#allocation15 + $0xa0] sm:$0xff]
    %v578 = vld [vmem:[#allocation15 + $0xa8] sm:$0xff]
    %v579 = vld [vmem:[#allocation15 + $0xb0] sm:$0xff]
    %v580 = vld [vmem:[#allocation15 + $0xb8] sm:$0xff]
    %v581 = vld [vmem:[#allocation15 + $0xc0] sm:$0xff]
    %v582 = vld [vmem:[#allocation15 + $0xc8] sm:$0xff]
    %v583 = vld [vmem:[#allocation15 + $0xd0] sm:$0xff]
    %v584 = vld [vmem:[#allocation15 + $0xd8] sm:$0xff]
    %v585 = vld [vmem:[#allocation15 + $0xe0] sm:$0xff]
    %v586 = vld [vmem:[#allocation15 + $0xe8] sm:$0xff]
    %v587 = vld [vmem:[#allocation15 + $0xf0] sm:$0xff]
    %v588 = vld [vmem:[#allocation15 + $0xf8] sm:$0xff]
    %v589 = vld [vmem:[#allocation15 + $0x100] sm:$0xff]
    %v590 = vld [vmem:[#allocation15 + $0x108] sm:$0xff]
    %v591 = vld [vmem:[#allocation15 + $0x110] sm:$0xff]
    %v592 = vld [vmem:[#allocation15 + $0x118] sm:$0xff]
    %v593 = vld [vmem:[#allocation15 + $0x120] sm:$0xff]
    %v594 = vld [vmem:[#allocation15 + $0x128] sm:$0xff]
    %v595 = vld [vmem:[#allocation15 + $0x130] sm:$0xff]
    %v596 = vld [vmem:[#allocation15 + $0x138] sm:$0xff]
    %v597 = vld [vmem:[#allocation15 + $0x140] sm:$0xff]
    %v598 = vld [vmem:[#allocation15 + $0x148] sm:$0xff]
    %v599 = vld [vmem:[#allocation15 + $0x150] sm:$0xff]
    %v600 = vld [vmem:[#allocation15 + $0x158] sm:$0xff]
    %v601 = vld [vmem:[#allocation15 + $0x160] sm:$0xff]
    %v602 = vld [vmem:[#allocation15 + $0x168] sm:$0xff]
    %v603 = vld [vmem:[#allocation15 + $0x170] sm:$0xff]
    %v604 = vld [vmem:[#allocation15 + $0x178] sm:$0xff]
    %v605 = vld [vmem:[#allocation15 + $0x180] sm:$0xff]
    %v606 = vld [vmem:[#allocation15 + $0x188] sm:$0xff]
    %v607 = vld [vmem:[#allocation15 + $0x190] sm:$0xff]
    %v608 = vld [vmem:[#allocation15 + $0x198] sm:$0xff]
    %v609 = vld [vmem:[#allocation15 + $0x1a0] sm:$0xff]
    %v610 = vld [vmem:[#allocation15 + $0x1a8] sm:$0xff]
    %v611 = vld [vmem:[#allocation15 + $0x1b0] sm:$0xff]
    %v612 = vld [vmem:[#allocation15 + $0x1b8] sm:$0xff]
    %v613 = vld [vmem:[#allocation15 + $0x1c0] sm:$0xff]
    %v614 = vld [vmem:[#allocation15 + $0x1c8] sm:$0xff]
    %v615 = vld [vmem:[#allocation15 + $0x1d0] sm:$0xff]
    %v616 = vld [vmem:[#allocation15 + $0x1d8] sm:$0xff]
    %v617 = vld [vmem:[#allocation15 + $0x1e0] sm:$0xff]
    %v618 = vld [vmem:[#allocation15 + $0x1e8] sm:$0xff]
    %v619 = vld [vmem:[#allocation15 + $0x1f0] sm:$0xff]
    %v620 = vld [vmem:[#allocation15 + $0x1f8] sm:$0xff]
    %v621 = vld [vmem:[#allocation15 + $0x200] sm:$0xff]
    %v622 = vld [vmem:[#allocation15 + $0x208] sm:$0xff]
    %v623 = vld [vmem:[#allocation15 + $0x210] sm:$0xff]
    %v624 = vld [vmem:[#allocation15 + $0x218] sm:$0xff]
    %v625 = vld [vmem:[#allocation15 + $0x220] sm:$0xff]
    %v626 = vld [vmem:[#allocation15 + $0x228] sm:$0xff]
    %v627 = vld [vmem:[#allocation15 + $0x230] sm:$0xff]
    %v628 = vld [vmem:[#allocation15 + $0x238] sm:$0xff]
    %v629 = vld [vmem:[#allocation15 + $0x240] sm:$0xff]
    %v630 = vld [vmem:[#allocation15 + $0x248] sm:$0xff]
    %v631 = vld [vmem:[#allocation15 + $0x250] sm:$0xff]
    %v632 = vld [vmem:[#allocation15 + $0x258] sm:$0xff]
    %v633 = vld [vmem:[#allocation15 + $0x260] sm:$0xff]
    %v634 = vld [vmem:[#allocation15 + $0x268] sm:$0xff]
    %v635 = vld [vmem:[#allocation15 + $0x270] sm:$0xff]
    %v636 = vld [vmem:[#allocation15 + $0x278] sm:$0xff]
    %v637 = vld [vmem:[#allocation15 + $0x280] sm:$0xff]
    %v638 = vld [vmem:[#allocation15 + $0x288] sm:$0xff]
    %v639 = vld [vmem:[#allocation15 + $0x290] sm:$0xff]
    %v640 = vld [vmem:[#allocation15 + $0x298] sm:$0xff]
    %v641 = vld [vmem:[#allocation15 + $0x2a0] sm:$0xff]
    %v642 = vld [vmem:[#allocation15 + $0x2a8] sm:$0xff]
    %v643 = vld [vmem:[#allocation15 + $0x2b0] sm:$0xff]
    %v644 = vld [vmem:[#allocation15 + $0x2b8] sm:$0xff]
    %v645 = vld [vmem:[#allocation15 + $0x2c0] sm:$0xff]
    %v646 = vld [vmem:[#allocation15 + $0x2c8] sm:$0xff]
    %v647 = vld [vmem:[#allocation15 + $0x2d0] sm:$0xff]
    %v648 = vld [vmem:[#allocation15 + $0x2d8] sm:$0xff]
    %v649 = vld [vmem:[#allocation15 + $0x2e0] sm:$0xff]
    %v650 = vld [vmem:[#allocation15 + $0x2e8] sm:$0xff]
    %v651 = vld [vmem:[#allocation15 + $0x2f0] sm:$0xff]
    %v652 = vld [vmem:[#allocation15 + $0x2f8] sm:$0xff]
    %v653 = vld [vmem:[#allocation15 + $0x300] sm:$0xff]
    %v654 = vld [vmem:[#allocation15 + $0x308] sm:$0xff]
    %v655 = vld [vmem:[#allocation15 + $0x310] sm:$0xff]
    %v656 = vld [vmem:[#allocation15 + $0x318] sm:$0xff]
    %v657 = vld [vmem:[#allocation15 + $0x320] sm:$0xff]
    %v658 = vld [vmem:[#allocation15 + $0x328] sm:$0xff]
    %v659 = vld [vmem:[#allocation15 + $0x330] sm:$0xff]
    %v660 = vld [vmem:[#allocation15 + $0x338] sm:$0xff]
    %v661 = vld [vmem:[#allocation15 + $0x340] sm:$0xff]
    %v662 = vld [vmem:[#allocation15 + $0x348] sm:$0xff]
    %v663 = vld [vmem:[#allocation15 + $0x350] sm:$0xff]
    %v664 = vld [vmem:[#allocation15 + $0x358] sm:$0xff]
    %v665 = vld [vmem:[#allocation15 + $0x360] sm:$0xff]
    %v666 = vld [vmem:[#allocation15 + $0x368] sm:$0xff]
    %v667 = vld [vmem:[#allocation15 + $0x370] sm:$0xff]
    %v668 = vld [vmem:[#allocation15 + $0x378] sm:$0xff]
    %v669 = vld [vmem:[#allocation15 + $0x380] sm:$0xff]
    %v670 = vld [vmem:[#allocation15 + $0x388] sm:$0xff]
    %v671 = vld [vmem:[#allocation15 + $0x390] sm:$0xff]
    %v672 = vld [vmem:[#allocation15 + $0x398] sm:$0xff]
    %v673 = vld [vmem:[#allocation15 + $0x3a0] sm:$0xff]
    %v674 = vld [vmem:[#allocation15 + $0x3a8] sm:$0xff]
    %v675 = vld [vmem:[#allocation15 + $0x3b0] sm:$0xff]
    %v676 = vld [vmem:[#allocation15 + $0x3b8] sm:$0xff]
    %v677 = vld [vmem:[#allocation15 + $0x3c0] sm:$0xff]
    %v678 = vld [vmem:[#allocation15 + $0x3c8] sm:$0xff]
    %v679 = vld [vmem:[#allocation15 + $0x3d0] sm:$0xff]
    %v680 = vld [vmem:[#allocation15 + $0x3d8] sm:$0xff]
    %v681 = vld [vmem:[#allocation15 + $0x3e0] sm:$0xff]
    %v682 = vld [vmem:[#allocation15 + $0x3e8] sm:$0xff]
    %v683 = vld [vmem:[#allocation15 + $0x3f0] sm:$0xff]
    %v684 = vld [vmem:[#allocation15 + $0x3f8] sm:$0xff]
    %v685 = vld [vmem:[#allocation16] sm:$0xff]
    %v687 = vlaneseq
    %v688 = vshrl.u32 %v687, 7
    %v689 = vsub.s32 0, %v688
    %v690 = vrot.slane %v685, %v689
    %v691 = vlaneseq
    %v692 = vshrl.u32 %v691, 7
    %v693 = vsub.s32 1, %v692
    %v694 = vrot.slane %v685, %v693
    %v695 = vlaneseq
    %v696 = vshrl.u32 %v695, 7
    %v697 = vsub.s32 2, %v696
    %v698 = vrot.slane %v685, %v697
    %v699 = vlaneseq
    %v700 = vshrl.u32 %v699, 7
    %v701 = vsub.s32 3, %v700
    %v702 = vrot.slane %v685, %v701
    %v703 = vlaneseq
    %v704 = vshrl.u32 %v703, 7
    %v705 = vsub.s32 4, %v704
    %v706 = vrot.slane %v685, %v705
    %v707 = vlaneseq
    %v708 = vshrl.u32 %v707, 7
    %v709 = vsub.s32 5, %v708
    %v710 = vrot.slane %v685, %v709
    %v711 = vlaneseq
    %v712 = vshrl.u32 %v711, 7
    %v713 = vsub.s32 6, %v712
    %v714 = vrot.slane %v685, %v713
    %v715 = vlaneseq
    %v716 = vshrl.u32 %v715, 7
    %v717 = vsub.s32 7, %v716
    %v718 = vrot.slane %v685, %v717
    %v855 = vunpack.c.l.b16 %v557
    %v856 = vunpack.c.h.b16 %v557
    %v857 = vunpack.c.l.b16 %v558
    %v858 = vunpack.c.h.b16 %v558
    %v859 = vunpack.c.l.b16 %v559
    %v860 = vunpack.c.h.b16 %v559
    %v861 = vunpack.c.l.b16 %v560
    %v862 = vunpack.c.h.b16 %v560
    %v863 = vunpack.c.l.b16 %v561
    %v864 = vunpack.c.h.b16 %v561
    %v865 = vunpack.c.l.b16 %v562
    %v866 = vunpack.c.h.b16 %v562
    %v867 = vunpack.c.l.b16 %v563
    %v868 = vunpack.c.h.b16 %v563
    %v869 = vunpack.c.l.b16 %v564
    %v870 = vunpack.c.h.b16 %v564
    %v871 = vunpack.c.l.b16 %v565
    %v872 = vunpack.c.h.b16 %v565
    %v873 = vunpack.c.l.b16 %v566
    %v874 = vunpack.c.h.b16 %v566
    %v875 = vunpack.c.l.b16 %v567
    %v876 = vunpack.c.h.b16 %v567
    %v877 = vunpack.c.l.b16 %v568
    %v878 = vunpack.c.h.b16 %v568
    %v879 = vunpack.c.l.b16 %v569
    %v880 = vunpack.c.h.b16 %v569
    %v881 = vunpack.c.l.b16 %v570
    %v882 = vunpack.c.h.b16 %v570
    %v883 = vunpack.c.l.b16 %v571
    %v884 = vunpack.c.h.b16 %v571
    %v885 = vunpack.c.l.b16 %v572
    %v886 = vunpack.c.h.b16 %v572
    %v887 = vunpack.c.l.b16 %v573
    %v888 = vunpack.c.h.b16 %v573
    %v889 = vunpack.c.l.b16 %v574
    %v890 = vunpack.c.h.b16 %v574
    %v891 = vunpack.c.l.b16 %v575
    %v892 = vunpack.c.h.b16 %v575
    %v893 = vunpack.c.l.b16 %v576
    %v894 = vunpack.c.h.b16 %v576
    %v895 = vunpack.c.l.b16 %v577
    %v896 = vunpack.c.h.b16 %v577
    %v897 = vunpack.c.l.b16 %v578
    %v898 = vunpack.c.h.b16 %v578
    %v899 = vunpack.c.l.b16 %v579
    %v900 = vunpack.c.h.b16 %v579
    %v901 = vunpack.c.l.b16 %v580
    %v902 = vunpack.c.h.b16 %v580
    %v903 = vunpack.c.l.b16 %v581
    %v904 = vunpack.c.h.b16 %v581
    %v905 = vunpack.c.l.b16 %v582
    %v906 = vunpack.c.h.b16 %v582
    %v907 = vunpack.c.l.b16 %v583
    %v908 = vunpack.c.h.b16 %v583
    %v909 = vunpack.c.l.b16 %v584
    %v910 = vunpack.c.h.b16 %v584
    %v911 = vunpack.c.l.b16 %v585
    %v912 = vunpack.c.h.b16 %v585
    %v913 = vunpack.c.l.b16 %v586
    %v914 = vunpack.c.h.b16 %v586
    %v915 = vunpack.c.l.b16 %v587
    %v916 = vunpack.c.h.b16 %v587
    %v917 = vunpack.c.l.b16 %v588
    %v918 = vunpack.c.h.b16 %v588
    %v919 = vunpack.c.l.b16 %v589
    %v920 = vunpack.c.h.b16 %v589
    %v921 = vunpack.c.l.b16 %v590
    %v922 = vunpack.c.h.b16 %v590
    %v923 = vunpack.c.l.b16 %v591
    %v924 = vunpack.c.h.b16 %v591
    %v925 = vunpack.c.l.b16 %v592
    %v926 = vunpack.c.h.b16 %v592
    %v927 = vunpack.c.l.b16 %v593
    %v928 = vunpack.c.h.b16 %v593
    %v929 = vunpack.c.l.b16 %v594
    %v930 = vunpack.c.h.b16 %v594
    %v931 = vunpack.c.l.b16 %v595
    %v932 = vunpack.c.h.b16 %v595
    %v933 = vunpack.c.l.b16 %v596
    %v934 = vunpack.c.h.b16 %v596
    %v935 = vunpack.c.l.b16 %v597
    %v936 = vunpack.c.h.b16 %v597
    %v937 = vunpack.c.l.b16 %v598
    %v938 = vunpack.c.h.b16 %v598
    %v939 = vunpack.c.l.b16 %v599
    %v940 = vunpack.c.h.b16 %v599
    %v941 = vunpack.c.l.b16 %v600
    %v942 = vunpack.c.h.b16 %v600
    %v943 = vunpack.c.l.b16 %v601
    %v944 = vunpack.c.h.b16 %v601
    %v945 = vunpack.c.l.b16 %v602
    %v946 = vunpack.c.h.b16 %v602
    %v947 = vunpack.c.l.b16 %v603
    %v948 = vunpack.c.h.b16 %v603
    %v949 = vunpack.c.l.b16 %v604
    %v950 = vunpack.c.h.b16 %v604
    %v951 = vunpack.c.l.b16 %v605
    %v952 = vunpack.c.h.b16 %v605
    %v953 = vunpack.c.l.b16 %v606
    %v954 = vunpack.c.h.b16 %v606
    %v955 = vunpack.c.l.b16 %v607
    %v956 = vunpack.c.h.b16 %v607
    %v957 = vunpack.c.l.b16 %v608
    %v958 = vunpack.c.h.b16 %v608
    %v959 = vunpack.c.l.b16 %v609
    %v960 = vunpack.c.h.b16 %v609
    %v961 = vunpack.c.l.b16 %v610
    %v962 = vunpack.c.h.b16 %v610
    %v963 = vunpack.c.l.b16 %v611
    %v964 = vunpack.c.h.b16 %v611
    %v965 = vunpack.c.l.b16 %v612
    %v966 = vunpack.c.h.b16 %v612
    %v967 = vunpack.c.l.b16 %v613
    %v968 = vunpack.c.h.b16 %v613
    %v969 = vunpack.c.l.b16 %v614
    %v970 = vunpack.c.h.b16 %v614
    %v971 = vunpack.c.l.b16 %v615
    %v972 = vunpack.c.h.b16 %v615
    %v973 = vunpack.c.l.b16 %v616
    %v974 = vunpack.c.h.b16 %v616
    %v975 = vunpack.c.l.b16 %v617
    %v976 = vunpack.c.h.b16 %v617
    %v977 = vunpack.c.l.b16 %v618
    %v978 = vunpack.c.h.b16 %v618
    %v979 = vunpack.c.l.b16 %v619
    %v980 = vunpack.c.h.b16 %v619
    %v981 = vunpack.c.l.b16 %v620
    %v982 = vunpack.c.h.b16 %v620
    %v983 = vunpack.c.l.b16 %v621
    %v984 = vunpack.c.h.b16 %v621
    %v985 = vunpack.c.l.b16 %v622
    %v986 = vunpack.c.h.b16 %v622
    %v987 = vunpack.c.l.b16 %v623
    %v988 = vunpack.c.h.b16 %v623
    %v989 = vunpack.c.l.b16 %v624
    %v990 = vunpack.c.h.b16 %v624
    %v991 = vunpack.c.l.b16 %v625
    %v992 = vunpack.c.h.b16 %v625
    %v993 = vunpack.c.l.b16 %v626
    %v994 = vunpack.c.h.b16 %v626
    %v995 = vunpack.c.l.b16 %v627
    %v996 = vunpack.c.h.b16 %v627
    %v997 = vunpack.c.l.b16 %v628
    %v998 = vunpack.c.h.b16 %v628
    %v999 = vunpack.c.l.b16 %v629
    %v1000 = vunpack.c.h.b16 %v629
    %v1001 = vunpack.c.l.b16 %v630
    %v1002 = vunpack.c.h.b16 %v630
    %v1003 = vunpack.c.l.b16 %v631
    %v1004 = vunpack.c.h.b16 %v631
    %v1005 = vunpack.c.l.b16 %v632
    %v1006 = vunpack.c.h.b16 %v632
    %v1007 = vunpack.c.l.b16 %v633
    %v1008 = vunpack.c.h.b16 %v633
    %v1009 = vunpack.c.l.b16 %v634
    %v1010 = vunpack.c.h.b16 %v634
    %v1011 = vunpack.c.l.b16 %v635
    %v1012 = vunpack.c.h.b16 %v635
    %v1013 = vunpack.c.l.b16 %v636
    %v1014 = vunpack.c.h.b16 %v636
    %v1015 = vunpack.c.l.b16 %v637
    %v1016 = vunpack.c.h.b16 %v637
    %v1017 = vunpack.c.l.b16 %v638
    %v1018 = vunpack.c.h.b16 %v638
    %v1019 = vunpack.c.l.b16 %v639
    %v1020 = vunpack.c.h.b16 %v639
    %v1021 = vunpack.c.l.b16 %v640
    %v1022 = vunpack.c.h.b16 %v640
    %v1023 = vunpack.c.l.b16 %v641
    %v1024 = vunpack.c.h.b16 %v641
    %v1025 = vunpack.c.l.b16 %v642
    %v1026 = vunpack.c.h.b16 %v642
    %v1027 = vunpack.c.l.b16 %v643
    %v1028 = vunpack.c.h.b16 %v643
    %v1029 = vunpack.c.l.b16 %v644
    %v1030 = vunpack.c.h.b16 %v644
    %v1031 = vunpack.c.l.b16 %v645
    %v1032 = vunpack.c.h.b16 %v645
    %v1033 = vunpack.c.l.b16 %v646
    %v1034 = vunpack.c.h.b16 %v646
    %v1035 = vunpack.c.l.b16 %v647
    %v1036 = vunpack.c.h.b16 %v647
    %v1037 = vunpack.c.l.b16 %v648
    %v1038 = vunpack.c.h.b16 %v648
    %v1039 = vunpack.c.l.b16 %v649
    %v1040 = vunpack.c.h.b16 %v649
    %v1041 = vunpack.c.l.b16 %v650
    %v1042 = vunpack.c.h.b16 %v650
    %v1043 = vunpack.c.l.b16 %v651
    %v1044 = vunpack.c.h.b16 %v651
    %v1045 = vunpack.c.l.b16 %v652
    %v1046 = vunpack.c.h.b16 %v652
    %v1047 = vunpack.c.l.b16 %v653
    %v1048 = vunpack.c.h.b16 %v653
    %v1049 = vunpack.c.l.b16 %v654
    %v1050 = vunpack.c.h.b16 %v654
    %v1051 = vunpack.c.l.b16 %v655
    %v1052 = vunpack.c.h.b16 %v655
    %v1053 = vunpack.c.l.b16 %v656
    %v1054 = vunpack.c.h.b16 %v656
    %v1055 = vunpack.c.l.b16 %v657
    %v1056 = vunpack.c.h.b16 %v657
    %v1057 = vunpack.c.l.b16 %v658
    %v1058 = vunpack.c.h.b16 %v658
    %v1059 = vunpack.c.l.b16 %v659
    %v1060 = vunpack.c.h.b16 %v659
    %v1061 = vunpack.c.l.b16 %v660
    %v1062 = vunpack.c.h.b16 %v660
    %v1063 = vunpack.c.l.b16 %v661
    %v1064 = vunpack.c.h.b16 %v661
    %v1065 = vunpack.c.l.b16 %v662
    %v1066 = vunpack.c.h.b16 %v662
    %v1067 = vunpack.c.l.b16 %v663
    %v1068 = vunpack.c.h.b16 %v663
    %v1069 = vunpack.c.l.b16 %v664
    %v1070 = vunpack.c.h.b16 %v664
    %v1071 = vunpack.c.l.b16 %v665
    %v1072 = vunpack.c.h.b16 %v665
    %v1073 = vunpack.c.l.b16 %v666
    %v1074 = vunpack.c.h.b16 %v666
    %v1075 = vunpack.c.l.b16 %v667
    %v1076 = vunpack.c.h.b16 %v667
    %v1077 = vunpack.c.l.b16 %v668
    %v1078 = vunpack.c.h.b16 %v668
    %v1079 = vunpack.c.l.b16 %v669
    %v1080 = vunpack.c.h.b16 %v669
    %v1081 = vunpack.c.l.b16 %v670
    %v1082 = vunpack.c.h.b16 %v670
    %v1083 = vunpack.c.l.b16 %v671
    %v1084 = vunpack.c.h.b16 %v671
    %v1085 = vunpack.c.l.b16 %v672
    %v1086 = vunpack.c.h.b16 %v672
    %v1087 = vunpack.c.l.b16 %v673
    %v1088 = vunpack.c.h.b16 %v673
    %v1089 = vunpack.c.l.b16 %v674
    %v1090 = vunpack.c.h.b16 %v674
    %v1091 = vunpack.c.l.b16 %v675
    %v1092 = vunpack.c.h.b16 %v675
    %v1093 = vunpack.c.l.b16 %v676
    %v1094 = vunpack.c.h.b16 %v676
    %v1095 = vunpack.c.l.b16 %v677
    %v1096 = vunpack.c.h.b16 %v677
    %v1097 = vunpack.c.l.b16 %v678
    %v1098 = vunpack.c.h.b16 %v678
    %v1099 = vunpack.c.l.b16 %v679
    %v1100 = vunpack.c.h.b16 %v679
    %v1101 = vunpack.c.l.b16 %v680
    %v1102 = vunpack.c.h.b16 %v680
    %v1103 = vunpack.c.l.b16 %v681
    %v1104 = vunpack.c.h.b16 %v681
    %v1105 = vunpack.c.l.b16 %v682
    %v1106 = vunpack.c.h.b16 %v682
    %v1107 = vunpack.c.l.b16 %v683
    %v1108 = vunpack.c.h.b16 %v683
    %v1109 = vunpack.c.l.b16 %v684
    %v1110 = vunpack.c.h.b16 %v684
    %v1111 = vpack.c.b16 %v863, %v855
    %v1112 = vpack.c.b16 %v864, %v856
    %v1113 = vpack.c.b16 %v865, %v857
    %v1114 = vpack.c.b16 %v866, %v858
    %v1115 = vpack.c.b16 %v867, %v859
    %v1116 = vpack.c.b16 %v868, %v860
    %v1117 = vpack.c.b16 %v869, %v861
    %v1118 = vpack.c.b16 %v870, %v862
    %v1119 = vpack.c.b16 %v879, %v871
    %v1120 = vpack.c.b16 %v880, %v872
    %v1121 = vpack.c.b16 %v881, %v873
    %v1122 = vpack.c.b16 %v882, %v874
    %v1123 = vpack.c.b16 %v883, %v875
    %v1124 = vpack.c.b16 %v884, %v876
    %v1125 = vpack.c.b16 %v885, %v877
    %v1126 = vpack.c.b16 %v886, %v878
    %v1127 = vpack.c.b16 %v895, %v887
    %v1128 = vpack.c.b16 %v896, %v888
    %v1129 = vpack.c.b16 %v897, %v889
    %v1130 = vpack.c.b16 %v898, %v890
    %v1131 = vpack.c.b16 %v899, %v891
    %v1132 = vpack.c.b16 %v900, %v892
    %v1133 = vpack.c.b16 %v901, %v893
    %v1134 = vpack.c.b16 %v902, %v894
    %v1135 = vpack.c.b16 %v911, %v903
    %v1136 = vpack.c.b16 %v912, %v904
    %v1137 = vpack.c.b16 %v913, %v905
    %v1138 = vpack.c.b16 %v914, %v906
    %v1139 = vpack.c.b16 %v915, %v907
    %v1140 = vpack.c.b16 %v916, %v908
    %v1141 = vpack.c.b16 %v917, %v909
    %v1142 = vpack.c.b16 %v918, %v910
    %v1143 = vpack.c.b16 %v927, %v919
    %v1144 = vpack.c.b16 %v928, %v920
    %v1145 = vpack.c.b16 %v929, %v921
    %v1146 = vpack.c.b16 %v930, %v922
    %v1147 = vpack.c.b16 %v931, %v923
    %v1148 = vpack.c.b16 %v932, %v924
    %v1149 = vpack.c.b16 %v933, %v925
    %v1150 = vpack.c.b16 %v934, %v926
    %v1151 = vpack.c.b16 %v943, %v935
    %v1152 = vpack.c.b16 %v944, %v936
    %v1153 = vpack.c.b16 %v945, %v937
    %v1154 = vpack.c.b16 %v946, %v938
    %v1155 = vpack.c.b16 %v947, %v939
    %v1156 = vpack.c.b16 %v948, %v940
    %v1157 = vpack.c.b16 %v949, %v941
    %v1158 = vpack.c.b16 %v950, %v942
    %v1159 = vpack.c.b16 %v959, %v951
    %v1160 = vpack.c.b16 %v960, %v952
    %v1161 = vpack.c.b16 %v961, %v953
    %v1162 = vpack.c.b16 %v962, %v954
    %v1163 = vpack.c.b16 %v963, %v955
    %v1164 = vpack.c.b16 %v964, %v956
    %v1165 = vpack.c.b16 %v965, %v957
    %v1166 = vpack.c.b16 %v966, %v958
    %v1167 = vpack.c.b16 %v975, %v967
    %v1168 = vpack.c.b16 %v976, %v968
    %v1169 = vpack.c.b16 %v977, %v969
    %v1170 = vpack.c.b16 %v978, %v970
    %v1171 = vpack.c.b16 %v979, %v971
    %v1172 = vpack.c.b16 %v980, %v972
    %v1173 = vpack.c.b16 %v981, %v973
    %v1174 = vpack.c.b16 %v982, %v974
    %v1175 = vpack.c.b16 %v991, %v983
    %v1176 = vpack.c.b16 %v992, %v984
    %v1177 = vpack.c.b16 %v993, %v985
    %v1178 = vpack.c.b16 %v994, %v986
    %v1179 = vpack.c.b16 %v995, %v987
    %v1180 = vpack.c.b16 %v996, %v988
    %v1181 = vpack.c.b16 %v997, %v989
    %v1182 = vpack.c.b16 %v998, %v990
    %v1183 = vpack.c.b16 %v1007, %v999
    %v1184 = vpack.c.b16 %v1008, %v1000
    %v1185 = vpack.c.b16 %v1009, %v1001
    %v1186 = vpack.c.b16 %v1010, %v1002
    %v1187 = vpack.c.b16 %v1011, %v1003
    %v1188 = vpack.c.b16 %v1012, %v1004
    %v1189 = vpack.c.b16 %v1013, %v1005
    %v1190 = vpack.c.b16 %v1014, %v1006
    %v1191 = vpack.c.b16 %v1023, %v1015
    %v1192 = vpack.c.b16 %v1024, %v1016
    %v1193 = vpack.c.b16 %v1025, %v1017
    %v1194 = vpack.c.b16 %v1026, %v1018
    %v1195 = vpack.c.b16 %v1027, %v1019
    %v1196 = vpack.c.b16 %v1028, %v1020
    %v1197 = vpack.c.b16 %v1029, %v1021
    %v1198 = vpack.c.b16 %v1030, %v1022
    %v1199 = vpack.c.b16 %v1039, %v1031
    %v1200 = vpack.c.b16 %v1040, %v1032
    %v1201 = vpack.c.b16 %v1041, %v1033
    %v1202 = vpack.c.b16 %v1042, %v1034
    %v1203 = vpack.c.b16 %v1043, %v1035
    %v1204 = vpack.c.b16 %v1044, %v1036
    %v1205 = vpack.c.b16 %v1045, %v1037
    %v1206 = vpack.c.b16 %v1046, %v1038
    %v1207 = vpack.c.b16 %v1055, %v1047
    %v1208 = vpack.c.b16 %v1056, %v1048
    %v1209 = vpack.c.b16 %v1057, %v1049
    %v1210 = vpack.c.b16 %v1058, %v1050
    %v1211 = vpack.c.b16 %v1059, %v1051
    %v1212 = vpack.c.b16 %v1060, %v1052
    %v1213 = vpack.c.b16 %v1061, %v1053
    %v1214 = vpack.c.b16 %v1062, %v1054
    %v1215 = vpack.c.b16 %v1071, %v1063
    %v1216 = vpack.c.b16 %v1072, %v1064
    %v1217 = vpack.c.b16 %v1073, %v1065
    %v1218 = vpack.c.b16 %v1074, %v1066
    %v1219 = vpack.c.b16 %v1075, %v1067
    %v1220 = vpack.c.b16 %v1076, %v1068
    %v1221 = vpack.c.b16 %v1077, %v1069
    %v1222 = vpack.c.b16 %v1078, %v1070
    %v1223 = vpack.c.b16 %v1087, %v1079
    %v1224 = vpack.c.b16 %v1088, %v1080
    %v1225 = vpack.c.b16 %v1089, %v1081
    %v1226 = vpack.c.b16 %v1090, %v1082
    %v1227 = vpack.c.b16 %v1091, %v1083
    %v1228 = vpack.c.b16 %v1092, %v1084
    %v1229 = vpack.c.b16 %v1093, %v1085
    %v1230 = vpack.c.b16 %v1094, %v1086
    %v1231 = vpack.c.b16 %v1103, %v1095
    %v1232 = vpack.c.b16 %v1104, %v1096
    %v1233 = vpack.c.b16 %v1105, %v1097
    %v1234 = vpack.c.b16 %v1106, %v1098
    %v1235 = vpack.c.b16 %v1107, %v1099
    %v1236 = vpack.c.b16 %v1108, %v1100
    %v1237 = vpack.c.b16 %v1109, %v1101
    %v1238 = vpack.c.b16 %v1110, %v1102
    %1367 = vmatprep.subr.bf16.mxu0 %v1168
    %1368 = vmatpush1.bf16.msra.mxu0 %v1167
    %1369 = vmatprep.subr.bf16.mxu0 %v1160
    %1370 = vmatpush1.bf16.msra.mxu0 %v1159
    %1371 = vmatprep.subr.bf16.mxu0 %v1152
    %1372 = vmatpush1.bf16.msra.mxu0 %v1151
    %1373 = vmatprep.subr.bf16.mxu0 %v1144
    %1374 = vmatpush1.bf16.msra.mxu0 %v1143
    %1375 = vmatprep.subr.bf16.mxu0 %v1136
    %1376 = vmatpush1.bf16.msra.mxu0 %v1135
    %1377 = vmatprep.subr.bf16.mxu0 %v1128
    %1378 = vmatpush1.bf16.msra.mxu0 %v1127
    %1379 = vmatprep.subr.bf16.mxu0 %v1120
    %1380 = vmatpush1.bf16.msra.mxu0 %v1119
    %1381 = vmatprep.subr.bf16.mxu0 %v1112
    %1382 = vmatpush1.bf16.msra.mxu0 %v1111
    %1383 = vmatprep.subr.bf16.mxu0 %v1232
    %1384 = vmatpush2.bf16.msra.mxu0 %v1231
    %1385 = vmatprep.subr.bf16.mxu0 %v1224
    %1386 = vmatpush2.bf16.msra.mxu0 %v1223
    %1387 = vmatprep.subr.bf16.mxu0 %v1216
    %1388 = vmatpush2.bf16.msra.mxu0 %v1215
    %1389 = vmatprep.subr.bf16.mxu0 %v1208
    %1390 = vmatpush2.bf16.msra.mxu0 %v1207
    %1391 = vmatprep.subr.bf16.mxu0 %v1200
    %1392 = vmatpush2.bf16.msra.mxu0 %v1199
    %1393 = vmatprep.subr.bf16.mxu0 %v1192
    %1394 = vmatpush2.bf16.msra.mxu0 %v1191
    %1395 = vmatprep.subr.bf16.mxu0 %v1184
    %1396 = vmatpush2.bf16.msra.mxu0 %v1183
    %1397 = vmatprep.subr.bf16.mxu0 %v1176
    %1398 = vmatpush2.bf16.msra.mxu0 %v1175
    %1399 = vmatprep.mubr.bf16.mxu0 %v556
    %1400 = vmatmul.mubr.bf16.gmra.mxu0 %v555
    %v1401 = vpop.f32.mrf.mxu0
    %v1402 = vadd.f32 %v690, %v1401
    %v1403 = vpop.f32.mrf.mxu0
    %v1404 = vadd.f32 %v694, %v1403
    %v1405 = vpop.f32.mrf.mxu0
    %v1406 = vadd.f32 %v690, %v1405
    %v1407 = vpop.f32.mrf.mxu0
    %v1408 = vadd.f32 %v694, %v1407
    %1409 = vdwg.mxu0
    %1410 = vmatprep.subr.bf16.mxu0 %v1170
    %1411 = vmatpush1.bf16.msra.mxu0 %v1169
    %1412 = vmatprep.subr.bf16.mxu0 %v1162
    %1413 = vmatpush1.bf16.msra.mxu0 %v1161
    %1414 = vmatprep.subr.bf16.mxu0 %v1154
    %1415 = vmatpush1.bf16.msra.mxu0 %v1153
    %1416 = vmatprep.subr.bf16.mxu0 %v1146
    %1417 = vmatpush1.bf16.msra.mxu0 %v1145
    %1418 = vmatprep.subr.bf16.mxu0 %v1138
    %1419 = vmatpush1.bf16.msra.mxu0 %v1137
    %1420 = vmatprep.subr.bf16.mxu0 %v1130
    %1421 = vmatpush1.bf16.msra.mxu0 %v1129
    %1422 = vmatprep.subr.bf16.mxu0 %v1122
    %1423 = vmatpush1.bf16.msra.mxu0 %v1121
    %1424 = vmatprep.subr.bf16.mxu0 %v1114
    %1425 = vmatpush1.bf16.msra.mxu0 %v1113
    %1426 = vmatprep.subr.bf16.mxu0 %v1234
    %1427 = vmatpush2.bf16.msra.mxu0 %v1233
    %1428 = vmatprep.subr.bf16.mxu0 %v1226
    %1429 = vmatpush2.bf16.msra.mxu0 %v1225
    %1430 = vmatprep.subr.bf16.mxu0 %v1218
    %1431 = vmatpush2.bf16.msra.mxu0 %v1217
    %1432 = vmatprep.subr.bf16.mxu0 %v1210
    %1433 = vmatpush2.bf16.msra.mxu0 %v1209
    %1434 = vmatprep.subr.bf16.mxu0 %v1202
    %1435 = vmatpush2.bf16.msra.mxu0 %v1201
    %1436 = vmatprep.subr.bf16.mxu0 %v1194
    %1437 = vmatpush2.bf16.msra.mxu0 %v1193
    %1438 = vmatprep.subr.bf16.mxu0 %v1186
    %1439 = vmatpush2.bf16.msra.mxu0 %v1185
    %1440 = vmatprep.subr.bf16.mxu0 %v1178
    %1441 = vmatpush2.bf16.msra.mxu0 %v1177
    %1442 = vmatprep.mubr.bf16.mxu0 %v556
    %1443 = vmatmul.mubr.bf16.gmra.mxu0 %v555
    %v1444 = vpop.f32.mrf.mxu0
    %v1445 = vadd.f32 %v698, %v1444
    %v1446 = vpop.f32.mrf.mxu0
    %v1447 = vadd.f32 %v702, %v1446
    %v1448 = vpop.f32.mrf.mxu0
    %v1449 = vadd.f32 %v698, %v1448
    %v1450 = vpop.f32.mrf.mxu0
    %v1451 = vadd.f32 %v702, %v1450
    %1452 = vdwg.mxu0
    %1453 = vmatprep.subr.bf16.mxu0 %v1172
    %1454 = vmatpush1.bf16.msra.mxu0 %v1171
    %1455 = vmatprep.subr.bf16.mxu0 %v1164
    %1456 = vmatpush1.bf16.msra.mxu0 %v1163
    %1457 = vmatprep.subr.bf16.mxu0 %v1156
    %1458 = vmatpush1.bf16.msra.mxu0 %v1155
    %1459 = vmatprep.subr.bf16.mxu0 %v1148
    %1460 = vmatpush1.bf16.msra.mxu0 %v1147
    %1461 = vmatprep.subr.bf16.mxu0 %v1140
    %1462 = vmatpush1.bf16.msra.mxu0 %v1139
    %1463 = vmatprep.subr.bf16.mxu0 %v1132
    %1464 = vmatpush1.bf16.msra.mxu0 %v1131
    %1465 = vmatprep.subr.bf16.mxu0 %v1124
    %1466 = vmatpush1.bf16.msra.mxu0 %v1123
    %1467 = vmatprep.subr.bf16.mxu0 %v1116
    %1468 = vmatpush1.bf16.msra.mxu0 %v1115
    %1469 = vmatprep.subr.bf16.mxu0 %v1236
    %1470 = vmatpush2.bf16.msra.mxu0 %v1235
    %1471 = vmatprep.subr.bf16.mxu0 %v1228
    %1472 = vmatpush2.bf16.msra.mxu0 %v1227
    %1473 = vmatprep.subr.bf16.mxu0 %v1220
    %1474 = vmatpush2.bf16.msra.mxu0 %v1219
    %1475 = vmatprep.subr.bf16.mxu0 %v1212
    %1476 = vmatpush2.bf16.msra.mxu0 %v1211
    %1477 = vmatprep.subr.bf16.mxu0 %v1204
    %1478 = vmatpush2.bf16.msra.mxu0 %v1203
    %1479 = vmatprep.subr.bf16.mxu0 %v1196
    %1480 = vmatpush2.bf16.msra.mxu0 %v1195
    %1481 = vmatprep.subr.bf16.mxu0 %v1188
    %1482 = vmatpush2.bf16.msra.mxu0 %v1187
    %1483 = vmatprep.subr.bf16.mxu0 %v1180
    %1484 = vmatpush2.bf16.msra.mxu0 %v1179
    %1485 = vmatprep.mubr.bf16.mxu0 %v556
    %1486 = vmatmul.mubr.bf16.gmra.mxu0 %v555
    %v1487 = vpop.f32.mrf.mxu0
    %v1488 = vadd.f32 %v706, %v1487
    %v1489 = vpop.f32.mrf.mxu0
    %v1490 = vadd.f32 %v710, %v1489
    %v1491 = vpop.f32.mrf.mxu0
    %v1492 = vadd.f32 %v706, %v1491
    %v1493 = vpop.f32.mrf.mxu0
    %v1494 = vadd.f32 %v710, %v1493
    %1495 = vdwg.mxu0
    %1496 = vmatprep.subr.bf16.mxu0 %v1174
    %1497 = vmatpush1.bf16.msra.mxu0 %v1173
    %1498 = vmatprep.subr.bf16.mxu0 %v1166
    %1499 = vmatpush1.bf16.msra.mxu0 %v1165
    %1500 = vmatprep.subr.bf16.mxu0 %v1158
    %1501 = vmatpush1.bf16.msra.mxu0 %v1157
    %1502 = vmatprep.subr.bf16.mxu0 %v1150
    %1503 = vmatpush1.bf16.msra.mxu0 %v1149
    %1504 = vmatprep.subr.bf16.mxu0 %v1142
    %1505 = vmatpush1.bf16.msra.mxu0 %v1141
    %1506 = vmatprep.subr.bf16.mxu0 %v1134
    %1507 = vmatpush1.bf16.msra.mxu0 %v1133
    %1508 = vmatprep.subr.bf16.mxu0 %v1126
    %1509 = vmatpush1.bf16.msra.mxu0 %v1125
    %1510 = vmatprep.subr.bf16.mxu0 %v1118
    %1511 = vmatpush1.bf16.msra.mxu0 %v1117
    %1512 = vmatprep.subr.bf16.mxu0 %v1238
    %1513 = vmatpush2.bf16.msra.mxu0 %v1237
    %1514 = vmatprep.subr.bf16.mxu0 %v1230
    %1515 = vmatpush2.bf16.msra.mxu0 %v1229
    %1516 = vmatprep.subr.bf16.mxu0 %v1222
    %1517 = vmatpush2.bf16.msra.mxu0 %v1221
    %1518 = vmatprep.subr.bf16.mxu0 %v1214
    %1519 = vmatpush2.bf16.msra.mxu0 %v1213
    %1520 = vmatprep.subr.bf16.mxu0 %v1206
    %1521 = vmatpush2.bf16.msra.mxu0 %v1205
    %1522 = vmatprep.subr.bf16.mxu0 %v1198
    %1523 = vmatpush2.bf16.msra.mxu0 %v1197
    %1524 = vmatprep.subr.bf16.mxu0 %v1190
    %1525 = vmatpush2.bf16.msra.mxu0 %v1189
    %1526 = vmatprep.subr.bf16.mxu0 %v1182
    %1527 = vmatpush2.bf16.msra.mxu0 %v1181
    %1528 = vmatprep.mubr.bf16.mxu0 %v556
    %1529 = vmatmul.mubr.bf16.gmra.mxu0 %v555
    %v1530 = vpop.f32.mrf.mxu0
    %v1531 = vadd.f32 %v714, %v1530
    %v1532 = vpop.f32.mrf.mxu0
    %v1533 = vadd.f32 %v718, %v1532
    %v1534 = vpop.f32.mrf.mxu0
    %v1535 = vadd.f32 %v714, %v1534
    %v1536 = vpop.f32.mrf.mxu0
    %v1537 = vadd.f32 %v718, %v1536
    %1538 = vdwg.mxu0
    %vm1539 = vcmp.gt.f32.partialorder %v1402, 0.0
    %vm1540 = vcmp.gt.f32.partialorder %v1404, 0.0
    %vm1541 = vcmp.gt.f32.partialorder %v1445, 0.0
    %vm1542 = vcmp.gt.f32.partialorder %v1447, 0.0
    %vm1543 = vcmp.gt.f32.partialorder %v1488, 0.0
    %vm1544 = vcmp.gt.f32.partialorder %v1490, 0.0
    %vm1545 = vcmp.gt.f32.partialorder %v1531, 0.0
    %vm1546 = vcmp.gt.f32.partialorder %v1533, 0.0
    %vm1547 = vcmp.gt.f32.partialorder %v1406, 0.0
    %vm1548 = vcmp.gt.f32.partialorder %v1408, 0.0
    %vm1549 = vcmp.gt.f32.partialorder %v1449, 0.0
    %vm1550 = vcmp.gt.f32.partialorder %v1451, 0.0
    %vm1551 = vcmp.gt.f32.partialorder %v1492, 0.0
    %vm1552 = vcmp.gt.f32.partialorder %v1494, 0.0
    %vm1553 = vcmp.gt.f32.partialorder %v1535, 0.0
    %vm1554 = vcmp.gt.f32.partialorder %v1537, 0.0
    %v1555 = vmul.f32 %v1402, 1.442695
    %v1556 = vpow.pop %v1555
    %v1557 = vmul.f32 %v1404, 1.442695
    %v1558 = vpow.pop %v1557
    %v1559 = vmul.f32 %v1445, 1.442695
    %v1560 = vpow.pop %v1559
    %v1561 = vmul.f32 %v1447, 1.442695
    %v1562 = vpow.pop %v1561
    %v1563 = vmul.f32 %v1488, 1.442695
    %v1564 = vpow.pop %v1563
    %v1565 = vmul.f32 %v1490, 1.442695
    %v1566 = vpow.pop %v1565
    %v1567 = vmul.f32 %v1531, 1.442695
    %v1568 = vpow.pop %v1567
    %v1569 = vmul.f32 %v1533, 1.442695
    %v1570 = vpow.pop %v1569
    %v1571 = vmul.f32 %v1406, 1.442695
    %v1572 = vpow.pop %v1571
    %v1573 = vmul.f32 %v1408, 1.442695
    %v1574 = vpow.pop %v1573
    %v1575 = vmul.f32 %v1449, 1.442695
    %v1576 = vpow.pop %v1575
    %v1577 = vmul.f32 %v1451, 1.442695
    %v1578 = vpow.pop %v1577
    %v1579 = vmul.f32 %v1492, 1.442695
    %v1580 = vpow.pop %v1579
    %v1581 = vmul.f32 %v1494, 1.442695
    %v1582 = vpow.pop %v1581
    %v1583 = vmul.f32 %v1535, 1.442695
    %v1584 = vpow.pop %v1583
    %v1585 = vmul.f32 %v1537, 1.442695
    %v1586 = vpow.pop %v1585
    %v1587 = vsub.f32 %v1556, 1.0
    %v1588 = vsub.f32 %v1558, 1.0
    %v1589 = vsub.f32 %v1560, 1.0
    %v1590 = vsub.f32 %v1562, 1.0
    %v1591 = vsub.f32 %v1564, 1.0
    %v1592 = vsub.f32 %v1566, 1.0
    %v1593 = vsub.f32 %v1568, 1.0
    %v1594 = vsub.f32 %v1570, 1.0
    %v1595 = vsub.f32 %v1572, 1.0
    %v1596 = vsub.f32 %v1574, 1.0
    %v1597 = vsub.f32 %v1576, 1.0
    %v1598 = vsub.f32 %v1578, 1.0
    %v1599 = vsub.f32 %v1580, 1.0
    %v1600 = vsub.f32 %v1582, 1.0
    %v1601 = vsub.f32 %v1584, 1.0
    %v1602 = vsub.f32 %v1586, 1.0
    %v1603 = vmul.f32 %v1587, 1.6732632
    %v1604 = vmul.f32 %v1588, 1.6732632
    %v1605 = vmul.f32 %v1589, 1.6732632
    %v1606 = vmul.f32 %v1590, 1.6732632
    %v1607 = vmul.f32 %v1591, 1.6732632
    %v1608 = vmul.f32 %v1592, 1.6732632
    %v1609 = vmul.f32 %v1593, 1.6732632
    %v1610 = vmul.f32 %v1594, 1.6732632
    %v1611 = vmul.f32 %v1595, 1.6732632
    %v1612 = vmul.f32 %v1596, 1.6732632
    %v1613 = vmul.f32 %v1597, 1.6732632
    %v1614 = vmul.f32 %v1598, 1.6732632
    %v1615 = vmul.f32 %v1599, 1.6732632
    %v1616 = vmul.f32 %v1600, 1.6732632
    %v1617 = vmul.f32 %v1601, 1.6732632
    %v1618 = vmul.f32 %v1602, 1.6732632
    %v1619 = vsel %vm1539, %v1402, %v1603
    %v1620 = vsel %vm1540, %v1404, %v1604
    %v1621 = vsel %vm1541, %v1445, %v1605
    %v1622 = vsel %vm1542, %v1447, %v1606
    %v1623 = vsel %vm1543, %v1488, %v1607
    %v1624 = vsel %vm1544, %v1490, %v1608
    %v1625 = vsel %vm1545, %v1531, %v1609
    %v1626 = vsel %vm1546, %v1533, %v1610
    %v1627 = vsel %vm1547, %v1406, %v1611
    %v1628 = vsel %vm1548, %v1408, %v1612
    %v1629 = vsel %vm1549, %v1449, %v1613
    %v1630 = vsel %vm1550, %v1451, %v1614
    %v1631 = vsel %vm1551, %v1492, %v1615
    %v1632 = vsel %vm1552, %v1494, %v1616
    %v1633 = vsel %vm1553, %v1535, %v1617
    %v1634 = vsel %vm1554, %v1537, %v1618
    %v1635 = vmul.f32 %v1619, 1.050701
    %v1636 = vmul.f32 %v1620, 1.050701
    %v1637 = vmul.f32 %v1621, 1.050701
    %v1638 = vmul.f32 %v1622, 1.050701
    %v1639 = vmul.f32 %v1623, 1.050701
    %v1640 = vmul.f32 %v1624, 1.050701
    %v1641 = vmul.f32 %v1625, 1.050701
    %v1642 = vmul.f32 %v1626, 1.050701
    %v1643 = vmul.f32 %v1627, 1.050701
    %v1644 = vmul.f32 %v1628, 1.050701
    %v1645 = vmul.f32 %v1629, 1.050701
    %v1646 = vmul.f32 %v1630, 1.050701
    %v1647 = vmul.f32 %v1631, 1.050701
    %v1648 = vmul.f32 %v1632, 1.050701
    %v1649 = vmul.f32 %v1633, 1.050701
    %v1650 = vmul.f32 %v1634, 1.050701
    %v1651 = vpack.c.bf16 %v1643, %v1635
    %v1652 = vpack.c.bf16 %v1644, %v1636
    %v1653 = vpack.c.bf16 %v1645, %v1637
    %v1654 = vpack.c.bf16 %v1646, %v1638
    %v1659 = vunpack.c.l.b16 %v1651
    %v1660 = vunpack.c.l.b16 %v1652
    %v1661 = vunpack.c.l.b16 %v1653
    %v1662 = vunpack.c.l.b16 %v1654
    %v1663 = vunpack.c.h.b16 %v1651
    %v1664 = vunpack.c.h.b16 %v1652
    %v1665 = vunpack.c.h.b16 %v1653
    %v1666 = vunpack.c.h.b16 %v1654
    %v1667 = vpack.c.b16 %v1660, %v1659
    %v1668 = vpack.c.b16 %v1662, %v1661
    %v1669 = vpack.c.b16 %v1664, %v1663
    %v1670 = vpack.c.b16 %v1666, %v1665
    %1675 = vst [vmem:[%s11] sm:$0xff] %v1667
    %1676 = vst [vmem:[%s11 + $0x8] sm:$0xff] %v1668
    %1677 = vst [vmem:[%s11 + $0x10] sm:$0xff] %v1669
    %1678 = vst [vmem:[%s11 + $0x18] sm:$0xff] %v1670
    %v1679 = vpack.c.bf16 %v1647, %v1639
    %v1680 = vpack.c.bf16 %v1648, %v1640
    %v1681 = vpack.c.bf16 %v1649, %v1641
    %v1682 = vpack.c.bf16 %v1650, %v1642
    %v1687 = vunpack.c.l.b16 %v1679
    %v1688 = vunpack.c.l.b16 %v1680
    %v1689 = vunpack.c.l.b16 %v1681
    %v1690 = vunpack.c.l.b16 %v1682
    %v1691 = vunpack.c.h.b16 %v1679
    %v1692 = vunpack.c.h.b16 %v1680
    %v1693 = vunpack.c.h.b16 %v1681
    %v1694 = vunpack.c.h.b16 %v1682
    %v1695 = vpack.c.b16 %v1688, %v1687
    %v1696 = vpack.c.b16 %v1690, %v1689
    %v1697 = vpack.c.b16 %v1692, %v1691
    %v1698 = vpack.c.b16 %v1694, %v1693
    %1703 = vst [vmem:[%s12] sm:$0xff] %v1695
    %1704 = vst [vmem:[%s12 + $0x8] sm:$0xff] %v1696
    %1705 = vst [vmem:[%s12 + $0x10] sm:$0xff] %v1697
    %1706 = vst [vmem:[%s12 + $0x18] sm:$0xff] %v1698
    // Predicated region
    $region86: #{decoder_forward.2} parent=1 // pred_check
      _
    $region87: #{decoder_forward.2} parent=1 // pred_check_branch
      %1708 = sbr.rel (0) target = $region89
    $region88: #{decoder_forward.2} parent=1 // pred_region
      _
    $region89: #{decoder_forward.2} parent=1 // pred_fallthru
      _
    // Predicated region
    $region90: #{decoder_forward.2} parent=1 // pred_check
      _
    $region91: #{decoder_forward.2} parent=1 // pred_check_branch
      %1710 = sbr.rel (0) target = $region93
    $region92: #{decoder_forward.2} parent=1 // pred_region
      _
    $region93: #{decoder_forward.2} parent=1 // pred_fallthru
      _
    // Predicated region
    $region94: #{decoder_forward.2} parent=1 // pred_check
      _
    $region95: #{decoder_forward.2} parent=1 // pred_check_branch
      %1712 = sbr.rel (0) target = $region97
    $region96: #{decoder_forward.2} parent=1 // pred_region
      _
    $region97: #{decoder_forward.2} parent=1 // pred_fallthru
      _
    // Predicated region
    $region98: #{decoder_forward.2} parent=1 // pred_check
      _
    $region99: #{decoder_forward.2} parent=1 // pred_check_branch
      %1714 = sbr.rel (0) target = $region101
    $region100: #{decoder_forward.2} parent=1 // pred_region
      _
    $region101: #{decoder_forward.2} parent=1 // pred_fallthru
      _
    %1715 = vsyncpa [#allocation3], 1
    %1716 = vsyncpa [#allocation5], 1
    %1717 = vsyncpa [#allocation8], 1
    %1718 = vsyncpa [#allocation11], 1
    %1719 = vsyncpa [#allocation14], 1
    %1720 = vsyncpa [#allocation17], 1

</llo_original>
